<compile_context>
chip_gen: v6e
topology: v6e:2x2x1
jax: 0.10.0
libtpu: 0.0.40
codegen_flags: <defaults>
</compile_context>

<pallas_src>
import functools

import jax
import jax.numpy as jnp
from jax.experimental import pallas as pl
from jax.experimental.pallas import tpu as pltpu

_MIB = 1024 * 1024


def _round_up(x, m):
    return ((x + m - 1) // m) * m


def _sublane(dtype):
    # minimum sublane multiple per dtype packing (f32: 8, bf16: 16, int8/fp8: 32)
    return max(8, 32 // dtype.itemsize)


def _compiler_params(dims, est_vmem_bytes):
    kwargs = dict(dimension_semantics=dims)
    # Scoped-VMEM defaults differ per generation (v5e 16 MiB, v6e/v7x 32 MiB; v7x has
    # only 64 MiB physical).  Only request a larger limit when the double-buffered
    # working set actually needs it, and never ask for more than 48 MiB.
    if est_vmem_bytes > 12 * _MIB:
        kwargs["vmem_limit_bytes"] = int(min(48 * _MIB, est_vmem_bytes + 4 * _MIB))
    return pltpu.CompilerParams(**kwargs)


# ---------------------------------------------------------------------------
# Kernel 1: tiled  y = act(x @ w + b)   (every nn.Linear / Conv1d(kernel=1))
# ---------------------------------------------------------------------------
def _linear_kernel(x_ref, w_ref, b_ref, o_ref, *, activation):
    # x: (tile_m, K), w: (K, tile_n), b: (1, tile_n); K carried whole per block.
    acc = jnp.dot(x_ref[...], w_ref[...], preferred_element_type=jnp.float32)
    acc = acc + b_ref[...]
    if activation == "relu":
        acc = jnp.maximum(acc, 0.0)
    o_ref[...] = acc.astype(o_ref.dtype)


def linear(x, w, b, *, activation=None, tile_m=256, tile_n=512):
    """y = act(x @ w + b) over the last axis of x.  w: (K, N), b: (N,)."""
    orig = x.shape
    k = orig[-1]
    n = w.shape[1]
    rows = 1
    for d in orig[:-1]:
        rows *= d
    x2 = x.reshape(rows, k)

    sub = _sublane(x.dtype)
    tile_m = min(tile_m, _round_up(rows, sub))
    tile_n = min(tile_n, _round_up(n, 128))          # lane-dense output stores
    rows_p = _round_up(rows, tile_m)
    n_p = _round_up(n, tile_n)

    if rows_p != rows:
        x2 = jnp.pad(x2, ((0, rows_p - rows), (0, 0)))
    w2 = w if n_p == n else jnp.pad(w, ((0, 0), (0, n_p - n)))
    b2 = (b if n_p == n else jnp.pad(b, (0, n_p - n))).reshape(1, n_p).astype(jnp.float32)

    # TODO(synk): K <= 256 everywhere in this module so it is not tiled; a large-K
    # variant would add a K grid axis + f32 accumulator scratch.
    est = 2 * 4 * (tile_m * k + k * tile_n + tile_n + tile_m * tile_n)
    out = pl.pallas_call(
        functools.partial(_linear_kernel, activation=activation),
        out_shape=jax.ShapeDtypeStruct((rows_p, n_p), x.dtype),
        grid_spec=pltpu.PrefetchScalarGridSpec(
            num_scalar_prefetch=0,
            grid=(rows_p // tile_m, n_p // tile_n),
            in_specs=[
                pl.BlockSpec((tile_m, k), lambda i, j: (i, 0)),
                pl.BlockSpec((k, tile_n), lambda i, j: (0, j)),
                pl.BlockSpec((1, tile_n), lambda i, j: (0, j)),
            ],
            out_specs=pl.BlockSpec((tile_m, tile_n), lambda i, j: (i, j)),
        ),
        compiler_params=_compiler_params(("parallel", "parallel"), est),
    )(x2, w2, b2)
    return out[:rows, :n].reshape(orig[:-1] + (n,))


# ---------------------------------------------------------------------------
# Kernel 2: fused  LayerNorm(x + y)  over the last axis (two conventions)
# ---------------------------------------------------------------------------
def _add_ln_kernel(x_ref, y_ref, g_ref, b_ref, o_ref, *, eps, feat, torch_style):
    s = x_ref[...].astype(jnp.float32) + y_ref[...].astype(jnp.float32)
    feat_p = s.shape[-1]
    if feat_p == feat:
        mean = jnp.sum(s, axis=-1, keepdims=True) * (1.0 / feat)
        diff = s - mean
    else:
        # feature axis padded to a multiple of 128 for lane-dense stores:
        # exclude the padded columns from the statistics.
        cols = jax.lax.broadcasted_iota(jnp.int32, (1, feat_p), 1)
        valid = cols < feat
        s = jnp.where(valid, s, 0.0)
        mean = jnp.sum(s, axis=-1, keepdims=True) * (1.0 / feat)
        diff = jnp.where(valid, s - mean, 0.0)
    ssq = jnp.sum(diff * diff, axis=-1, keepdims=True)
    if torch_style:
        # torch.nn.LayerNorm: biased variance, eps inside the sqrt (EUP rsqrt, per row)
        inv = jax.lax.rsqrt(ssq * (1.0 / feat) + eps)
    else:
        # custom LayerNorm module: unbiased std (N-1), eps added to the std;
        # per-row reciprocal instead of a per-element divide.
        std = jnp.sqrt(ssq * (1.0 / (feat - 1)))
        inv = pl.reciprocal(std + eps, approx=False)
    o_ref[...] = (diff * inv * g_ref[...] + b_ref[...]).astype(o_ref.dtype)


def add_layer_norm(x, y, gamma, beta, *, eps, torch_style, max_row_tile=1024):
    """LayerNorm(x + y) over the last axis (residual add fused into the kernel)."""
    orig = x.shape
    feat = orig[-1]
    rows = 1
    for d in orig[:-1]:
        rows *= d

    feat_p = _round_up(feat, 128)                    # lane-dense output stores
    x2 = x.reshape(rows, feat)
    y2 = y.reshape(rows, feat)
    g2 = gamma.astype(jnp.float32)                   # cast params once in the wrapper
    b2 = beta.astype(jnp.float32)
    if feat_p != feat:
        x2 = jnp.pad(x2, ((0, 0), (0, feat_p - feat)))
        y2 = jnp.pad(y2, ((0, 0), (0, feat_p - feat)))
        g2 = jnp.pad(g2, (0, feat_p - feat))
        b2 = jnp.pad(b2, (0, feat_p - feat))
    g2 = g2.reshape(1, feat_p)
    b2 = b2.reshape(1, feat_p)

    # Largest row tile whose double-buffered working set stays inside a conservative
    # VMEM budget valid on v5e / v6e / v7x.
    sub = _sublane(x.dtype)
    bytes_per_row = 3 * 2 * feat_p * x2.dtype.itemsize   # (x, y, out) x double buffer
    budget = 16 * _MIB
    row_tile = max(sub, min(max_row_tile, (budget // bytes_per_row) // sub * sub))
    row_tile = min(row_tile, _round_up(rows, sub))
    rows_p = _round_up(rows, row_tile)
    if rows_p != rows:
        x2 = jnp.pad(x2, ((0, rows_p - rows), (0, 0)))
        y2 = jnp.pad(y2, ((0, rows_p - rows), (0, 0)))

    est = 2 * (3 * row_tile * feat_p + 2 * feat_p) * 4
    out = pl.pallas_call(
        functools.partial(_add_ln_kernel, eps=float(eps), feat=feat,
                          torch_style=torch_style),
        out_shape=jax.ShapeDtypeStruct((rows_p, feat_p), x.dtype),
        grid_spec=pltpu.PrefetchScalarGridSpec(
            num_scalar_prefetch=0,
            grid=(rows_p // row_tile,),
            in_specs=[
                pl.BlockSpec((row_tile, feat_p), lambda i: (i, 0)),
                pl.BlockSpec((row_tile, feat_p), lambda i: (i, 0)),
                pl.BlockSpec((1, feat_p), lambda i: (0, 0)),
                pl.BlockSpec((1, feat_p), lambda i: (0, 0)),
            ],
            out_specs=pl.BlockSpec((row_tile, feat_p), lambda i: (i, 0)),
        ),
        compiler_params=_compiler_params(("parallel",), est),
    )(x2, y2, g2, b2)
    return out[:rows, :feat].reshape(orig)


# ---------------------------------------------------------------------------
# Kernel 3: masked softmax @ V   (ScaledDotProductAttention with mask != None)
# ---------------------------------------------------------------------------
def _attn_kernel(masks_ref, v_ref, o_ref):
    # With mask != None the module *replaces* the QK scores with
    # where(mask == 0, 1e-8, mask) before the softmax, so only softmax(mask') @ V
    # has to be computed (Q/K/gate never influence the output).
    a = masks_ref[0].astype(jnp.float32)                 # (L, L)
    a = jnp.where(a == 0.0, 1e-8, a)
    a = a - jnp.max(a, axis=-1, keepdims=True)           # stable softmax over dim=2
    e = jnp.exp(a)
    p = e * pl.reciprocal(jnp.sum(e, axis=-1, keepdims=True), approx=False)
    o_ref[0] = jnp.dot(p, v_ref[0].astype(jnp.float32),
                       preferred_element_type=jnp.float32).astype(o_ref.dtype)


def masked_attention(masks, v):
    """softmax(where(masks == 0, 1e-8, masks), axis=-1) @ v, per batch element."""
    b, l, _ = masks.shape
    d = v.shape[-1]
    est = 2 * 4 * (l * l + 2 * l * d)
    return pl.pallas_call(
        _attn_kernel,
        out_shape=jax.ShapeDtypeStruct((b, l, d), v.dtype),
        grid_spec=pltpu.PrefetchScalarGridSpec(
            num_scalar_prefetch=0,
            grid=(b,),
            in_specs=[
                pl.BlockSpec((1, l, l), lambda i: (i, 0, 0)),
                pl.BlockSpec((1, l, d), lambda i: (i, 0, 0)),
            ],
            out_specs=pl.BlockSpec((1, l, d), lambda i: (i, 0, 0)),
        ),
        compiler_params=_compiler_params(("parallel",), est),
    )(masks, v)


# ---------------------------------------------------------------------------
# Module forward (eval mode) assembled from the kernels above
# ---------------------------------------------------------------------------
def multi_head_attention(x, masks, p):
    # Multi_Head_Attention.forward(key=x, value=x, query=x, mask=masks, gate=None).
    # With a mask the attention matrix is identical for both heads and independent of
    # Q/K, and the head split/merge of V cancels, so the block reduces to
    # LayerNorm(fc(softmax(mask') @ linear_value(x)) + x).
    v = linear(x, p["w_v"], p["b_v"])                    # linear_value
    attn_out = masked_attention(masks, v)                # attn dropout: identity (eval)
    fc = linear(attn_out, p["w_fc"], p["b_fc"])          # self.fc; dropout: identity
    # self.layer_norm is torch.nn.LayerNorm (biased var, eps=1e-5 inside sqrt)
    return add_layer_norm(fc, x, p["g_mha"], p["bb_mha"], eps=1e-5, torch_style=True)


def transformer_block(x, masks, p):
    out = multi_head_attention(x, masks, p)
    # position-wise FFN: Conv1d(dim_proj, 256, 1) -> ReLU -> Conv1d(256, dim_proj, 1)
    h = linear(out, p["w1"], p["b1"], activation="relu")
    ctx = linear(h, p["w2"], p["b2"])                    # dropout: identity (eval)
    context = add_layer_norm(ctx, out, p["g_int"], p["bb_int"],
                             eps=1e-6, torch_style=False)          # layer_norm_intermediate
    inp_p = linear(x, p["w_ctx"], p["b_ctx"])            # linear_proj_context(inp)
    ctx_p = linear(context, p["w_ctx"], p["b_ctx"])      # linear_proj_context(context)
    res_inp = add_layer_norm(inp_p, ctx_p, p["g_ctx"], p["bb_ctx"],
                             eps=1e-6, torch_style=False)          # layer_norm_context
    r = linear(res_inp, p["w_pw"], p["b_pw"], activation="relu")   # position_wise_fnn
    r = linear(r, p["w_pi"], p["b_pi"])                  # linear_proj_intermediate
    return add_layer_norm(r, res_inp, p["g_fin"], p["bb_fin"],
                          eps=1e-6, torch_style=False)             # layer_norm_final


def transformer_encoder_forward(inp, mask, params):
    # TransformerEncoder.forward (eval); returns x_for_att = mlp_final(last block out).
    # TODO(synk): `gate` is ignored (mathematically dead when a mask is provided, and
    # the mask is always provided here); MaxPool1d / final self.fc do not affect the
    # returned value and are omitted.
    maskf = mask.astype(jnp.float32)
    masks = maskf[:, :, None] * maskf[:, None, :]        # (B, L, L) outer-product mask
    x = inp
    for p in params["layers"]:
        x = transformer_block(x, masks, p)
    return linear(x, params["w_final"], params["b_final"])          # mlp_final


# ---------------------------------------------------------------------------
# Parameters + pure-JAX reference + self-check
# ---------------------------------------------------------------------------
def _init_linear(key, fan_in, fan_out):
    kw, kb = jax.random.split(key)
    bound = 1.0 / (fan_in ** 0.5)
    w = jax.random.uniform(kw, (fan_in, fan_out), jnp.float32, -bound, bound)
    b = jax.random.uniform(kb, (fan_out,), jnp.float32, -bound, bound)
    return w, b


def init_params(key, dim_proj, dim_fnn, hidden_size, num_layers=1):
    keys = jax.random.split(key, num_layers + 1)
    ones = jnp.ones((dim_proj,), jnp.float32)
    zeros = jnp.zeros((dim_proj,), jnp.float32)
    layers = []
    for li in range(num_layers):
        ks = jax.random.split(keys[li], 7)
        w_v, b_v = _init_linear(ks[0], dim_proj, dim_proj)
        w_fc, b_fc = _init_linear(ks[1], dim_proj, dim_proj)
        w1, b1 = _init_linear(ks[2], dim_proj, dim_fnn)      # Conv1d(dim_proj, 256, 1)
        w2, b2 = _init_linear(ks[3], dim_fnn, dim_proj)      # Conv1d(256, dim_proj, 1)
        w_ctx, b_ctx = _init_linear(ks[4], dim_proj, dim_proj)
        w_pw, b_pw = _init_linear(ks[5], dim_proj, dim_fnn)
        w_pi, b_pi = _init_linear(ks[6], dim_fnn, dim_proj)
        layers.append(dict(
            w_v=w_v, b_v=b_v, w_fc=w_fc, b_fc=b_fc, g_mha=ones, bb_mha=zeros,
            w1=w1, b1=b1, w2=w2, b2=b2, g_int=ones, bb_int=zeros,
            w_ctx=w_ctx, b_ctx=b_ctx, g_ctx=ones, bb_ctx=zeros,
            w_pw=w_pw, b_pw=b_pw, w_pi=w_pi, b_pi=b_pi, g_fin=ones, bb_fin=zeros))
    w_final, b_final = _init_linear(keys[-1], dim_proj, hidden_size)
    return dict(layers=layers, w_final=w_final, b_final=b_final)


def reference_forward(inp, mask, params):
    hi = jax.lax.Precision.HIGHEST

    def lin(x, w, b):
        return jnp.einsum("blk,kn->bln", x, w, precision=hi) + b

    def ln_torch(x, g, b, eps=1e-5):
        mu = jnp.mean(x, -1, keepdims=True)
        var = jnp.mean((x - mu) ** 2, -1, keepdims=True)
        return g * (x - mu) / jnp.sqrt(var + eps) + b

    def ln_custom(x, g, b, eps=1e-6):
        mu = jnp.mean(x, -1, keepdims=True)
        std = jnp.sqrt(jnp.sum((x - mu) ** 2, -1, keepdims=True) / (x.shape[-1] - 1))
        return g * (x - mu) / (std + eps) + b

    maskf = mask.astype(jnp.float32)
    masks = maskf[:, :, None] * maskf[:, None, :]
    attn = jax.nn.softmax(jnp.where(masks == 0.0, 1e-8, masks), axis=-1)
    x = inp
    for p in params["layers"]:
        v = lin(x, p["w_v"], p["b_v"])
        attn_out = jnp.einsum("bij,bjd->bid", attn, v, precision=hi)
        mha = ln_torch(lin(attn_out, p["w_fc"], p["b_fc"]) + x, p["g_mha"], p["bb_mha"])
        ctx = lin(jax.nn.relu(lin(mha, p["w1"], p["b1"])), p["w2"], p["b2"])
        context = ln_custom(ctx + mha, p["g_int"], p["bb_int"])
        res_inp = ln_custom(lin(x, p["w_ctx"], p["b_ctx"])
                            + lin(context, p["w_ctx"], p["b_ctx"]),
                            p["g_ctx"], p["bb_ctx"])
        r = lin(jax.nn.relu(lin(res_inp, p["w_pw"], p["b_pw"])), p["w_pi"], p["b_pi"])
        x = ln_custom(r + res_inp, p["g_fin"], p["bb_fin"])
    return lin(x, params["w_final"], params["b_final"])


if __name__ == "__main__":
    key = jax.random.PRNGKey(0)
    k_inp, k_par = jax.random.split(key)

    # Shapes consistent with the module: Multi_Head_Attention hard-codes seq len 100,
    # dim_FNN=256 and hidden_size=230 are fixed by the module; dim_proj kept small.
    batch, seq_len, dim_proj, dim_fnn, hidden_size = 2, 100, 32, 256, 230

    inp = jax.random.normal(k_inp, (batch, seq_len, dim_proj), jnp.float32)
    # Padding mask: batch 0 fully valid, batch 1 valid for the first 60 tokens.
    mask = jnp.concatenate(
        [jnp.ones((1, seq_len), jnp.float32),
         jnp.concatenate([jnp.ones((1, 60), jnp.float32),
                          jnp.zeros((1, seq_len - 60), jnp.float32)], axis=1)],
        axis=0)
    params = init_params(k_par, dim_proj, dim_fnn, hidden_size, num_layers=1)

    out = jax.jit(transformer_encoder_forward)(inp, mask, params)
    out = jax.block_until_ready(out)
    assert out.shape == (batch, seq_len, hidden_size)

    ref = reference_forward(inp, mask, params)
    max_err = float(jnp.max(jnp.abs(out - ref)))
    assert jnp.allclose(out, ref, atol=5e-3, rtol=5e-3), f"max abs err {max_err}"
    print("KERNEL_OK")
</pallas_src>

<mosaic_0001>
module attributes {stable_mosaic.version = 11 : i64} {
  func.func @_linear_kernel(%arg0: i32, %arg1: i32, %arg2: memref<200x32xf32, #tpu.memory_space<vmem>>, %arg3: memref<32x128xf32, #tpu.memory_space<vmem>>, %arg4: memref<1x128xf32, #tpu.memory_space<vmem>>, %arg5: memref<200x128xf32, #tpu.memory_space<vmem>>) attributes {dimension_semantics = [#tpu.dimension_semantics<parallel>, #tpu.dimension_semantics<parallel>], iteration_bounds = array<i64: 1, 1>, scalar_prefetch = 0 : i64, scratch_operands = 0 : i64, tpu.core_type = #tpu.core_type<tc>, window_params = [{transform_indices = @transform_0, window_bounds = array<i64: 200, 32>}, {transform_indices = @transform_1, window_bounds = array<i64: 32, 128>}, {transform_indices = @transform_2, window_bounds = array<i64: 1, 128>}, {transform_indices = @transform_3, window_bounds = array<i64: 200, 128>}]} {
    %c0 = arith.constant 0 : index
    %c0_0 = arith.constant 0 : index
    %0 = vector.load %arg2[%c0, %c0_0] : memref<200x32xf32, #tpu.memory_space<vmem>>, vector<200x32xf32>
    %c0_1 = arith.constant 0 : index
    %c0_2 = arith.constant 0 : index
    %1 = vector.load %arg3[%c0_1, %c0_2] : memref<32x128xf32, #tpu.memory_space<vmem>>, vector<32x128xf32>
    %cst = arith.constant dense<0.000000e+00> : vector<200x128xf32>
    %2 = tpu.matmul %0, %1, %cst {dimension_numbers = #tpu.dot_dimension_numbers<[1], [0], [0], [1], [0, 0, 1, 1], [], []>} : vector<200x32xf32>, vector<32x128xf32>, vector<200x128xf32> -> vector<200x128xf32>
    %c0_3 = arith.constant 0 : index
    %c0_4 = arith.constant 0 : index
    %3 = vector.load %arg4[%c0_3, %c0_4] : memref<1x128xf32, #tpu.memory_space<vmem>>, vector<1x128xf32>
    %4 = vector.broadcast %3 : vector<1x128xf32> to vector<200x128xf32>
    %5 = arith.addf %2, %4 : vector<200x128xf32>
    %c0_5 = arith.constant 0 : index
    %c0_6 = arith.constant 0 : index
    %6 = vector.load %arg5[%c0_5, %c0_6] : memref<200x128xf32, #tpu.memory_space<vmem>>, vector<200x128xf32>
    tpu.vector_store %arg5[%c0_5, %c0_6], %5 {strides = array<i32>} : memref<200x128xf32, #tpu.memory_space<vmem>>, vector<200x128xf32>,
    return
  }
  func.func @transform_0(%arg0: i32, %arg1: i32) -> (i32, i32) {
    %c0_i32 = arith.constant 0 : i32
    %c0_i32_0 = arith.constant 0 : i32
    return %arg0, %c0_i32 : i32, i32
  }
  func.func @transform_1(%arg0: i32, %arg1: i32) -> (i32, i32) {
    %c0_i32 = arith.constant 0 : i32
    %c0_i32_0 = arith.constant 0 : i32
    return %c0_i32, %arg1 : i32, i32
  }
  func.func @transform_2(%arg0: i32, %arg1: i32) -> (i32, i32) {
    %c0_i32 = arith.constant 0 : i32
    %c0_i32_0 = arith.constant 0 : i32
    return %c0_i32, %arg1 : i32, i32
  }
  func.func @transform_3(%arg0: i32, %arg1: i32) -> (i32, i32) {
    %c0_i32 = arith.constant 0 : i32
    return %arg0, %arg1 : i32, i32
  }
}

module attributes {stable_mosaic.version = 11 : i64} {
  func.func @_attn_kernel(%arg0: i32, %arg1: memref<1x100x100xf32, #tpu.memory_space<vmem>>, %arg2: memref<1x100x32xf32, #tpu.memory_space<vmem>>, %arg3: memref<1x100x32xf32, #tpu.memory_space<vmem>>) attributes {dimension_semantics = [#tpu.dimension_semantics<parallel>], iteration_bounds = array<i64: 2>, scalar_prefetch = 0 : i64, scratch_operands = 0 : i64, tpu.core_type = #tpu.core_type<tc>, window_params = [{transform_indices = @transform_0, window_bounds = array<i64: 1, 100, 100>}, {transform_indices = @transform_1, window_bounds = array<i64: 1, 100, 32>}, {transform_indices = @transform_2, window_bounds = array<i64: 1, 100, 32>}]} {
    %c0 = arith.constant 0 : index
    %c0_0 = arith.constant 0 : index
    %c0_1 = arith.constant 0 : index
    %0 = vector.load %arg1[%c0, %c0_0, %c0_1] : memref<1x100x100xf32, #tpu.memory_space<vmem>>, vector<1x100x100xf32>
    %1 = vector.shape_cast %0 : vector<1x100x100xf32> to vector<100x100xf32>
    %cst = arith.constant 0.000000e+00 : f32
    %2 = vector.broadcast %cst : f32 to vector<100x100xf32>
    %3 = arith.cmpf oeq, %1, %2 : vector<100x100xf32>
    %cst_2 = arith.constant 9.99999993E-9 : f32
    %4 = vector.broadcast %cst_2 : f32 to vector<100x100xf32>
    %5 = arith.select %3, %4, %1 : vector<100x100xi1>, vector<100x100xf32>
    %cst_3 = arith.constant dense<0xFF800000> : vector<100xf32>
    %6 = vector.multi_reduction <maximumf>, %5, %cst_3 [1] : vector<100x100xf32> to vector<100xf32>
    %7 = vector.shape_cast %6 : vector<100xf32> to vector<100x1xf32>
    %8 = vector.broadcast %7 : vector<100x1xf32> to vector<100x100xf32>
    %9 = arith.subf %5, %8 : vector<100x100xf32>
    %10 = math.exp %9 : vector<100x100xf32>
    %cst_4 = arith.constant dense<0.000000e+00> : vector<100xf32>
    %11 = vector.multi_reduction <add>, %10, %cst_4 [1] : vector<100x100xf32> to vector<100xf32>
    %12 = vector.shape_cast %11 : vector<100xf32> to vector<100x1xf32>
    %13 = tpu.reciprocal %12 : vector<100x1xf32> -> vector<100x1xf32>
    %14 = vector.broadcast %13 : vector<100x1xf32> to vector<100x100xf32>
    %15 = arith.mulf %10, %14 : vector<100x100xf32>
    %c0_5 = arith.constant 0 : index
    %c0_6 = arith.constant 0 : index
    %c0_7 = arith.constant 0 : index
    %16 = vector.load %arg2[%c0_5, %c0_6, %c0_7] : memref<1x100x32xf32, #tpu.memory_space<vmem>>, vector<1x100x32xf32>
    %17 = vector.shape_cast %16 : vector<1x100x32xf32> to vector<100x32xf32>
    %cst_8 = arith.constant dense<0.000000e+00> : vector<100x32xf32>
    %18 = tpu.matmul %15, %17, %cst_8 {dimension_numbers = #tpu.dot_dimension_numbers<[1], [0], [0], [1], [0, 0, 1, 1], [], []>} : vector<100x100xf32>, vector<100x32xf32>, vector<100x32xf32> -> vector<100x32xf32>
    %c0_9 = arith.constant 0 : index
    %c0_10 = arith.constant 0 : index
    %c0_11 = arith.constant 0 : index
    %19 = vector.load %arg3[%c0_9, %c0_10, %c0_11] : memref<1x100x32xf32, #tpu.memory_space<vmem>>, vector<1x100x32xf32>
    %20 = vector.shape_cast %19 : vector<1x100x32xf32> to vector<100x32xf32>
    %21 = vector.shape_cast %18 : vector<100x32xf32> to vector<1x100x32xf32>
    tpu.vector_store %arg3[%c0_9, %c0_10, %c0_11], %21 {strides = array<i32>} : memref<1x100x32xf32, #tpu.memory_space<vmem>>, vector<1x100x32xf32>,
    return
  }
  func.func @transform_0(%arg0: i32) -> (i32, i32, i32) {
    %c0_i32 = arith.constant 0 : i32
    %c0_i32_0 = arith.constant 0 : i32
    %c0_i32_1 = arith.constant 0 : i32
    return %arg0, %c0_i32, %c0_i32_0 : i32, i32, i32
  }
  func.func @transform_1(%arg0: i32) -> (i32, i32, i32) {
    %c0_i32 = arith.constant 0 : i32
    %c0_i32_0 = arith.constant 0 : i32
    %c0_i32_1 = arith.constant 0 : i32
    return %arg0, %c0_i32, %c0_i32_0 : i32, i32, i32
  }
  func.func @transform_2(%arg0: i32) -> (i32, i32, i32) {
    %c0_i32 = arith.constant 0 : i32
    %c0_i32_0 = arith.constant 0 : i32
    %c0_i32_1 = arith.constant 0 : i32
    return %arg0, %c0_i32, %c0_i32_0 : i32, i32, i32
  }
}

module attributes {stable_mosaic.version = 11 : i64} {
  func.func @_add_ln_kernel(%arg0: i32, %arg1: memref<200x128xf32, #tpu.memory_space<vmem>>, %arg2: memref<200x128xf32, #tpu.memory_space<vmem>>, %arg3: memref<1x128xf32, #tpu.memory_space<vmem>>, %arg4: memref<1x128xf32, #tpu.memory_space<vmem>>, %arg5: memref<200x128xf32, #tpu.memory_space<vmem>>) attributes {dimension_semantics = [#tpu.dimension_semantics<parallel>], iteration_bounds = array<i64: 1>, scalar_prefetch = 0 : i64, scratch_operands = 0 : i64, tpu.core_type = #tpu.core_type<tc>, window_params = [{transform_indices = @transform_0, window_bounds = array<i64: 200, 128>}, {transform_indices = @transform_1, window_bounds = array<i64: 200, 128>}, {pipeline_mode = #tpu.pipeline_mode<synchronous>, transform_indices = @transform_2, window_bounds = array<i64: 1, 128>}, {pipeline_mode = #tpu.pipeline_mode<synchronous>, transform_indices = @transform_3, window_bounds = array<i64: 1, 128>}, {transform_indices = @transform_4, window_bounds = array<i64: 200, 128>}]} {
    %c0 = arith.constant 0 : index
    %c0_0 = arith.constant 0 : index
    %0 = vector.load %arg1[%c0, %c0_0] : memref<200x128xf32, #tpu.memory_space<vmem>>, vector<200x128xf32>
    %c0_1 = arith.constant 0 : index
    %c0_2 = arith.constant 0 : index
    %1 = vector.load %arg2[%c0_1, %c0_2] : memref<200x128xf32, #tpu.memory_space<vmem>>, vector<200x128xf32>
    %2 = arith.addf %0, %1 : vector<200x128xf32>
    %3 = tpu.iota {dimensions = array<i32: 1>} : vector<1x128xi32>
    %c32_i32 = arith.constant 32 : i32
    %4 = vector.broadcast %c32_i32 : i32 to vector<1x128xi32>
    %5 = arith.cmpi slt, %3, %4 : vector<1x128xi32>
    %cst = arith.constant 0.000000e+00 : f32
    %6 = vector.shape_cast %5 : vector<1x128xi1> to vector<1x128xi1>
    %7 = vector.broadcast %6 : vector<1x128xi1> to vector<200x128xi1>
    %8 = vector.broadcast %cst : f32 to vector<200x128xf32>
    %9 = arith.select %7, %2, %8 : vector<200x128xi1>, vector<200x128xf32>
    %cst_3 = arith.constant dense<0.000000e+00> : vector<200xf32>
    %10 = vector.multi_reduction <add>, %9, %cst_3 [1] : vector<200x128xf32> to vector<200xf32>
    %11 = vector.shape_cast %10 : vector<200xf32> to vector<200x1xf32>
    %cst_4 = arith.constant 3.125000e-02 : f32
    %12 = vector.broadcast %cst_4 : f32 to vector<200x1xf32>
    %13 = arith.mulf %11, %12 : vector<200x1xf32>
    %14 = vector.broadcast %13 : vector<200x1xf32> to vector<200x128xf32>
    %15 = arith.subf %9, %14 : vector<200x128xf32>
    %cst_5 = arith.constant 0.000000e+00 : f32
    %16 = vector.shape_cast %5 : vector<1x128xi1> to vector<1x128xi1>
    %17 = vector.broadcast %16 : vector<1x128xi1> to vector<200x128xi1>
    %18 = vector.broadcast %cst_5 : f32 to vector<200x128xf32>
    %19 = arith.select %17, %15, %18 : vector<200x128xi1>, vector<200x128xf32>
    %20 = arith.mulf %19, %19 : vector<200x128xf32>
    %cst_6 = arith.constant dense<0.000000e+00> : vector<200xf32>
    %21 = vector.multi_reduction <add>, %20, %cst_6 [1] : vector<200x128xf32> to vector<200xf32>
    %22 = vector.shape_cast %21 : vector<200xf32> to vector<200x1xf32>
    %cst_7 = arith.constant 3.125000e-02 : f32
    %23 = vector.broadcast %cst_7 : f32 to vector<200x1xf32>
    %24 = arith.mulf %22, %23 : vector<200x1xf32>
    %cst_8 = arith.constant 9.99999974E-6 : f32
    %25 = vector.broadcast %cst_8 : f32 to vector<200x1xf32>
    %26 = arith.addf %24, %25 : vector<200x1xf32>
    %27 = math.rsqrt %26 : vector<200x1xf32>
    %28 = vector.broadcast %27 : vector<200x1xf32> to vector<200x128xf32>
    %29 = arith.mulf %19, %28 : vector<200x128xf32>
    %c0_9 = arith.constant 0 : index
    %c0_10 = arith.constant 0 : index
    %30 = vector.load %arg3[%c0_9, %c0_10] : memref<1x128xf32, #tpu.memory_space<vmem>>, vector<1x128xf32>
    %31 = vector.broadcast %30 : vector<1x128xf32> to vector<200x128xf32>
    %32 = arith.mulf %29, %31 : vector<200x128xf32>
    %c0_11 = arith.constant 0 : index
    %c0_12 = arith.constant 0 : index
    %33 = vector.load %arg4[%c0_11, %c0_12] : memref<1x128xf32, #tpu.memory_space<vmem>>, vector<1x128xf32>
    %34 = vector.broadcast %33 : vector<1x128xf32> to vector<200x128xf32>
    %35 = arith.addf %32, %34 : vector<200x128xf32>
    %c0_13 = arith.constant 0 : index
    %c0_14 = arith.constant 0 : index
    %36 = vector.load %arg5[%c0_13, %c0_14] : memref<200x128xf32, #tpu.memory_space<vmem>>, vector<200x128xf32>
    tpu.vector_store %arg5[%c0_13, %c0_14], %35 {strides = array<i32>} : memref<200x128xf32, #tpu.memory_space<vmem>>, vector<200x128xf32>,
    return
  }
  func.func @transform_0(%arg0: i32) -> (i32, i32) {
    %c0_i32 = arith.constant 0 : i32
    %c0_i32_0 = arith.constant 0 : i32
    return %arg0, %c0_i32 : i32, i32
  }
  func.func @transform_1(%arg0: i32) -> (i32, i32) {
    %c0_i32 = arith.constant 0 : i32
    %c0_i32_0 = arith.constant 0 : i32
    return %arg0, %c0_i32 : i32, i32
  }
  func.func @transform_2(%arg0: i32) -> (i32, i32) {
    %c0_i32 = arith.constant 0 : i32
    %c0_i32_0 = arith.constant 0 : i32
    %c0_i32_1 = arith.constant 0 : i32
    return %c0_i32, %c0_i32_0 : i32, i32
  }
  func.func @transform_3(%arg0: i32) -> (i32, i32) {
    %c0_i32 = arith.constant 0 : i32
    %c0_i32_0 = arith.constant 0 : i32
    %c0_i32_1 = arith.constant 0 : i32
    return %c0_i32, %c0_i32_0 : i32, i32
  }
  func.func @transform_4(%arg0: i32) -> (i32, i32) {
    %c0_i32 = arith.constant 0 : i32
    %c0_i32_0 = arith.constant 0 : i32
    return %arg0, %c0_i32 : i32, i32
  }
}

module attributes {stable_mosaic.version = 11 : i64} {
  func.func @_linear_kernel(%arg0: i32, %arg1: i32, %arg2: memref<200x32xf32, #tpu.memory_space<vmem>>, %arg3: memref<32x256xf32, #tpu.memory_space<vmem>>, %arg4: memref<1x256xf32, #tpu.memory_space<vmem>>, %arg5: memref<200x256xf32, #tpu.memory_space<vmem>>) attributes {dimension_semantics = [#tpu.dimension_semantics<parallel>, #tpu.dimension_semantics<parallel>], iteration_bounds = array<i64: 1, 1>, scalar_prefetch = 0 : i64, scratch_operands = 0 : i64, tpu.core_type = #tpu.core_type<tc>, window_params = [{transform_indices = @transform_0, window_bounds = array<i64: 200, 32>}, {transform_indices = @transform_1, window_bounds = array<i64: 32, 256>}, {transform_indices = @transform_2, window_bounds = array<i64: 1, 256>}, {transform_indices = @transform_3, window_bounds = array<i64: 200, 256>}]} {
    %c0 = arith.constant 0 : index
    %c0_0 = arith.constant 0 : index
    %0 = vector.load %arg2[%c0, %c0_0] : memref<200x32xf32, #tpu.memory_space<vmem>>, vector<200x32xf32>
    %c0_1 = arith.constant 0 : index
    %c0_2 = arith.constant 0 : index
    %1 = vector.load %arg3[%c0_1, %c0_2] : memref<32x256xf32, #tpu.memory_space<vmem>>, vector<32x256xf32>
    %cst = arith.constant dense<0.000000e+00> : vector<200x256xf32>
    %2 = tpu.matmul %0, %1, %cst {dimension_numbers = #tpu.dot_dimension_numbers<[1], [0], [0], [1], [0, 0, 1, 1], [], []>} : vector<200x32xf32>, vector<32x256xf32>, vector<200x256xf32> -> vector<200x256xf32>
    %c0_3 = arith.constant 0 : index
    %c0_4 = arith.constant 0 : index
    %3 = vector.load %arg4[%c0_3, %c0_4] : memref<1x256xf32, #tpu.memory_space<vmem>>, vector<1x256xf32>
    %4 = vector.broadcast %3 : vector<1x256xf32> to vector<200x256xf32>
    %5 = arith.addf %2, %4 : vector<200x256xf32>
    %cst_5 = arith.constant 0.000000e+00 : f32
    %6 = vector.broadcast %cst_5 : f32 to vector<200x256xf32>
    %7 = arith.maximumf %5, %6 : vector<200x256xf32>
    %c0_6 = arith.constant 0 : index
    %c0_7 = arith.constant 0 : index
    %8 = vector.load %arg5[%c0_6, %c0_7] : memref<200x256xf32, #tpu.memory_space<vmem>>, vector<200x256xf32>
    tpu.vector_store %arg5[%c0_6, %c0_7], %7 {strides = array<i32>} : memref<200x256xf32, #tpu.memory_space<vmem>>, vector<200x256xf32>,
    return
  }
  func.func @transform_0(%arg0: i32, %arg1: i32) -> (i32, i32) {
    %c0_i32 = arith.constant 0 : i32
    %c0_i32_0 = arith.constant 0 : i32
    return %arg0, %c0_i32 : i32, i32
  }
  func.func @transform_1(%arg0: i32, %arg1: i32) -> (i32, i32) {
    %c0_i32 = arith.constant 0 : i32
    %c0_i32_0 = arith.constant 0 : i32
    return %c0_i32, %arg1 : i32, i32
  }
  func.func @transform_2(%arg0: i32, %arg1: i32) -> (i32, i32) {
    %c0_i32 = arith.constant 0 : i32
    %c0_i32_0 = arith.constant 0 : i32
    return %c0_i32, %arg1 : i32, i32
  }
  func.func @transform_3(%arg0: i32, %arg1: i32) -> (i32, i32) {
    %c0_i32 = arith.constant 0 : i32
    return %arg0, %arg1 : i32, i32
  }
}

module attributes {stable_mosaic.version = 11 : i64} {
  func.func @_linear_kernel(%arg0: i32, %arg1: i32, %arg2: memref<200x256xf32, #tpu.memory_space<vmem>>, %arg3: memref<256x128xf32, #tpu.memory_space<vmem>>, %arg4: memref<1x128xf32, #tpu.memory_space<vmem>>, %arg5: memref<200x128xf32, #tpu.memory_space<vmem>>) attributes {dimension_semantics = [#tpu.dimension_semantics<parallel>, #tpu.dimension_semantics<parallel>], iteration_bounds = array<i64: 1, 1>, scalar_prefetch = 0 : i64, scratch_operands = 0 : i64, tpu.core_type = #tpu.core_type<tc>, window_params = [{transform_indices = @transform_0, window_bounds = array<i64: 200, 256>}, {transform_indices = @transform_1, window_bounds = array<i64: 256, 128>}, {transform_indices = @transform_2, window_bounds = array<i64: 1, 128>}, {transform_indices = @transform_3, window_bounds = array<i64: 200, 128>}]} {
    %c0 = arith.constant 0 : index
    %c0_0 = arith.constant 0 : index
    %0 = vector.load %arg2[%c0, %c0_0] : memref<200x256xf32, #tpu.memory_space<vmem>>, vector<200x256xf32>
    %c0_1 = arith.constant 0 : index
    %c0_2 = arith.constant 0 : index
    %1 = vector.load %arg3[%c0_1, %c0_2] : memref<256x128xf32, #tpu.memory_space<vmem>>, vector<256x128xf32>
    %cst = arith.constant dense<0.000000e+00> : vector<200x128xf32>
    %2 = tpu.matmul %0, %1, %cst {dimension_numbers = #tpu.dot_dimension_numbers<[1], [0], [0], [1], [0, 0, 1, 1], [], []>} : vector<200x256xf32>, vector<256x128xf32>, vector<200x128xf32> -> vector<200x128xf32>
    %c0_3 = arith.constant 0 : index
    %c0_4 = arith.constant 0 : index
    %3 = vector.load %arg4[%c0_3, %c0_4] : memref<1x128xf32, #tpu.memory_space<vmem>>, vector<1x128xf32>
    %4 = vector.broadcast %3 : vector<1x128xf32> to vector<200x128xf32>
    %5 = arith.addf %2, %4 : vector<200x128xf32>
    %c0_5 = arith.constant 0 : index
    %c0_6 = arith.constant 0 : index
    %6 = vector.load %arg5[%c0_5, %c0_6] : memref<200x128xf32, #tpu.memory_space<vmem>>, vector<200x128xf32>
    tpu.vector_store %arg5[%c0_5, %c0_6], %5 {strides = array<i32>} : memref<200x128xf32, #tpu.memory_space<vmem>>, vector<200x128xf32>,
    return
  }
  func.func @transform_0(%arg0: i32, %arg1: i32) -> (i32, i32) {
    %c0_i32 = arith.constant 0 : i32
    %c0_i32_0 = arith.constant 0 : i32
    return %arg0, %c0_i32 : i32, i32
  }
  func.func @transform_1(%arg0: i32, %arg1: i32) -> (i32, i32) {
    %c0_i32 = arith.constant 0 : i32
    %c0_i32_0 = arith.constant 0 : i32
    return %c0_i32, %arg1 : i32, i32
  }
  func.func @transform_2(%arg0: i32, %arg1: i32) -> (i32, i32) {
    %c0_i32 = arith.constant 0 : i32
    %c0_i32_0 = arith.constant 0 : i32
    return %c0_i32, %arg1 : i32, i32
  }
  func.func @transform_3(%arg0: i32, %arg1: i32) -> (i32, i32) {
    %c0_i32 = arith.constant 0 : i32
    return %arg0, %arg1 : i32, i32
  }
}

module attributes {stable_mosaic.version = 11 : i64} {
  func.func @_add_ln_kernel(%arg0: i32, %arg1: memref<200x128xf32, #tpu.memory_space<vmem>>, %arg2: memref<200x128xf32, #tpu.memory_space<vmem>>, %arg3: memref<1x128xf32, #tpu.memory_space<vmem>>, %arg4: memref<1x128xf32, #tpu.memory_space<vmem>>, %arg5: memref<200x128xf32, #tpu.memory_space<vmem>>) attributes {dimension_semantics = [#tpu.dimension_semantics<parallel>], iteration_bounds = array<i64: 1>, scalar_prefetch = 0 : i64, scratch_operands = 0 : i64, tpu.core_type = #tpu.core_type<tc>, window_params = [{transform_indices = @transform_0, window_bounds = array<i64: 200, 128>}, {transform_indices = @transform_1, window_bounds = array<i64: 200, 128>}, {pipeline_mode = #tpu.pipeline_mode<synchronous>, transform_indices = @transform_2, window_bounds = array<i64: 1, 128>}, {pipeline_mode = #tpu.pipeline_mode<synchronous>, transform_indices = @transform_3, window_bounds = array<i64: 1, 128>}, {transform_indices = @transform_4, window_bounds = array<i64: 200, 128>}]} {
    %c0 = arith.constant 0 : index
    %c0_0 = arith.constant 0 : index
    %0 = vector.load %arg1[%c0, %c0_0] : memref<200x128xf32, #tpu.memory_space<vmem>>, vector<200x128xf32>
    %c0_1 = arith.constant 0 : index
    %c0_2 = arith.constant 0 : index
    %1 = vector.load %arg2[%c0_1, %c0_2] : memref<200x128xf32, #tpu.memory_space<vmem>>, vector<200x128xf32>
    %2 = arith.addf %0, %1 : vector<200x128xf32>
    %3 = tpu.iota {dimensions = array<i32: 1>} : vector<1x128xi32>
    %c32_i32 = arith.constant 32 : i32
    %4 = vector.broadcast %c32_i32 : i32 to vector<1x128xi32>
    %5 = arith.cmpi slt, %3, %4 : vector<1x128xi32>
    %cst = arith.constant 0.000000e+00 : f32
    %6 = vector.shape_cast %5 : vector<1x128xi1> to vector<1x128xi1>
    %7 = vector.broadcast %6 : vector<1x128xi1> to vector<200x128xi1>
    %8 = vector.broadcast %cst : f32 to vector<200x128xf32>
    %9 = arith.select %7, %2, %8 : vector<200x128xi1>, vector<200x128xf32>
    %cst_3 = arith.constant dense<0.000000e+00> : vector<200xf32>
    %10 = vector.multi_reduction <add>, %9, %cst_3 [1] : vector<200x128xf32> to vector<200xf32>
    %11 = vector.shape_cast %10 : vector<200xf32> to vector<200x1xf32>
    %cst_4 = arith.constant 3.125000e-02 : f32
    %12 = vector.broadcast %cst_4 : f32 to vector<200x1xf32>
    %13 = arith.mulf %11, %12 : vector<200x1xf32>
    %14 = vector.broadcast %13 : vector<200x1xf32> to vector<200x128xf32>
    %15 = arith.subf %9, %14 : vector<200x128xf32>
    %cst_5 = arith.constant 0.000000e+00 : f32
    %16 = vector.shape_cast %5 : vector<1x128xi1> to vector<1x128xi1>
    %17 = vector.broadcast %16 : vector<1x128xi1> to vector<200x128xi1>
    %18 = vector.broadcast %cst_5 : f32 to vector<200x128xf32>
    %19 = arith.select %17, %15, %18 : vector<200x128xi1>, vector<200x128xf32>
    %20 = arith.mulf %19, %19 : vector<200x128xf32>
    %cst_6 = arith.constant dense<0.000000e+00> : vector<200xf32>
    %21 = vector.multi_reduction <add>, %20, %cst_6 [1] : vector<200x128xf32> to vector<200xf32>
    %22 = vector.shape_cast %21 : vector<200xf32> to vector<200x1xf32>
    %cst_7 = arith.constant 0.0322580636 : f32
    %23 = vector.broadcast %cst_7 : f32 to vector<200x1xf32>
    %24 = arith.mulf %22, %23 : vector<200x1xf32>
    %25 = math.sqrt %24 : vector<200x1xf32>
    %cst_8 = arith.constant 9.99999997E-7 : f32
    %26 = vector.broadcast %cst_8 : f32 to vector<200x1xf32>
    %27 = arith.addf %25, %26 : vector<200x1xf32>
    %28 = tpu.reciprocal %27 : vector<200x1xf32> -> vector<200x1xf32>
    %29 = vector.broadcast %28 : vector<200x1xf32> to vector<200x128xf32>
    %30 = arith.mulf %19, %29 : vector<200x128xf32>
    %c0_9 = arith.constant 0 : index
    %c0_10 = arith.constant 0 : index
    %31 = vector.load %arg3[%c0_9, %c0_10] : memref<1x128xf32, #tpu.memory_space<vmem>>, vector<1x128xf32>
    %32 = vector.broadcast %31 : vector<1x128xf32> to vector<200x128xf32>
    %33 = arith.mulf %30, %32 : vector<200x128xf32>
    %c0_11 = arith.constant 0 : index
    %c0_12 = arith.constant 0 : index
    %34 = vector.load %arg4[%c0_11, %c0_12] : memref<1x128xf32, #tpu.memory_space<vmem>>, vector<1x128xf32>
    %35 = vector.broadcast %34 : vector<1x128xf32> to vector<200x128xf32>
    %36 = arith.addf %33, %35 : vector<200x128xf32>
    %c0_13 = arith.constant 0 : index
    %c0_14 = arith.constant 0 : index
    %37 = vector.load %arg5[%c0_13, %c0_14] : memref<200x128xf32, #tpu.memory_space<vmem>>, vector<200x128xf32>
    tpu.vector_store %arg5[%c0_13, %c0_14], %36 {strides = array<i32>} : memref<200x128xf32, #tpu.memory_space<vmem>>, vector<200x128xf32>,
    return
  }
  func.func @transform_0(%arg0: i32) -> (i32, i32) {
    %c0_i32 = arith.constant 0 : i32
    %c0_i32_0 = arith.constant 0 : i32
    return %arg0, %c0_i32 : i32, i32
  }
  func.func @transform_1(%arg0: i32) -> (i32, i32) {
    %c0_i32 = arith.constant 0 : i32
    %c0_i32_0 = arith.constant 0 : i32
    return %arg0, %c0_i32 : i32, i32
  }
  func.func @transform_2(%arg0: i32) -> (i32, i32) {
    %c0_i32 = arith.constant 0 : i32
    %c0_i32_0 = arith.constant 0 : i32
    %c0_i32_1 = arith.constant 0 : i32
    return %c0_i32, %c0_i32_0 : i32, i32
  }
  func.func @transform_3(%arg0: i32) -> (i32, i32) {
    %c0_i32 = arith.constant 0 : i32
    %c0_i32_0 = arith.constant 0 : i32
    %c0_i32_1 = arith.constant 0 : i32
    return %c0_i32, %c0_i32_0 : i32, i32
  }
  func.func @transform_4(%arg0: i32) -> (i32, i32) {
    %c0_i32 = arith.constant 0 : i32
    %c0_i32_0 = arith.constant 0 : i32
    return %arg0, %c0_i32 : i32, i32
  }
}

module attributes {stable_mosaic.version = 11 : i64} {
  func.func @_linear_kernel(%arg0: i32, %arg1: i32, %arg2: memref<200x32xf32, #tpu.memory_space<vmem>>, %arg3: memref<32x256xf32, #tpu.memory_space<vmem>>, %arg4: memref<1x256xf32, #tpu.memory_space<vmem>>, %arg5: memref<200x256xf32, #tpu.memory_space<vmem>>) attributes {dimension_semantics = [#tpu.dimension_semantics<parallel>, #tpu.dimension_semantics<parallel>], iteration_bounds = array<i64: 1, 1>, scalar_prefetch = 0 : i64, scratch_operands = 0 : i64, tpu.core_type = #tpu.core_type<tc>, window_params = [{transform_indices = @transform_0, window_bounds = array<i64: 200, 32>}, {transform_indices = @transform_1, window_bounds = array<i64: 32, 256>}, {transform_indices = @transform_2, window_bounds = array<i64: 1, 256>}, {transform_indices = @transform_3, window_bounds = array<i64: 200, 256>}]} {
    %c0 = arith.constant 0 : index
    %c0_0 = arith.constant 0 : index
    %0 = vector.load %arg2[%c0, %c0_0] : memref<200x32xf32, #tpu.memory_space<vmem>>, vector<200x32xf32>
    %c0_1 = arith.constant 0 : index
    %c0_2 = arith.constant 0 : index
    %1 = vector.load %arg3[%c0_1, %c0_2] : memref<32x256xf32, #tpu.memory_space<vmem>>, vector<32x256xf32>
    %cst = arith.constant dense<0.000000e+00> : vector<200x256xf32>
    %2 = tpu.matmul %0, %1, %cst {dimension_numbers = #tpu.dot_dimension_numbers<[1], [0], [0], [1], [0, 0, 1, 1], [], []>} : vector<200x32xf32>, vector<32x256xf32>, vector<200x256xf32> -> vector<200x256xf32>
    %c0_3 = arith.constant 0 : index
    %c0_4 = arith.constant 0 : index
    %3 = vector.load %arg4[%c0_3, %c0_4] : memref<1x256xf32, #tpu.memory_space<vmem>>, vector<1x256xf32>
    %4 = vector.broadcast %3 : vector<1x256xf32> to vector<200x256xf32>
    %5 = arith.addf %2, %4 : vector<200x256xf32>
    %c0_5 = arith.constant 0 : index
    %c0_6 = arith.constant 0 : index
    %6 = vector.load %arg5[%c0_5, %c0_6] : memref<200x256xf32, #tpu.memory_space<vmem>>, vector<200x256xf32>
    tpu.vector_store %arg5[%c0_5, %c0_6], %5 {strides = array<i32>} : memref<200x256xf32, #tpu.memory_space<vmem>>, vector<200x256xf32>,
    return
  }
  func.func @transform_0(%arg0: i32, %arg1: i32) -> (i32, i32) {
    %c0_i32 = arith.constant 0 : i32
    %c0_i32_0 = arith.constant 0 : i32
    return %arg0, %c0_i32 : i32, i32
  }
  func.func @transform_1(%arg0: i32, %arg1: i32) -> (i32, i32) {
    %c0_i32 = arith.constant 0 : i32
    %c0_i32_0 = arith.constant 0 : i32
    return %c0_i32, %arg1 : i32, i32
  }
  func.func @transform_2(%arg0: i32, %arg1: i32) -> (i32, i32) {
    %c0_i32 = arith.constant 0 : i32
    %c0_i32_0 = arith.constant 0 : i32
    return %c0_i32, %arg1 : i32, i32
  }
  func.func @transform_3(%arg0: i32, %arg1: i32) -> (i32, i32) {
    %c0_i32 = arith.constant 0 : i32
    return %arg0, %arg1 : i32, i32
  }
}

</mosaic_0001>

<llo_original>
// kernel: transformer_encoder_forward.14
$region0: #{transformer_encoder_forward.14}
  #allocation0 [shape = 'u32[]', space=smem, size = 0x4, offset = 0x4, fixed_abs, tag = 'smem constant byte address 0x4 - core index']
  #allocation1 [shape = 'u32[144,128]{1,0:T(1,128)}', space=vmem, size = 0x12000, scoped, tag = 'internal scratch']
  %s0 = inlined_call_operand.vmem [shape: f32[200,32], index: 0, kind: input, shape index: {}]
  %s1 = inlined_call_operand.vmem [shape: f32[32,128], index: 1, kind: input, shape index: {}]
  %s2 = inlined_call_operand.vmem [shape: f32[1,128], index: 2, kind: input, shape index: {}]
  %s3 = inlined_call_operand.vmem [shape: f32[200,128], index: 3, kind: output, shape index: {}]
  %s4 = sld [smem:[#allocation0]]
  $region22: #{transformer_encoder_forward.14} parent=0
    _
  %s6 = ssub.s32 1, %s4
  %s7 = scalar_select 0, %s6, %s4
  // Predicated region
  $region2: #{transformer_encoder_forward.14} parent=0 // pred_check
    _
  $region3: #{transformer_encoder_forward.14} parent=0 // pred_check_branch
    %9 = sbr.rel (0) target = $region5
  $region4: #{transformer_encoder_forward.14} parent=0 // pred_region
    _
  $region5: #{transformer_encoder_forward.14} parent=0 // pred_fallthru
    _
  // Predicated region
  $region6: #{transformer_encoder_forward.14} parent=0 // pred_check
    _
  $region7: #{transformer_encoder_forward.14} parent=0 // pred_check_branch
    %11 = sbr.rel (0) target = $region9
  $region8: #{transformer_encoder_forward.14} parent=0 // pred_region
    _
  $region9: #{transformer_encoder_forward.14} parent=0 // pred_fallthru
    _
  // Predicated region
  $region10: #{transformer_encoder_forward.14} parent=0 // pred_check
    _
  $region11: #{transformer_encoder_forward.14} parent=0 // pred_check_branch
    %13 = sbr.rel (0) target = $region13
  $region12: #{transformer_encoder_forward.14} parent=0 // pred_region
    _
  $region13: #{transformer_encoder_forward.14} parent=0 // pred_fallthru
    _
  %v14 = vld [vmem:[%s0] sm:$0xff]
  %v15 = vld [vmem:[%s0 + $0x8] sm:$0xff]
  %v16 = vld [vmem:[%s0 + $0x10] sm:$0xff]
  %v17 = vld [vmem:[%s0 + $0x18] sm:$0xff]
  %v18 = vld [vmem:[%s0 + $0x20] sm:$0xff]
  %v19 = vld [vmem:[%s0 + $0x28] sm:$0xff]
  %v20 = vld [vmem:[%s0 + $0x30] sm:$0xff]
  %v21 = vld [vmem:[%s0 + $0x38] sm:$0xff]
  %v22 = vld [vmem:[%s0 + $0x40] sm:$0xff]
  %v23 = vld [vmem:[%s0 + $0x48] sm:$0xff]
  %v24 = vld [vmem:[%s0 + $0x50] sm:$0xff]
  %v25 = vld [vmem:[%s0 + $0x58] sm:$0xff]
  %v26 = vld [vmem:[%s0 + $0x60] sm:$0xff]
  %v27 = vld [vmem:[%s0 + $0x68] sm:$0xff]
  %v28 = vld [vmem:[%s0 + $0x70] sm:$0xff]
  %v29 = vld [vmem:[%s0 + $0x78] sm:$0xff]
  %v30 = vld [vmem:[%s0 + $0x80] sm:$0xff]
  %v31 = vld [vmem:[%s0 + $0x88] sm:$0xff]
  %v32 = vld [vmem:[%s0 + $0x90] sm:$0xff]
  %v33 = vld [vmem:[%s0 + $0x98] sm:$0xff]
  %v34 = vld [vmem:[%s0 + $0xa0] sm:$0xff]
  %v35 = vld [vmem:[%s0 + $0xa8] sm:$0xff]
  %v36 = vld [vmem:[%s0 + $0xb0] sm:$0xff]
  %v37 = vld [vmem:[%s0 + $0xb8] sm:$0xff]
  %v38 = vld [vmem:[%s0 + $0xc0] sm:$0xff]
  %v39 = vld [vmem:[%s1] sm:$0xff]
  %v40 = vld [vmem:[%s1 + $0x8] sm:$0xff]
  %v41 = vld [vmem:[%s1 + $0x10] sm:$0xff]
  %v42 = vld [vmem:[%s1 + $0x18] sm:$0xff]
  %v43 = vld [vmem:[%s2] sm:$0x1]
  %v45 = vlaneseq
  %v46 = vshrl.u32 %v45, 7
  %v47 = vsub.s32 0, %v46
  %v48 = vrot.slane %v43, %v47
  %vm50 = vcmask 261120
  %v52 = vsel %vm50, %v14, 0
  %v55 = vsel %vm50, %v15, 0
  %v58 = vsel %vm50, %v16, 0
  %v61 = vsel %vm50, %v17, 0
  %v64 = vsel %vm50, %v18, 0
  %v67 = vsel %vm50, %v19, 0
  %v70 = vsel %vm50, %v20, 0
  %v73 = vsel %vm50, %v21, 0
  %v76 = vsel %vm50, %v22, 0
  %v79 = vsel %vm50, %v23, 0
  %v82 = vsel %vm50, %v24, 0
  %v85 = vsel %vm50, %v25, 0
  %v88 = vsel %vm50, %v26, 0
  %v91 = vsel %vm50, %v27, 0
  %v94 = vsel %vm50, %v28, 0
  %v97 = vsel %vm50, %v29, 0
  %v100 = vsel %vm50, %v30, 0
  %v103 = vsel %vm50, %v31, 0
  %v106 = vsel %vm50, %v32, 0
  %v109 = vsel %vm50, %v33, 0
  %v112 = vsel %vm50, %v34, 0
  %v115 = vsel %vm50, %v35, 0
  %v118 = vsel %vm50, %v36, 0
  %v121 = vsel %vm50, %v37, 0
  %v124 = vsel %vm50, %v38, 0
  %126 = vmatprep.subr.mxu0 0.0
  %127 = vmatpush1.msra.mxu0 0.0
  %128 = vmatprep.subr.mxu0 0.0
  %129 = vmatpush1.msra.mxu0 0.0
  %130 = vmatprep.subr.mxu0 0.0
  %131 = vmatpush1.msra.mxu0 0.0
  %132 = vmatprep.subr.mxu0 0.0
  %133 = vmatpush1.msra.mxu0 0.0
  %134 = vmatprep.subr.mxu0 0.0
  %135 = vmatpush1.msra.mxu0 0.0
  %136 = vmatprep.subr.mxu0 0.0
  %137 = vmatpush1.msra.mxu0 0.0
  %138 = vmatprep.subr.mxu0 0.0
  %139 = vmatpush1.msra.mxu0 0.0
  %140 = vmatprep.subr.mxu0 0.0
  %141 = vmatpush1.msra.mxu0 0.0
  %142 = vmatprep.subr.mxu0 0.0
  %143 = vmatpush1.msra.mxu0 0.0
  %144 = vmatprep.subr.mxu0 0.0
  %145 = vmatpush1.msra.mxu0 0.0
  %146 = vmatprep.subr.mxu0 0.0
  %147 = vmatpush1.msra.mxu0 0.0
  %148 = vmatprep.subr.mxu0 0.0
  %149 = vmatpush1.msra.mxu0 0.0
  %150 = vmatprep.subr.mxu0 0.0
  %151 = vmatpush1.msra.mxu0 %v42
  %152 = vmatprep.subr.mxu0 0.0
  %153 = vmatpush1.msra.mxu0 %v41
  %154 = vmatprep.subr.mxu0 0.0
  %155 = vmatpush1.msra.mxu0 %v40
  %156 = vmatprep.subr.mxu0 0.0
  %157 = vmatpush1.msra.mxu0 %v39
  %158 = vmatprep.subr.mxu0 0.0
  %159 = vmatpush2.msra.mxu0 0.0
  %160 = vmatprep.subr.mxu0 0.0
  %161 = vmatpush2.msra.mxu0 0.0
  %162 = vmatprep.subr.mxu0 0.0
  %163 = vmatpush2.msra.mxu0 0.0
  %164 = vmatprep.subr.mxu0 0.0
  %165 = vmatpush2.msra.mxu0 0.0
  %166 = vmatprep.subr.mxu0 0.0
  %167 = vmatpush2.msra.mxu0 0.0
  %168 = vmatprep.subr.mxu0 0.0
  %169 = vmatpush2.msra.mxu0 0.0
  %170 = vmatprep.subr.mxu0 0.0
  %171 = vmatpush2.msra.mxu0 0.0
  %172 = vmatprep.subr.mxu0 0.0
  %173 = vmatpush2.msra.mxu0 0.0
  %174 = vmatprep.subr.mxu0 0.0
  %175 = vmatpush2.msra.mxu0 0.0
  %176 = vmatprep.subr.mxu0 0.0
  %177 = vmatpush2.msra.mxu0 0.0
  %178 = vmatprep.subr.mxu0 0.0
  %179 = vmatpush2.msra.mxu0 0.0
  %180 = vmatprep.subr.mxu0 0.0
  %181 = vmatpush2.msra.mxu0 0.0
  %182 = vmatprep.subr.mxu0 0.0
  %183 = vmatpush2.msra.mxu0 0.0
  %184 = vmatprep.subr.mxu0 0.0
  %185 = vmatpush2.msra.mxu0 0.0
  %186 = vmatprep.subr.mxu0 0.0
  %187 = vmatpush2.msra.mxu0 0.0
  %188 = vmatprep.subr.mxu0 0.0
  %189 = vmatpush2.msra.mxu0 0.0
  %190 = vmatprep.mubr.f32.mxu0 0.0
  %191 = vmatmul.mubr.f32.gmra.mxu0 %v52
  %v192 = vpop.f32.mrf.mxu0
  %v193 = vadd.f32 %v48, %v192
  %v194 = vpop.f32.mrf.mxu0
  %195 = vmatprep.mubr.f32.mxu0 0.0
  %196 = vmatmul.mubr.f32.gmra.mxu0 %v55
  %v197 = vpop.f32.mrf.mxu0
  %v198 = vadd.f32 %v48, %v197
  %v199 = vpop.f32.mrf.mxu0
  %200 = vmatprep.mubr.f32.mxu0 0.0
  %201 = vmatmul.mubr.f32.gmra.mxu0 %v58
  %v202 = vpop.f32.mrf.mxu0
  %v203 = vadd.f32 %v48, %v202
  %v204 = vpop.f32.mrf.mxu0
  %205 = vmatprep.mubr.f32.mxu0 0.0
  %206 = vmatmul.mubr.f32.gmra.mxu0 %v61
  %v207 = vpop.f32.mrf.mxu0
  %v208 = vadd.f32 %v48, %v207
  %v209 = vpop.f32.mrf.mxu0
  %210 = vmatprep.mubr.f32.mxu0 0.0
  %211 = vmatmul.mubr.f32.gmra.mxu0 %v64
  %v212 = vpop.f32.mrf.mxu0
  %v213 = vadd.f32 %v48, %v212
  %v214 = vpop.f32.mrf.mxu0
  %215 = vmatprep.mubr.f32.mxu0 0.0
  %216 = vmatmul.mubr.f32.gmra.mxu0 %v67
  %v217 = vpop.f32.mrf.mxu0
  %v218 = vadd.f32 %v48, %v217
  %v219 = vpop.f32.mrf.mxu0
  %220 = vmatprep.mubr.f32.mxu0 0.0
  %221 = vmatmul.mubr.f32.gmra.mxu0 %v70
  %v222 = vpop.f32.mrf.mxu0
  %v223 = vadd.f32 %v48, %v222
  %v224 = vpop.f32.mrf.mxu0
  %225 = vmatprep.mubr.f32.mxu0 0.0
  %226 = vmatmul.mubr.f32.gmra.mxu0 %v73
  %v227 = vpop.f32.mrf.mxu0
  %v228 = vadd.f32 %v48, %v227
  %v229 = vpop.f32.mrf.mxu0
  %230 = vmatprep.mubr.f32.mxu0 0.0
  %231 = vmatmul.mubr.f32.gmra.mxu0 %v76
  %v232 = vpop.f32.mrf.mxu0
  %v233 = vadd.f32 %v48, %v232
  %v234 = vpop.f32.mrf.mxu0
  %235 = vmatprep.mubr.f32.mxu0 0.0
  %236 = vmatmul.mubr.f32.gmra.mxu0 %v79
  %v237 = vpop.f32.mrf.mxu0
  %v238 = vadd.f32 %v48, %v237
  %v239 = vpop.f32.mrf.mxu0
  %240 = vmatprep.mubr.f32.mxu0 0.0
  %241 = vmatmul.mubr.f32.gmra.mxu0 %v82
  %v242 = vpop.f32.mrf.mxu0
  %v243 = vadd.f32 %v48, %v242
  %v244 = vpop.f32.mrf.mxu0
  %245 = vmatprep.mubr.f32.mxu0 0.0
  %246 = vmatmul.mubr.f32.gmra.mxu0 %v85
  %v247 = vpop.f32.mrf.mxu0
  %v248 = vadd.f32 %v48, %v247
  %v249 = vpop.f32.mrf.mxu0
  %250 = vmatprep.mubr.f32.mxu0 0.0
  %251 = vmatmul.mubr.f32.gmra.mxu0 %v88
  %v252 = vpop.f32.mrf.mxu0
  %v253 = vadd.f32 %v48, %v252
  %v254 = vpop.f32.mrf.mxu0
  %255 = vmatprep.mubr.f32.mxu0 0.0
  %256 = vmatmul.mubr.f32.gmra.mxu0 %v91
  %v257 = vpop.f32.mrf.mxu0
  %v258 = vadd.f32 %v48, %v257
  %v259 = vpop.f32.mrf.mxu0
  %260 = vmatprep.mubr.f32.mxu0 0.0
  %261 = vmatmul.mubr.f32.gmra.mxu0 %v94
  %v262 = vpop.f32.mrf.mxu0
  %v263 = vadd.f32 %v48, %v262
  %v264 = vpop.f32.mrf.mxu0
  %265 = vmatprep.mubr.f32.mxu0 0.0
  %266 = vmatmul.mubr.f32.gmra.mxu0 %v97
  %v267 = vpop.f32.mrf.mxu0
  %v268 = vadd.f32 %v48, %v267
  %v269 = vpop.f32.mrf.mxu0
  %270 = vmatprep.mubr.f32.mxu0 0.0
  %271 = vmatmul.mubr.f32.gmra.mxu0 %v100
  %v272 = vpop.f32.mrf.mxu0
  %v273 = vadd.f32 %v48, %v272
  %v274 = vpop.f32.mrf.mxu0
  %275 = vmatprep.mubr.f32.mxu0 0.0
  %276 = vmatmul.mubr.f32.gmra.mxu0 %v103
  %v277 = vpop.f32.mrf.mxu0
  %v278 = vadd.f32 %v48, %v277
  %v279 = vpop.f32.mrf.mxu0
  %280 = vmatprep.mubr.f32.mxu0 0.0
  %281 = vmatmul.mubr.f32.gmra.mxu0 %v106
  %v282 = vpop.f32.mrf.mxu0
  %v283 = vadd.f32 %v48, %v282
  %v284 = vpop.f32.mrf.mxu0
  %285 = vmatprep.mubr.f32.mxu0 0.0
  %286 = vmatmul.mubr.f32.gmra.mxu0 %v109
  %v287 = vpop.f32.mrf.mxu0
  %v288 = vadd.f32 %v48, %v287
  %v289 = vpop.f32.mrf.mxu0
  %290 = vmatprep.mubr.f32.mxu0 0.0
  %291 = vmatmul.mubr.f32.gmra.mxu0 %v112
  %v292 = vpop.f32.mrf.mxu0
  %v293 = vadd.f32 %v48, %v292
  %v294 = vpop.f32.mrf.mxu0
  %295 = vmatprep.mubr.f32.mxu0 0.0
  %296 = vmatmul.mubr.f32.gmra.mxu0 %v115
  %v297 = vpop.f32.mrf.mxu0
  %v298 = vadd.f32 %v48, %v297
  %v299 = vpop.f32.mrf.mxu0
  %300 = vmatprep.mubr.f32.mxu0 0.0
  %301 = vmatmul.mubr.f32.gmra.mxu0 %v118
  %v302 = vpop.f32.mrf.mxu0
  %v303 = vadd.f32 %v48, %v302
  %v304 = vpop.f32.mrf.mxu0
  %305 = vmatprep.mubr.f32.mxu0 0.0
  %306 = vmatmul.mubr.f32.gmra.mxu0 %v121
  %v307 = vpop.f32.mrf.mxu0
  %v308 = vadd.f32 %v48, %v307
  %v309 = vpop.f32.mrf.mxu0
  %310 = vmatprep.mubr.f32.mxu0 0.0
  %311 = vmatmul.mubr.f32.gmra.mxu0 %v124
  %v312 = vpop.f32.mrf.mxu0
  %v313 = vadd.f32 %v48, %v312
  %v314 = vpop.f32.mrf.mxu0
  %315 = vdwg.mxu0
  %316 = vst [vmem:[%s3] sm:$0xff] %v193
  %317 = vst [vmem:[%s3 + $0x8] sm:$0xff] %v198
  %318 = vst [vmem:[%s3 + $0x10] sm:$0xff] %v203
  %319 = vst [vmem:[%s3 + $0x18] sm:$0xff] %v208
  %320 = vst [vmem:[%s3 + $0x20] sm:$0xff] %v213
  %321 = vst [vmem:[%s3 + $0x28] sm:$0xff] %v218
  %322 = vst [vmem:[%s3 + $0x30] sm:$0xff] %v223
  %323 = vst [vmem:[%s3 + $0x38] sm:$0xff] %v228
  %324 = vst [vmem:[%s3 + $0x40] sm:$0xff] %v233
  %325 = vst [vmem:[%s3 + $0x48] sm:$0xff] %v238
  %326 = vst [vmem:[%s3 + $0x50] sm:$0xff] %v243
  %327 = vst [vmem:[%s3 + $0x58] sm:$0xff] %v248
  %328 = vst [vmem:[%s3 + $0x60] sm:$0xff] %v253
  %329 = vst [vmem:[%s3 + $0x68] sm:$0xff] %v258
  %330 = vst [vmem:[%s3 + $0x70] sm:$0xff] %v263
  %331 = vst [vmem:[%s3 + $0x78] sm:$0xff] %v268
  %332 = vst [vmem:[%s3 + $0x80] sm:$0xff] %v273
  %333 = vst [vmem:[%s3 + $0x88] sm:$0xff] %v278
  %334 = vst [vmem:[%s3 + $0x90] sm:$0xff] %v283
  %335 = vst [vmem:[%s3 + $0x98] sm:$0xff] %v288
  %336 = vst [vmem:[%s3 + $0xa0] sm:$0xff] %v293
  %337 = vst [vmem:[%s3 + $0xa8] sm:$0xff] %v298
  %338 = vst [vmem:[%s3 + $0xb0] sm:$0xff] %v303
  %339 = vst [vmem:[%s3 + $0xb8] sm:$0xff] %v308
  %340 = vst [vmem:[%s3 + $0xc0] sm:$0xff] %v313
  // Predicated region
  $region14: #{transformer_encoder_forward.14} parent=0 // pred_check
    _
  $region15: #{transformer_encoder_forward.14} parent=0 // pred_check_branch
    %342 = sbr.rel (0) target = $region17
  $region16: #{transformer_encoder_forward.14} parent=0 // pred_region
    _
  $region17: #{transformer_encoder_forward.14} parent=0 // pred_fallthru
    _
  // Predicated region
  $region18: #{transformer_encoder_forward.14} parent=0 // pred_check
    _
  $region19: #{transformer_encoder_forward.14} parent=0 // pred_check_branch
    %344 = sbr.rel (0) target = $region21
  $region20: #{transformer_encoder_forward.14} parent=0 // pred_region
    _
  $region21: #{transformer_encoder_forward.14} parent=0 // pred_fallthru
    _

// kernel: transformer_encoder_forward.15
$region0: #{transformer_encoder_forward.15}
  #allocation0 [shape = 'u32[]', space=smem, size = 0x4, offset = 0x4, fixed_abs, tag = 'smem constant byte address 0x4 - core index']
  #allocation1 [shape = 'u32[144,128]{1,0:T(1,128)}', space=vmem, size = 0x12000, scoped, tag = 'internal scratch']
  %s0 = inlined_call_operand.vmem [shape: f32[2,100,100], index: 0, kind: input, shape index: {}]
  %s1 = inlined_call_operand.vmem [shape: f32[2,100,32], index: 1, kind: input, shape index: {}]
  %s2 = inlined_call_operand.vmem [shape: f32[2,100,32], index: 2, kind: output, shape index: {}]
  %s3 = sld [smem:[#allocation0]]
  $region41: #{transformer_encoder_forward.15} parent=0
    _
  %s5 = ssub.s32 1, %s3
  %s6 = scalar_select 0, %s5, %s3
  loop: start=0, step=1, limit=4
  $region2: #{transformer_encoder_forward.15} parent=0 // loop_pre_header
    _
  $region3: #{transformer_encoder_forward.15} parent=0 // loop_header
    %s8 = sphi 0, %s12
    %p9 = scmp.ge.s32.totalorder %s8, 4
    %s18 = sphi 0, %s20
    %s21 = sphi 0, %s18
    %s22 = sphi 0, %s21
    %s38 = sphi 0, %s22
    %s44 = sphi 0, %s46
    %s47 = sphi 0, %s44
    %s48 = sphi 0, %s47
    %s64 = sphi 0, %s48
    %s70 = sphi 0, %s72
    %s73 = sphi 0, %s70
    %s74 = sphi 0, %s73
    %s90 = sphi 0, %s74
  $region4: #{transformer_encoder_forward.15} parent=0 // loop_header_branch
    %11 = sbr.rel (%p9) target = $region8
  $region5: #{transformer_encoder_forward.15} parent=0 // loop_body
    %s13 = ssub.s32 %s8, 1
    %s14 = ssub.s32 %s8, 2
    %s15 = sadd.s32 %s8, 1
    %s16 = ssub.s32 %s8, %s15
    %p17 = scmp.eq.s32.totalorder %s16, 0
    %s19 = sadd.s32 %s18, 1
    %s20 = scalar_select %p17, %s18, %s19
    %p23 = pneg %p17
    %p24 = scmp.eq.s32.totalorder %s8, 1
    %p25 = por %p23, %p24
    %p26 = scmp.ne.s32.totalorder %s18, %s21
    %p27 = scmp.eq.s32.totalorder %s8, 0
    %p28 = por %p26, %p27
    %p29 = scmp.ne.s32.totalorder %s18, %s21
    %p30 = scmp.eq.s32.totalorder %s13, 1
    %p31 = por %p29, %p30
    %p32 = scmp.ne.s32.totalorder %s21, %s22
    %p33 = scmp.eq.s32.totalorder %s13, 0
    %p34 = por %p32, %p33
    %p35 = scmp.ne.s32.totalorder %s21, %s22
    %p36 = scmp.eq.s32.totalorder %s14, 1
    %p37 = por %p35, %p36
    %p39 = scmp.ne.s32.totalorder %s22, %s38
    %p40 = scmp.eq.s32.totalorder %s14, 0
    %p41 = por %p39, %p40
    %s42 = ssub.s32 %s8, %s15
    %p43 = scmp.eq.s32.totalorder %s42, 0
    %s45 = sadd.s32 %s44, 1
    %s46 = scalar_select %p43, %s44, %s45
    %p49 = pneg %p43
    %p50 = scmp.eq.s32.totalorder %s8, 1
    %p51 = por %p49, %p50
    %p52 = scmp.ne.s32.totalorder %s44, %s47
    %p53 = scmp.eq.s32.totalorder %s8, 0
    %p54 = por %p52, %p53
    %p55 = scmp.ne.s32.totalorder %s44, %s47
    %p56 = scmp.eq.s32.totalorder %s13, 1
    %p57 = por %p55, %p56
    %p58 = scmp.ne.s32.totalorder %s47, %s48
    %p59 = scmp.eq.s32.totalorder %s13, 0
    %p60 = por %p58, %p59
    %p61 = scmp.ne.s32.totalorder %s47, %s48
    %p62 = scmp.eq.s32.totalorder %s14, 1
    %p63 = por %p61, %p62
    %p65 = scmp.ne.s32.totalorder %s48, %s64
    %p66 = scmp.eq.s32.totalorder %s14, 0
    %p67 = por %p65, %p66
    %s68 = ssub.s32 %s8, %s15
    %p69 = scmp.eq.s32.totalorder %s68, 0
    %s71 = sadd.s32 %s70, 1
    %s72 = scalar_select %p69, %s70, %s71
    %p75 = pneg %p69
    %p76 = scmp.eq.s32.totalorder %s8, 1
    %p77 = por %p75, %p76
    %p78 = scmp.ne.s32.totalorder %s70, %s73
    %p79 = scmp.eq.s32.totalorder %s8, 0
    %p80 = por %p78, %p79
    %p81 = scmp.ne.s32.totalorder %s70, %s73
    %p82 = scmp.eq.s32.totalorder %s13, 1
    %p83 = por %p81, %p82
    %p84 = scmp.ne.s32.totalorder %s73, %s74
    %p85 = scmp.eq.s32.totalorder %s13, 0
    %p86 = por %p84, %p85
    %p87 = scmp.ne.s32.totalorder %s73, %s74
    %p88 = scmp.eq.s32.totalorder %s14, 1
    %p89 = por %p87, %p88
    %p91 = scmp.ne.s32.totalorder %s74, %s90
    %p92 = scmp.eq.s32.totalorder %s14, 0
    %p93 = por %p91, %p92
    %p94 = scmp.le.s32.totalorder 1, %s8
    %p95 = scmp.lt.s32.totalorder %s8, 3
    %p96 = pnand %p94, %p95
    %p97 = pneg %p96
    // Predicated region
    $region9: #{transformer_encoder_forward.15} parent=5 // pred_check
      _
    $region10: #{transformer_encoder_forward.15} parent=5 // pred_check_branch
      %99 = sbr.rel (%p96) target = $region12
    $region11: #{transformer_encoder_forward.15} parent=5 // pred_region
      %s100 = ssub.s32 %s8, 1
    $region12: #{transformer_encoder_forward.15} parent=5 // pred_fallthru
      _
    %p101 = scmp.lt.s32.totalorder %s8, 2
    // Predicated region
    $region13: #{transformer_encoder_forward.15} parent=5 // pred_check
      %p102 = pneg %p101
    $region14: #{transformer_encoder_forward.15} parent=5 // pred_check_branch
      %104 = sbr.rel (%p102) target = $region16
    $region15: #{transformer_encoder_forward.15} parent=5 // pred_region
      // Predicated region
      $region17: #{transformer_encoder_forward.15} parent=15 // pred_check
        %p105 = pneg %p28
      $region18: #{transformer_encoder_forward.15} parent=15 // pred_check_branch
        %107 = sbr.rel (%p105) target = $region20
      $region19: #{transformer_encoder_forward.15} parent=15 // pred_region
        %p108 = scmp.lt.s32.totalorder %s8, 1
        %s109 = scalar_select %p108, %s8, 1
        %s110 = smul.addr %s109, 13
        %s111 = smul.addr %s110, 8
        %s112 = scalar_lea.vmem %s0, %s111
      $region20: #{transformer_encoder_forward.15} parent=15 // pred_fallthru
        _
      // Predicated region
      $region21: #{transformer_encoder_forward.15} parent=15 // pred_check
        %p113 = pneg %p54
      $region22: #{transformer_encoder_forward.15} parent=15 // pred_check_branch
        %115 = sbr.rel (%p113) target = $region24
      $region23: #{transformer_encoder_forward.15} parent=15 // pred_region
        %p116 = scmp.lt.s32.totalorder %s8, 1
        %s117 = scalar_select %p116, %s8, 1
        %s118 = smul.addr %s117, 13
        %s119 = smul.addr %s118, 8
        %s120 = scalar_lea.vmem %s1, %s119
      $region24: #{transformer_encoder_forward.15} parent=15 // pred_fallthru
        _
    $region16: #{transformer_encoder_forward.15} parent=5 // pred_fallthru
      _
    %p121 = scmp.le.s32.totalorder 1, %s8
    %p122 = scmp.lt.s32.totalorder %s8, 3
    %p123 = pnand %p121, %p122
    %p124 = pneg %p123
    // Predicated region
    $region25: #{transformer_encoder_forward.15} parent=5 // pred_check
      _
    $region26: #{transformer_encoder_forward.15} parent=5 // pred_check_branch
      %126 = sbr.rel (%p123) target = $region28
    $region27: #{transformer_encoder_forward.15} parent=5 // pred_region
      %s127 = ssub.s32 %s8, 1
      %p128 = scmp.lt.s32.totalorder %s13, 1
      %s129 = scalar_select %p128, %s13, 1
      %s130 = smul.addr %s129, 13
      %s131 = smul.addr %s130, 8
      %s132 = scalar_lea.vmem %s0, %s131
      %p133 = pneg %p34
      %p134 = pneg %p31
      %p135 = scmp.lt.s32.totalorder %s13, 1
      %s136 = scalar_select %p135, %s13, 1
      %s137 = smul.addr %s136, 13
      %s138 = smul.addr %s137, 8
      %s139 = scalar_lea.vmem %s1, %s138
      %p140 = pneg %p60
      %p141 = pneg %p57
      %p142 = pneg %p86
      %p143 = pneg %p83
      %p144 = scmp.lt.s32.totalorder %s13, 1
      %s145 = scalar_select %p144, %s13, 1
      %s146 = smul.addr %s145, 13
      %s147 = smul.addr %s146, 8
      %s148 = scalar_lea.vmem %s2, %s147
      %p149 = scmp.lt.s32.totalorder %s13, 1
      %s150 = scalar_select %p149, %s13, 1
      %s151 = smul.addr %s150, 13
      %s152 = smul.addr %s151, 8
      %s153 = scalar_lea.vmem %s0, %s152
      %p154 = scmp.lt.s32.totalorder %s13, 1
      %s155 = scalar_select %p154, %s13, 1
      %s156 = smul.addr %s155, 13
      %s157 = smul.addr %s156, 8
      %s158 = scalar_lea.vmem %s1, %s157
      %p159 = scmp.lt.s32.totalorder %s13, 1
      %s160 = scalar_select %p159, %s13, 1
      %s161 = smul.addr %s160, 13
      %s162 = smul.addr %s161, 8
      %s163 = scalar_lea.vmem %s2, %s162
      %v164 = vld [vmem:[%s153] sm:$0xff]
      %v165 = vld [vmem:[%s153 + $0x8] sm:$0xff]
      %v166 = vld [vmem:[%s153 + $0x10] sm:$0xff]
      %v167 = vld [vmem:[%s153 + $0x18] sm:$0xff]
      %v168 = vld [vmem:[%s153 + $0x20] sm:$0xff]
      %v169 = vld [vmem:[%s153 + $0x28] sm:$0xff]
      %v170 = vld [vmem:[%s153 + $0x30] sm:$0xff]
      %v171 = vld [vmem:[%s153 + $0x38] sm:$0xff]
      %v172 = vld [vmem:[%s153 + $0x40] sm:$0xff]
      %v173 = vld [vmem:[%s153 + $0x48] sm:$0xff]
      %v174 = vld [vmem:[%s153 + $0x50] sm:$0xff]
      %v175 = vld [vmem:[%s153 + $0x58] sm:$0xff]
      %v176 = vld [vmem:[%s153 + $0x60] sm:$0xf]
      %vm177 = vcmp.eq.f32.partialorder %v164, 0.0
      %vm178 = vcmp.eq.f32.partialorder %v165, 0.0
      %vm179 = vcmp.eq.f32.partialorder %v166, 0.0
      %vm180 = vcmp.eq.f32.partialorder %v167, 0.0
      %vm181 = vcmp.eq.f32.partialorder %v168, 0.0
      %vm182 = vcmp.eq.f32.partialorder %v169, 0.0
      %vm183 = vcmp.eq.f32.partialorder %v170, 0.0
      %vm184 = vcmp.eq.f32.partialorder %v171, 0.0
      %vm185 = vcmp.eq.f32.partialorder %v172, 0.0
      %vm186 = vcmp.eq.f32.partialorder %v173, 0.0
      %vm187 = vcmp.eq.f32.partialorder %v174, 0.0
      %vm188 = vcmp.eq.f32.partialorder %v175, 0.0
      %vm189 = vcmp.eq.f32.partialorder %v176, 0.0
      %v190 = vsel %vm177, 1e-08, %v164
      %v191 = vsel %vm178, 1e-08, %v165
      %v192 = vsel %vm179, 1e-08, %v166
      %v193 = vsel %vm180, 1e-08, %v167
      %v194 = vsel %vm181, 1e-08, %v168
      %v195 = vsel %vm182, 1e-08, %v169
      %v196 = vsel %vm183, 1e-08, %v170
      %v197 = vsel %vm184, 1e-08, %v171
      %v198 = vsel %vm185, 1e-08, %v172
      %v199 = vsel %vm186, 1e-08, %v173
      %v200 = vsel %vm187, 1e-08, %v174
      %v201 = vsel %vm188, 1e-08, %v175
      %v202 = vsel %vm189, 1e-08, %v176
      %vm203 = vcmask 818176
      %v204 = vsel %vm203, %v190, -inf
      %205 = vmax.xlane.f32.xlu0 %v204
      %v206 = vpop.xlane.xlu0 %205
      %v207 = vsel %vm203, %v191, -inf
      %208 = vmax.xlane.f32.xlu0 %v207
      %v209 = vpop.xlane.xlu0 %208
      %v210 = vsel %vm203, %v192, -inf
      %211 = vmax.xlane.f32.xlu0 %v210
      %v212 = vpop.xlane.xlu0 %211
      %v213 = vsel %vm203, %v193, -inf
      %214 = vmax.xlane.f32.xlu0 %v213
      %v215 = vpop.xlane.xlu0 %214
      %v216 = vsel %vm203, %v194, -inf
      %217 = vmax.xlane.f32.xlu0 %v216
      %v218 = vpop.xlane.xlu0 %217
      %v219 = vsel %vm203, %v195, -inf
      %220 = vmax.xlane.f32.xlu0 %v219
      %v221 = vpop.xlane.xlu0 %220
      %v222 = vsel %vm203, %v196, -inf
      %223 = vmax.xlane.f32.xlu0 %v222
      %v224 = vpop.xlane.xlu0 %223
      %v225 = vsel %vm203, %v197, -inf
      %226 = vmax.xlane.f32.xlu0 %v225
      %v227 = vpop.xlane.xlu0 %226
      %v228 = vsel %vm203, %v198, -inf
      %229 = vmax.xlane.f32.xlu0 %v228
      %v230 = vpop.xlane.xlu0 %229
      %v231 = vsel %vm203, %v199, -inf
      %232 = vmax.xlane.f32.xlu0 %v231
      %v233 = vpop.xlane.xlu0 %232
      %v234 = vsel %vm203, %v200, -inf
      %235 = vmax.xlane.f32.xlu0 %v234
      %v236 = vpop.xlane.xlu0 %235
      %v237 = vsel %vm203, %v201, -inf
      %238 = vmax.xlane.f32.xlu0 %v237
      %v239 = vpop.xlane.xlu0 %238
      %vm240 = vcmask 814080
      %v241 = vsel %vm240, %v202, -inf
      %242 = vmax.xlane.f32.xlu0 %v241
      %v243 = vpop.xlane.xlu0 %242
      %v244 = vsub.f32 %v190, %v206
      %v245 = vsub.f32 %v191, %v209
      %v246 = vsub.f32 %v192, %v212
      %v247 = vsub.f32 %v193, %v215
      %v248 = vsub.f32 %v194, %v218
      %v249 = vsub.f32 %v195, %v221
      %v250 = vsub.f32 %v196, %v224
      %v251 = vsub.f32 %v197, %v227
      %v252 = vsub.f32 %v198, %v230
      %v253 = vsub.f32 %v199, %v233
      %v254 = vsub.f32 %v200, %v236
      %v255 = vsub.f32 %v201, %v239
      %v256 = vsub.f32 %v202, %v243
      %v257 = vmul.f32 %v244, 1.442695
      %v258 = vpow.pop %v257
      %v259 = vmul.f32 %v245, 1.442695
      %v260 = vpow.pop %v259
      %v261 = vmul.f32 %v246, 1.442695
      %v262 = vpow.pop %v261
      %v263 = vmul.f32 %v247, 1.442695
      %v264 = vpow.pop %v263
      %v265 = vmul.f32 %v248, 1.442695
      %v266 = vpow.pop %v265
      %v267 = vmul.f32 %v249, 1.442695
      %v268 = vpow.pop %v267
      %v269 = vmul.f32 %v250, 1.442695
      %v270 = vpow.pop %v269
      %v271 = vmul.f32 %v251, 1.442695
      %v272 = vpow.pop %v271
      %v273 = vmul.f32 %v252, 1.442695
      %v274 = vpow.pop %v273
      %v275 = vmul.f32 %v253, 1.442695
      %v276 = vpow.pop %v275
      %v277 = vmul.f32 %v254, 1.442695
      %v278 = vpow.pop %v277
      %v279 = vmul.f32 %v255, 1.442695
      %v280 = vpow.pop %v279
      %v281 = vmul.f32 %v256, 1.442695
      %v282 = vpow.pop %v281
      %v283 = vsel %vm203, %v258, 0.0
      %284 = vadd.xlane.f32.xlu0 %v283
      %v285 = vpop.xlane.xlu0 %284
      %v286 = vsel %vm203, %v260, 0.0
      %287 = vadd.xlane.f32.xlu0 %v286
      %v288 = vpop.xlane.xlu0 %287
      %v289 = vsel %vm203, %v262, 0.0
      %290 = vadd.xlane.f32.xlu0 %v289
      %v291 = vpop.xlane.xlu0 %290
      %v292 = vsel %vm203, %v264, 0.0
      %293 = vadd.xlane.f32.xlu0 %v292
      %v294 = vpop.xlane.xlu0 %293
      %v295 = vsel %vm203, %v266, 0.0
      %296 = vadd.xlane.f32.xlu0 %v295
      %v297 = vpop.xlane.xlu0 %296
      %v298 = vsel %vm203, %v268, 0.0
      %299 = vadd.xlane.f32.xlu0 %v298
      %v300 = vpop.xlane.xlu0 %299
      %v301 = vsel %vm203, %v270, 0.0
      %302 = vadd.xlane.f32.xlu0 %v301
      %v303 = vpop.xlane.xlu0 %302
      %v304 = vsel %vm203, %v272, 0.0
      %305 = vadd.xlane.f32.xlu0 %v304
      %v306 = vpop.xlane.xlu0 %305
      %v307 = vsel %vm203, %v274, 0.0
      %308 = vadd.xlane.f32.xlu0 %v307
      %v309 = vpop.xlane.xlu0 %308
      %v310 = vsel %vm203, %v276, 0.0
      %311 = vadd.xlane.f32.xlu0 %v310
      %v312 = vpop.xlane.xlu0 %311
      %v313 = vsel %vm203, %v278, 0.0
      %314 = vadd.xlane.f32.xlu0 %v313
      %v315 = vpop.xlane.xlu0 %314
      %v316 = vsel %vm203, %v280, 0.0
      %317 = vadd.xlane.f32.xlu0 %v316
      %v318 = vpop.xlane.xlu0 %317
      %v319 = vsel %vm240, %v282, 0.0
      %320 = vadd.xlane.f32.xlu0 %v319
      %v321 = vpop.xlane.xlu0 %320
      %v322 = vrcp.pop %v285
      %v323 = vrcp.pop %v288
      %v324 = vrcp.pop %v291
      %v325 = vrcp.pop %v294
      %v326 = vrcp.pop %v297
      %v327 = vrcp.pop %v300
      %v328 = vrcp.pop %v303
      %v329 = vrcp.pop %v306
      %v330 = vrcp.pop %v309
      %v331 = vrcp.pop %v312
      %v332 = vrcp.pop %v315
      %v333 = vrcp.pop %v318
      %v334 = vrcp.pop %v321
      %v335 = vmul.f32 %v258, %v322
      %v336 = vmul.f32 %v260, %v323
      %v337 = vmul.f32 %v262, %v324
      %v338 = vmul.f32 %v264, %v325
      %v339 = vmul.f32 %v266, %v326
      %v340 = vmul.f32 %v268, %v327
      %v341 = vmul.f32 %v270, %v328
      %v342 = vmul.f32 %v272, %v329
      %v343 = vmul.f32 %v274, %v330
      %v344 = vmul.f32 %v276, %v331
      %v345 = vmul.f32 %v278, %v332
      %v346 = vmul.f32 %v280, %v333
      %v347 = vmul.f32 %v282, %v334
      %v348 = vld [vmem:[%s158] sm:$0xff]
      %v349 = vld [vmem:[%s158 + $0x8] sm:$0xff]
      %v350 = vld [vmem:[%s158 + $0x10] sm:$0xff]
      %v351 = vld [vmem:[%s158 + $0x18] sm:$0xff]
      %v352 = vld [vmem:[%s158 + $0x20] sm:$0xff]
      %v353 = vld [vmem:[%s158 + $0x28] sm:$0xff]
      %v354 = vld [vmem:[%s158 + $0x30] sm:$0xff]
      %v355 = vld [vmem:[%s158 + $0x38] sm:$0xff]
      %v356 = vld [vmem:[%s158 + $0x40] sm:$0xff]
      %v357 = vld [vmem:[%s158 + $0x48] sm:$0xff]
      %v358 = vld [vmem:[%s158 + $0x50] sm:$0xff]
      %v359 = vld [vmem:[%s158 + $0x58] sm:$0xff]
      %v360 = vld [vmem:[%s158 + $0x60] sm:$0xf]
      %v362 = vsel %vm203, %v335, 0
      %v365 = vsel %vm203, %v336, 0
      %v368 = vsel %vm203, %v337, 0
      %v371 = vsel %vm203, %v338, 0
      %v374 = vsel %vm203, %v339, 0
      %v377 = vsel %vm203, %v340, 0
      %v380 = vsel %vm203, %v341, 0
      %v383 = vsel %vm203, %v342, 0
      %v386 = vsel %vm203, %v343, 0
      %v389 = vsel %vm203, %v344, 0
      %v392 = vsel %vm203, %v345, 0
      %v395 = vsel %vm203, %v346, 0
      %v398 = vsel %vm203, %v347, 0
      %vm400 = vcmask 1043456
      %v402 = vsel %vm400, %v360, 0
      %404 = vmatprep.subr.mxu0 0.0
      %405 = vmatpush1.msra.mxu0 0.0
      %406 = vmatprep.subr.mxu0 0.0
      %407 = vmatpush1.msra.mxu0 0.0
      %408 = vmatprep.subr.mxu0 0.0
      %409 = vmatpush1.msra.mxu0 0.0
      %410 = vmatprep.subr.mxu0 0.0
      %411 = vmatpush1.msra.mxu0 %v402
      %412 = vmatprep.subr.mxu0 0.0
      %413 = vmatpush1.msra.mxu0 %v359
      %414 = vmatprep.subr.mxu0 0.0
      %415 = vmatpush1.msra.mxu0 %v358
      %416 = vmatprep.subr.mxu0 0.0
      %417 = vmatpush1.msra.mxu0 %v357
      %418 = vmatprep.subr.mxu0 0.0
      %419 = vmatpush1.msra.mxu0 %v356
      %420 = vmatprep.subr.mxu0 0.0
      %421 = vmatpush1.msra.mxu0 %v355
      %422 = vmatprep.subr.mxu0 0.0
      %423 = vmatpush1.msra.mxu0 %v354
      %424 = vmatprep.subr.mxu0 0.0
      %425 = vmatpush1.msra.mxu0 %v353
      %426 = vmatprep.subr.mxu0 0.0
      %427 = vmatpush1.msra.mxu0 %v352
      %428 = vmatprep.subr.mxu0 0.0
      %429 = vmatpush1.msra.mxu0 %v351
      %430 = vmatprep.subr.mxu0 0.0
      %431 = vmatpush1.msra.mxu0 %v350
      %432 = vmatprep.subr.mxu0 0.0
      %433 = vmatpush1.msra.mxu0 %v349
      %434 = vmatprep.subr.mxu0 0.0
      %435 = vmatpush1.msra.mxu0 %v348
      %436 = vmatprep.subr.mxu0 0.0
      %437 = vmatpush2.msra.mxu0 0.0
      %438 = vmatprep.subr.mxu0 0.0
      %439 = vmatpush2.msra.mxu0 0.0
      %440 = vmatprep.subr.mxu0 0.0
      %441 = vmatpush2.msra.mxu0 0.0
      %442 = vmatprep.subr.mxu0 0.0
      %443 = vmatpush2.msra.mxu0 0.0
      %444 = vmatprep.subr.mxu0 0.0
      %445 = vmatpush2.msra.mxu0 0.0
      %446 = vmatprep.subr.mxu0 0.0
      %447 = vmatpush2.msra.mxu0 0.0
      %448 = vmatprep.subr.mxu0 0.0
      %449 = vmatpush2.msra.mxu0 0.0
      %450 = vmatprep.subr.mxu0 0.0
      %451 = vmatpush2.msra.mxu0 0.0
      %452 = vmatprep.subr.mxu0 0.0
      %453 = vmatpush2.msra.mxu0 0.0
      %454 = vmatprep.subr.mxu0 0.0
      %455 = vmatpush2.msra.mxu0 0.0
      %456 = vmatprep.subr.mxu0 0.0
      %457 = vmatpush2.msra.mxu0 0.0
      %458 = vmatprep.subr.mxu0 0.0
      %459 = vmatpush2.msra.mxu0 0.0
      %460 = vmatprep.subr.mxu0 0.0
      %461 = vmatpush2.msra.mxu0 0.0
      %462 = vmatprep.subr.mxu0 0.0
      %463 = vmatpush2.msra.mxu0 0.0
      %464 = vmatprep.subr.mxu0 0.0
      %465 = vmatpush2.msra.mxu0 0.0
      %466 = vmatprep.subr.mxu0 0.0
      %467 = vmatpush2.msra.mxu0 0.0
      %468 = vmatprep.mubr.f32.mxu0 0.0
      %469 = vmatmul.mubr.f32.gmra.mxu0 %v362
      %v470 = vpop.f32.mrf.mxu0
      %v471 = vadd.f32 0.0, %v470
      %v472 = vpop.f32.mrf.mxu0
      %473 = vmatprep.mubr.f32.mxu0 0.0
      %474 = vmatmul.mubr.f32.gmra.mxu0 %v365
      %v475 = vpop.f32.mrf.mxu0
      %v476 = vadd.f32 0.0, %v475
      %v477 = vpop.f32.mrf.mxu0
      %478 = vmatprep.mubr.f32.mxu0 0.0
      %479 = vmatmul.mubr.f32.gmra.mxu0 %v368
      %v480 = vpop.f32.mrf.mxu0
      %v481 = vadd.f32 0.0, %v480
      %v482 = vpop.f32.mrf.mxu0
      %483 = vmatprep.mubr.f32.mxu0 0.0
      %484 = vmatmul.mubr.f32.gmra.mxu0 %v371
      %v485 = vpop.f32.mrf.mxu0
      %v486 = vadd.f32 0.0, %v485
      %v487 = vpop.f32.mrf.mxu0
      %488 = vmatprep.mubr.f32.mxu0 0.0
      %489 = vmatmul.mubr.f32.gmra.mxu0 %v374
      %v490 = vpop.f32.mrf.mxu0
      %v491 = vadd.f32 0.0, %v490
      %v492 = vpop.f32.mrf.mxu0
      %493 = vmatprep.mubr.f32.mxu0 0.0
      %494 = vmatmul.mubr.f32.gmra.mxu0 %v377
      %v495 = vpop.f32.mrf.mxu0
      %v496 = vadd.f32 0.0, %v495
      %v497 = vpop.f32.mrf.mxu0
      %498 = vmatprep.mubr.f32.mxu0 0.0
      %499 = vmatmul.mubr.f32.gmra.mxu0 %v380
      %v500 = vpop.f32.mrf.mxu0
      %v501 = vadd.f32 0.0, %v500
      %v502 = vpop.f32.mrf.mxu0
      %503 = vmatprep.mubr.f32.mxu0 0.0
      %504 = vmatmul.mubr.f32.gmra.mxu0 %v383
      %v505 = vpop.f32.mrf.mxu0
      %v506 = vadd.f32 0.0, %v505
      %v507 = vpop.f32.mrf.mxu0
      %508 = vmatprep.mubr.f32.mxu0 0.0
      %509 = vmatmul.mubr.f32.gmra.mxu0 %v386
      %v510 = vpop.f32.mrf.mxu0
      %v511 = vadd.f32 0.0, %v510
      %v512 = vpop.f32.mrf.mxu0
      %513 = vmatprep.mubr.f32.mxu0 0.0
      %514 = vmatmul.mubr.f32.gmra.mxu0 %v389
      %v515 = vpop.f32.mrf.mxu0
      %v516 = vadd.f32 0.0, %v515
      %v517 = vpop.f32.mrf.mxu0
      %518 = vmatprep.mubr.f32.mxu0 0.0
      %519 = vmatmul.mubr.f32.gmra.mxu0 %v392
      %v520 = vpop.f32.mrf.mxu0
      %v521 = vadd.f32 0.0, %v520
      %v522 = vpop.f32.mrf.mxu0
      %523 = vmatprep.mubr.f32.mxu0 0.0
      %524 = vmatmul.mubr.f32.gmra.mxu0 %v395
      %v525 = vpop.f32.mrf.mxu0
      %v526 = vadd.f32 0.0, %v525
      %v527 = vpop.f32.mrf.mxu0
      %528 = vmatprep.mubr.f32.mxu0 0.0
      %529 = vmatmul.mubr.f32.gmra.mxu0 %v398
      %v530 = vpop.f32.mrf.mxu0
      %v531 = vadd.f32 0.0, %v530
      %v532 = vpop.f32.mrf.mxu0
      %533 = vdwg.mxu0
      %vm534 = vcmask 261120
      %535 = vst.msk [vmem:[%s163] sm:$0xff] %vm534, %v471
      %536 = vst.msk [vmem:[%s163 + $0x8] sm:$0xff] %vm534, %v476
      %537 = vst.msk [vmem:[%s163 + $0x10] sm:$0xff] %vm534, %v481
      %538 = vst.msk [vmem:[%s163 + $0x18] sm:$0xff] %vm534, %v486
      %539 = vst.msk [vmem:[%s163 + $0x20] sm:$0xff] %vm534, %v491
      %540 = vst.msk [vmem:[%s163 + $0x28] sm:$0xff] %vm534, %v496
      %541 = vst.msk [vmem:[%s163 + $0x30] sm:$0xff] %vm534, %v501
      %542 = vst.msk [vmem:[%s163 + $0x38] sm:$0xff] %vm534, %v506
      %543 = vst.msk [vmem:[%s163 + $0x40] sm:$0xff] %vm534, %v511
      %544 = vst.msk [vmem:[%s163 + $0x48] sm:$0xff] %vm534, %v516
      %545 = vst.msk [vmem:[%s163 + $0x50] sm:$0xff] %vm534, %v521
      %546 = vst.msk [vmem:[%s163 + $0x58] sm:$0xff] %vm534, %v526
      %vm547 = vcmask 257024
      %548 = vst.msk [vmem:[%s163 + $0x60] sm:$0xf] %vm547, %v531
      %p549 = scmp.lt.s32.totalorder %s13, 1
      %s550 = scalar_select %p549, %s13, 1
      %s551 = smul.addr %s550, 13
      %s552 = smul.addr %s551, 8
      %s553 = scalar_lea.vmem %s2, %s552
      // Predicated region
      $region29: #{transformer_encoder_forward.15} parent=27 // pred_check
        %p554 = pneg %p83
      $region30: #{transformer_encoder_forward.15} parent=27 // pred_check_branch
        %556 = sbr.rel (%p554) target = $region32
      $region31: #{transformer_encoder_forward.15} parent=27 // pred_region
        _
      $region32: #{transformer_encoder_forward.15} parent=27 // pred_fallthru
        _
    $region28: #{transformer_encoder_forward.15} parent=5 // pred_fallthru
      _
    %p557 = scmp.le.s32.totalorder 2, %s8
    // Predicated region
    $region33: #{transformer_encoder_forward.15} parent=5 // pred_check
      %p558 = pneg %p557
    $region34: #{transformer_encoder_forward.15} parent=5 // pred_check_branch
      %560 = sbr.rel (%p558) target = $region36
    $region35: #{transformer_encoder_forward.15} parent=5 // pred_region
      %s561 = ssub.s32 %s8, 2
      // Predicated region
      $region37: #{transformer_encoder_forward.15} parent=35 // pred_check
        %p562 = pneg %p89
      $region38: #{transformer_encoder_forward.15} parent=35 // pred_check_branch
        %564 = sbr.rel (%p562) target = $region40
      $region39: #{transformer_encoder_forward.15} parent=35 // pred_region
        %p565 = scmp.lt.s32.totalorder %s14, 1
        %s566 = scalar_select %p565, %s14, 1
        %s567 = smul.addr %s566, 13
        %s568 = smul.addr %s567, 8
        %s569 = scalar_lea.vmem %s2, %s568
      $region40: #{transformer_encoder_forward.15} parent=35 // pred_fallthru
        _
    $region36: #{transformer_encoder_forward.15} parent=5 // pred_fallthru
      _
  $region6: #{transformer_encoder_forward.15} parent=0 // loop_footer
    %s12 = sadd.s32 1, %s8
  $region7: #{transformer_encoder_forward.15} parent=0 // loop_footer_branch
    %7 = sbr.rel target = $region3
  $region8: #{transformer_encoder_forward.15} parent=0 // loop_exit
    _

// kernel: transformer_encoder_forward.17
$region0: #{transformer_encoder_forward.17}
  #allocation0 [shape = 'u32[]', space=smem, size = 0x4, offset = 0x4, fixed_abs, tag = 'smem constant byte address 0x4 - core index']
  #allocation1 [shape = 'u32[144,128]{1,0:T(1,128)}', space=vmem, size = 0x12000, scoped, tag = 'internal scratch']
  %s0 = inlined_call_operand.vmem [shape: f32[200,128], index: 0, kind: input, shape index: {}]
  %s1 = inlined_call_operand.vmem [shape: f32[200,128], index: 1, kind: input, shape index: {}]
  %s2 = inlined_call_operand.vmem [shape: f32[1,128], index: 2, kind: input, shape index: {}]
  %s3 = inlined_call_operand.vmem [shape: f32[1,128], index: 3, kind: input, shape index: {}]
  %s4 = inlined_call_operand.vmem [shape: f32[200,128], index: 4, kind: output, shape index: {}]
  %s5 = sld [smem:[#allocation0]]
  $region26: #{transformer_encoder_forward.17} parent=0
    _
  %s7 = ssub.s32 1, %s5
  %s8 = scalar_select 0, %s7, %s5
  // Predicated region
  $region2: #{transformer_encoder_forward.17} parent=0 // pred_check
    _
  $region3: #{transformer_encoder_forward.17} parent=0 // pred_check_branch
    %10 = sbr.rel (0) target = $region5
  $region4: #{transformer_encoder_forward.17} parent=0 // pred_region
    _
  $region5: #{transformer_encoder_forward.17} parent=0 // pred_fallthru
    _
  // Predicated region
  $region6: #{transformer_encoder_forward.17} parent=0 // pred_check
    _
  $region7: #{transformer_encoder_forward.17} parent=0 // pred_check_branch
    %12 = sbr.rel (0) target = $region9
  $region8: #{transformer_encoder_forward.17} parent=0 // pred_region
    _
  $region9: #{transformer_encoder_forward.17} parent=0 // pred_fallthru
    _
  // Predicated region
  $region10: #{transformer_encoder_forward.17} parent=0 // pred_check
    _
  $region11: #{transformer_encoder_forward.17} parent=0 // pred_check_branch
    %14 = sbr.rel (0) target = $region13
  $region12: #{transformer_encoder_forward.17} parent=0 // pred_region
    _
  $region13: #{transformer_encoder_forward.17} parent=0 // pred_fallthru
    _
  // Predicated region
  $region14: #{transformer_encoder_forward.17} parent=0 // pred_check
    _
  $region15: #{transformer_encoder_forward.17} parent=0 // pred_check_branch
    %16 = sbr.rel (0) target = $region17
  $region16: #{transformer_encoder_forward.17} parent=0 // pred_region
    _
  $region17: #{transformer_encoder_forward.17} parent=0 // pred_fallthru
    _
  %v17 = vld [vmem:[%s0] sm:$0xff]
  %v18 = vld [vmem:[%s0 + $0x8] sm:$0xff]
  %v19 = vld [vmem:[%s0 + $0x10] sm:$0xff]
  %v20 = vld [vmem:[%s0 + $0x18] sm:$0xff]
  %v21 = vld [vmem:[%s0 + $0x20] sm:$0xff]
  %v22 = vld [vmem:[%s0 + $0x28] sm:$0xff]
  %v23 = vld [vmem:[%s0 + $0x30] sm:$0xff]
  %v24 = vld [vmem:[%s0 + $0x38] sm:$0xff]
  %v25 = vld [vmem:[%s0 + $0x40] sm:$0xff]
  %v26 = vld [vmem:[%s0 + $0x48] sm:$0xff]
  %v27 = vld [vmem:[%s0 + $0x50] sm:$0xff]
  %v28 = vld [vmem:[%s0 + $0x58] sm:$0xff]
  %v29 = vld [vmem:[%s0 + $0x60] sm:$0xff]
  %v30 = vld [vmem:[%s0 + $0x68] sm:$0xff]
  %v31 = vld [vmem:[%s0 + $0x70] sm:$0xff]
  %v32 = vld [vmem:[%s0 + $0x78] sm:$0xff]
  %v33 = vld [vmem:[%s0 + $0x80] sm:$0xff]
  %v34 = vld [vmem:[%s0 + $0x88] sm:$0xff]
  %v35 = vld [vmem:[%s0 + $0x90] sm:$0xff]
  %v36 = vld [vmem:[%s0 + $0x98] sm:$0xff]
  %v37 = vld [vmem:[%s0 + $0xa0] sm:$0xff]
  %v38 = vld [vmem:[%s0 + $0xa8] sm:$0xff]
  %v39 = vld [vmem:[%s0 + $0xb0] sm:$0xff]
  %v40 = vld [vmem:[%s0 + $0xb8] sm:$0xff]
  %v41 = vld [vmem:[%s0 + $0xc0] sm:$0xff]
  %v42 = vld [vmem:[%s1] sm:$0xff]
  %v43 = vld [vmem:[%s1 + $0x8] sm:$0xff]
  %v44 = vld [vmem:[%s1 + $0x10] sm:$0xff]
  %v45 = vld [vmem:[%s1 + $0x18] sm:$0xff]
  %v46 = vld [vmem:[%s1 + $0x20] sm:$0xff]
  %v47 = vld [vmem:[%s1 + $0x28] sm:$0xff]
  %v48 = vld [vmem:[%s1 + $0x30] sm:$0xff]
  %v49 = vld [vmem:[%s1 + $0x38] sm:$0xff]
  %v50 = vld [vmem:[%s1 + $0x40] sm:$0xff]
  %v51 = vld [vmem:[%s1 + $0x48] sm:$0xff]
  %v52 = vld [vmem:[%s1 + $0x50] sm:$0xff]
  %v53 = vld [vmem:[%s1 + $0x58] sm:$0xff]
  %v54 = vld [vmem:[%s1 + $0x60] sm:$0xff]
  %v55 = vld [vmem:[%s1 + $0x68] sm:$0xff]
  %v56 = vld [vmem:[%s1 + $0x70] sm:$0xff]
  %v57 = vld [vmem:[%s1 + $0x78] sm:$0xff]
  %v58 = vld [vmem:[%s1 + $0x80] sm:$0xff]
  %v59 = vld [vmem:[%s1 + $0x88] sm:$0xff]
  %v60 = vld [vmem:[%s1 + $0x90] sm:$0xff]
  %v61 = vld [vmem:[%s1 + $0x98] sm:$0xff]
  %v62 = vld [vmem:[%s1 + $0xa0] sm:$0xff]
  %v63 = vld [vmem:[%s1 + $0xa8] sm:$0xff]
  %v64 = vld [vmem:[%s1 + $0xb0] sm:$0xff]
  %v65 = vld [vmem:[%s1 + $0xb8] sm:$0xff]
  %v66 = vld [vmem:[%s1 + $0xc0] sm:$0xff]
  %v67 = vadd.f32 %v17, %v42
  %v68 = vadd.f32 %v18, %v43
  %v69 = vadd.f32 %v19, %v44
  %v70 = vadd.f32 %v20, %v45
  %v71 = vadd.f32 %v21, %v46
  %v72 = vadd.f32 %v22, %v47
  %v73 = vadd.f32 %v23, %v48
  %v74 = vadd.f32 %v24, %v49
  %v75 = vadd.f32 %v25, %v50
  %v76 = vadd.f32 %v26, %v51
  %v77 = vadd.f32 %v27, %v52
  %v78 = vadd.f32 %v28, %v53
  %v79 = vadd.f32 %v29, %v54
  %v80 = vadd.f32 %v30, %v55
  %v81 = vadd.f32 %v31, %v56
  %v82 = vadd.f32 %v32, %v57
  %v83 = vadd.f32 %v33, %v58
  %v84 = vadd.f32 %v34, %v59
  %v85 = vadd.f32 %v35, %v60
  %v86 = vadd.f32 %v36, %v61
  %v87 = vadd.f32 %v37, %v62
  %v88 = vadd.f32 %v38, %v63
  %v89 = vadd.f32 %v39, %v64
  %v90 = vadd.f32 %v40, %v65
  %v91 = vadd.f32 %v41, %v66
  %v92 = vlaneseq
  %v93 = vand.u32 %v92, 127
  %vm94 = vcmp.lt.s32.totalorder %v93, 32
  %v95 = vsel %vm94, 1, 0
  %vm96 = vcmp.eq.s32.totalorder %v95, 1
  %v97 = vsel %vm96, %v67, 0.0
  %v98 = vsel %vm96, %v68, 0.0
  %v99 = vsel %vm96, %v69, 0.0
  %v100 = vsel %vm96, %v70, 0.0
  %v101 = vsel %vm96, %v71, 0.0
  %v102 = vsel %vm96, %v72, 0.0
  %v103 = vsel %vm96, %v73, 0.0
  %v104 = vsel %vm96, %v74, 0.0
  %v105 = vsel %vm96, %v75, 0.0
  %v106 = vsel %vm96, %v76, 0.0
  %v107 = vsel %vm96, %v77, 0.0
  %v108 = vsel %vm96, %v78, 0.0
  %v109 = vsel %vm96, %v79, 0.0
  %v110 = vsel %vm96, %v80, 0.0
  %v111 = vsel %vm96, %v81, 0.0
  %v112 = vsel %vm96, %v82, 0.0
  %v113 = vsel %vm96, %v83, 0.0
  %v114 = vsel %vm96, %v84, 0.0
  %v115 = vsel %vm96, %v85, 0.0
  %v116 = vsel %vm96, %v86, 0.0
  %v117 = vsel %vm96, %v87, 0.0
  %v118 = vsel %vm96, %v88, 0.0
  %v119 = vsel %vm96, %v89, 0.0
  %v120 = vsel %vm96, %v90, 0.0
  %v121 = vsel %vm96, %v91, 0.0
  %122 = vadd.xlane.f32.xlu0 %v97
  %v123 = vpop.xlane.xlu0 %122
  %124 = vadd.xlane.f32.xlu0 %v98
  %v125 = vpop.xlane.xlu0 %124
  %126 = vadd.xlane.f32.xlu0 %v99
  %v127 = vpop.xlane.xlu0 %126
  %128 = vadd.xlane.f32.xlu0 %v100
  %v129 = vpop.xlane.xlu0 %128
  %130 = vadd.xlane.f32.xlu0 %v101
  %v131 = vpop.xlane.xlu0 %130
  %132 = vadd.xlane.f32.xlu0 %v102
  %v133 = vpop.xlane.xlu0 %132
  %134 = vadd.xlane.f32.xlu0 %v103
  %v135 = vpop.xlane.xlu0 %134
  %136 = vadd.xlane.f32.xlu0 %v104
  %v137 = vpop.xlane.xlu0 %136
  %138 = vadd.xlane.f32.xlu0 %v105
  %v139 = vpop.xlane.xlu0 %138
  %140 = vadd.xlane.f32.xlu0 %v106
  %v141 = vpop.xlane.xlu0 %140
  %142 = vadd.xlane.f32.xlu0 %v107
  %v143 = vpop.xlane.xlu0 %142
  %144 = vadd.xlane.f32.xlu0 %v108
  %v145 = vpop.xlane.xlu0 %144
  %146 = vadd.xlane.f32.xlu0 %v109
  %v147 = vpop.xlane.xlu0 %146
  %148 = vadd.xlane.f32.xlu0 %v110
  %v149 = vpop.xlane.xlu0 %148
  %150 = vadd.xlane.f32.xlu0 %v111
  %v151 = vpop.xlane.xlu0 %150
  %152 = vadd.xlane.f32.xlu0 %v112
  %v153 = vpop.xlane.xlu0 %152
  %154 = vadd.xlane.f32.xlu0 %v113
  %v155 = vpop.xlane.xlu0 %154
  %156 = vadd.xlane.f32.xlu0 %v114
  %v157 = vpop.xlane.xlu0 %156
  %158 = vadd.xlane.f32.xlu0 %v115
  %v159 = vpop.xlane.xlu0 %158
  %160 = vadd.xlane.f32.xlu0 %v116
  %v161 = vpop.xlane.xlu0 %160
  %162 = vadd.xlane.f32.xlu0 %v117
  %v163 = vpop.xlane.xlu0 %162
  %164 = vadd.xlane.f32.xlu0 %v118
  %v165 = vpop.xlane.xlu0 %164
  %166 = vadd.xlane.f32.xlu0 %v119
  %v167 = vpop.xlane.xlu0 %166
  %168 = vadd.xlane.f32.xlu0 %v120
  %v169 = vpop.xlane.xlu0 %168
  %170 = vadd.xlane.f32.xlu0 %v121
  %v171 = vpop.xlane.xlu0 %170
  %v172 = vmul.f32 %v123, 0.03125
  %v173 = vmul.f32 %v125, 0.03125
  %v174 = vmul.f32 %v127, 0.03125
  %v175 = vmul.f32 %v129, 0.03125
  %v176 = vmul.f32 %v131, 0.03125
  %v177 = vmul.f32 %v133, 0.03125
  %v178 = vmul.f32 %v135, 0.03125
  %v179 = vmul.f32 %v137, 0.03125
  %v180 = vmul.f32 %v139, 0.03125
  %v181 = vmul.f32 %v141, 0.03125
  %v182 = vmul.f32 %v143, 0.03125
  %v183 = vmul.f32 %v145, 0.03125
  %v184 = vmul.f32 %v147, 0.03125
  %v185 = vmul.f32 %v149, 0.03125
  %v186 = vmul.f32 %v151, 0.03125
  %v187 = vmul.f32 %v153, 0.03125
  %v188 = vmul.f32 %v155, 0.03125
  %v189 = vmul.f32 %v157, 0.03125
  %v190 = vmul.f32 %v159, 0.03125
  %v191 = vmul.f32 %v161, 0.03125
  %v192 = vmul.f32 %v163, 0.03125
  %v193 = vmul.f32 %v165, 0.03125
  %v194 = vmul.f32 %v167, 0.03125
  %v195 = vmul.f32 %v169, 0.03125
  %v196 = vmul.f32 %v171, 0.03125
  %v197 = vsub.f32 %v97, %v172
  %v198 = vsub.f32 %v98, %v173
  %v199 = vsub.f32 %v99, %v174
  %v200 = vsub.f32 %v100, %v175
  %v201 = vsub.f32 %v101, %v176
  %v202 = vsub.f32 %v102, %v177
  %v203 = vsub.f32 %v103, %v178
  %v204 = vsub.f32 %v104, %v179
  %v205 = vsub.f32 %v105, %v180
  %v206 = vsub.f32 %v106, %v181
  %v207 = vsub.f32 %v107, %v182
  %v208 = vsub.f32 %v108, %v183
  %v209 = vsub.f32 %v109, %v184
  %v210 = vsub.f32 %v110, %v185
  %v211 = vsub.f32 %v111, %v186
  %v212 = vsub.f32 %v112, %v187
  %v213 = vsub.f32 %v113, %v188
  %v214 = vsub.f32 %v114, %v189
  %v215 = vsub.f32 %v115, %v190
  %v216 = vsub.f32 %v116, %v191
  %v217 = vsub.f32 %v117, %v192
  %v218 = vsub.f32 %v118, %v193
  %v219 = vsub.f32 %v119, %v194
  %v220 = vsub.f32 %v120, %v195
  %v221 = vsub.f32 %v121, %v196
  %v222 = vsel %vm96, %v197, 0.0
  %v223 = vsel %vm96, %v198, 0.0
  %v224 = vsel %vm96, %v199, 0.0
  %v225 = vsel %vm96, %v200, 0.0
  %v226 = vsel %vm96, %v201, 0.0
  %v227 = vsel %vm96, %v202, 0.0
  %v228 = vsel %vm96, %v203, 0.0
  %v229 = vsel %vm96, %v204, 0.0
  %v230 = vsel %vm96, %v205, 0.0
  %v231 = vsel %vm96, %v206, 0.0
  %v232 = vsel %vm96, %v207, 0.0
  %v233 = vsel %vm96, %v208, 0.0
  %v234 = vsel %vm96, %v209, 0.0
  %v235 = vsel %vm96, %v210, 0.0
  %v236 = vsel %vm96, %v211, 0.0
  %v237 = vsel %vm96, %v212, 0.0
  %v238 = vsel %vm96, %v213, 0.0
  %v239 = vsel %vm96, %v214, 0.0
  %v240 = vsel %vm96, %v215, 0.0
  %v241 = vsel %vm96, %v216, 0.0
  %v242 = vsel %vm96, %v217, 0.0
  %v243 = vsel %vm96, %v218, 0.0
  %v244 = vsel %vm96, %v219, 0.0
  %v245 = vsel %vm96, %v220, 0.0
  %v246 = vsel %vm96, %v221, 0.0
  %v247 = vmul.f32 %v222, %v222
  %v248 = vmul.f32 %v223, %v223
  %v249 = vmul.f32 %v224, %v224
  %v250 = vmul.f32 %v225, %v225
  %v251 = vmul.f32 %v226, %v226
  %v252 = vmul.f32 %v227, %v227
  %v253 = vmul.f32 %v228, %v228
  %v254 = vmul.f32 %v229, %v229
  %v255 = vmul.f32 %v230, %v230
  %v256 = vmul.f32 %v231, %v231
  %v257 = vmul.f32 %v232, %v232
  %v258 = vmul.f32 %v233, %v233
  %v259 = vmul.f32 %v234, %v234
  %v260 = vmul.f32 %v235, %v235
  %v261 = vmul.f32 %v236, %v236
  %v262 = vmul.f32 %v237, %v237
  %v263 = vmul.f32 %v238, %v238
  %v264 = vmul.f32 %v239, %v239
  %v265 = vmul.f32 %v240, %v240
  %v266 = vmul.f32 %v241, %v241
  %v267 = vmul.f32 %v242, %v242
  %v268 = vmul.f32 %v243, %v243
  %v269 = vmul.f32 %v244, %v244
  %v270 = vmul.f32 %v245, %v245
  %v271 = vmul.f32 %v246, %v246
  %272 = vadd.xlane.f32.xlu0 %v247
  %v273 = vpop.xlane.xlu0 %272
  %274 = vadd.xlane.f32.xlu0 %v248
  %v275 = vpop.xlane.xlu0 %274
  %276 = vadd.xlane.f32.xlu0 %v249
  %v277 = vpop.xlane.xlu0 %276
  %278 = vadd.xlane.f32.xlu0 %v250
  %v279 = vpop.xlane.xlu0 %278
  %280 = vadd.xlane.f32.xlu0 %v251
  %v281 = vpop.xlane.xlu0 %280
  %282 = vadd.xlane.f32.xlu0 %v252
  %v283 = vpop.xlane.xlu0 %282
  %284 = vadd.xlane.f32.xlu0 %v253
  %v285 = vpop.xlane.xlu0 %284
  %286 = vadd.xlane.f32.xlu0 %v254
  %v287 = vpop.xlane.xlu0 %286
  %288 = vadd.xlane.f32.xlu0 %v255
  %v289 = vpop.xlane.xlu0 %288
  %290 = vadd.xlane.f32.xlu0 %v256
  %v291 = vpop.xlane.xlu0 %290
  %292 = vadd.xlane.f32.xlu0 %v257
  %v293 = vpop.xlane.xlu0 %292
  %294 = vadd.xlane.f32.xlu0 %v258
  %v295 = vpop.xlane.xlu0 %294
  %296 = vadd.xlane.f32.xlu0 %v259
  %v297 = vpop.xlane.xlu0 %296
  %298 = vadd.xlane.f32.xlu0 %v260
  %v299 = vpop.xlane.xlu0 %298
  %300 = vadd.xlane.f32.xlu0 %v261
  %v301 = vpop.xlane.xlu0 %300
  %302 = vadd.xlane.f32.xlu0 %v262
  %v303 = vpop.xlane.xlu0 %302
  %304 = vadd.xlane.f32.xlu0 %v263
  %v305 = vpop.xlane.xlu0 %304
  %306 = vadd.xlane.f32.xlu0 %v264
  %v307 = vpop.xlane.xlu0 %306
  %308 = vadd.xlane.f32.xlu0 %v265
  %v309 = vpop.xlane.xlu0 %308
  %310 = vadd.xlane.f32.xlu0 %v266
  %v311 = vpop.xlane.xlu0 %310
  %312 = vadd.xlane.f32.xlu0 %v267
  %v313 = vpop.xlane.xlu0 %312
  %314 = vadd.xlane.f32.xlu0 %v268
  %v315 = vpop.xlane.xlu0 %314
  %316 = vadd.xlane.f32.xlu0 %v269
  %v317 = vpop.xlane.xlu0 %316
  %318 = vadd.xlane.f32.xlu0 %v270
  %v319 = vpop.xlane.xlu0 %318
  %320 = vadd.xlane.f32.xlu0 %v271
  %v321 = vpop.xlane.xlu0 %320
  %v322 = vmul.f32 %v273, 0.03125
  %v323 = vmul.f32 %v275, 0.03125
  %v324 = vmul.f32 %v277, 0.03125
  %v325 = vmul.f32 %v279, 0.03125
  %v326 = vmul.f32 %v281, 0.03125
  %v327 = vmul.f32 %v283, 0.03125
  %v328 = vmul.f32 %v285, 0.03125
  %v329 = vmul.f32 %v287, 0.03125
  %v330 = vmul.f32 %v289, 0.03125
  %v331 = vmul.f32 %v291, 0.03125
  %v332 = vmul.f32 %v293, 0.03125
  %v333 = vmul.f32 %v295, 0.03125
  %v334 = vmul.f32 %v297, 0.03125
  %v335 = vmul.f32 %v299, 0.03125
  %v336 = vmul.f32 %v301, 0.03125
  %v337 = vmul.f32 %v303, 0.03125
  %v338 = vmul.f32 %v305, 0.03125
  %v339 = vmul.f32 %v307, 0.03125
  %v340 = vmul.f32 %v309, 0.03125
  %v341 = vmul.f32 %v311, 0.03125
  %v342 = vmul.f32 %v313, 0.03125
  %v343 = vmul.f32 %v315, 0.03125
  %v344 = vmul.f32 %v317, 0.03125
  %v345 = vmul.f32 %v319, 0.03125
  %v346 = vmul.f32 %v321, 0.03125
  %v347 = vadd.f32 %v322, 1e-05
  %v348 = vadd.f32 %v323, 1e-05
  %v349 = vadd.f32 %v324, 1e-05
  %v350 = vadd.f32 %v325, 1e-05
  %v351 = vadd.f32 %v326, 1e-05
  %v352 = vadd.f32 %v327, 1e-05
  %v353 = vadd.f32 %v328, 1e-05
  %v354 = vadd.f32 %v329, 1e-05
  %v355 = vadd.f32 %v330, 1e-05
  %v356 = vadd.f32 %v331, 1e-05
  %v357 = vadd.f32 %v332, 1e-05
  %v358 = vadd.f32 %v333, 1e-05
  %v359 = vadd.f32 %v334, 1e-05
  %v360 = vadd.f32 %v335, 1e-05
  %v361 = vadd.f32 %v336, 1e-05
  %v362 = vadd.f32 %v337, 1e-05
  %v363 = vadd.f32 %v338, 1e-05
  %v364 = vadd.f32 %v339, 1e-05
  %v365 = vadd.f32 %v340, 1e-05
  %v366 = vadd.f32 %v341, 1e-05
  %v367 = vadd.f32 %v342, 1e-05
  %v368 = vadd.f32 %v343, 1e-05
  %v369 = vadd.f32 %v344, 1e-05
  %v370 = vadd.f32 %v345, 1e-05
  %v371 = vadd.f32 %v346, 1e-05
  %v372 = vrsqrt.pop %v347
  %v373 = vrsqrt.pop %v348
  %v374 = vrsqrt.pop %v349
  %v375 = vrsqrt.pop %v350
  %v376 = vrsqrt.pop %v351
  %v377 = vrsqrt.pop %v352
  %v378 = vrsqrt.pop %v353
  %v379 = vrsqrt.pop %v354
  %v380 = vrsqrt.pop %v355
  %v381 = vrsqrt.pop %v356
  %v382 = vrsqrt.pop %v357
  %v383 = vrsqrt.pop %v358
  %v384 = vrsqrt.pop %v359
  %v385 = vrsqrt.pop %v360
  %v386 = vrsqrt.pop %v361
  %v387 = vrsqrt.pop %v362
  %v388 = vrsqrt.pop %v363
  %v389 = vrsqrt.pop %v364
  %v390 = vrsqrt.pop %v365
  %v391 = vrsqrt.pop %v366
  %v392 = vrsqrt.pop %v367
  %v393 = vrsqrt.pop %v368
  %v394 = vrsqrt.pop %v369
  %v395 = vrsqrt.pop %v370
  %v396 = vrsqrt.pop %v371
  %v397 = vmul.f32 %v222, %v372
  %v398 = vmul.f32 %v223, %v373
  %v399 = vmul.f32 %v224, %v374
  %v400 = vmul.f32 %v225, %v375
  %v401 = vmul.f32 %v226, %v376
  %v402 = vmul.f32 %v227, %v377
  %v403 = vmul.f32 %v228, %v378
  %v404 = vmul.f32 %v229, %v379
  %v405 = vmul.f32 %v230, %v380
  %v406 = vmul.f32 %v231, %v381
  %v407 = vmul.f32 %v232, %v382
  %v408 = vmul.f32 %v233, %v383
  %v409 = vmul.f32 %v234, %v384
  %v410 = vmul.f32 %v235, %v385
  %v411 = vmul.f32 %v236, %v386
  %v412 = vmul.f32 %v237, %v387
  %v413 = vmul.f32 %v238, %v388
  %v414 = vmul.f32 %v239, %v389
  %v415 = vmul.f32 %v240, %v390
  %v416 = vmul.f32 %v241, %v391
  %v417 = vmul.f32 %v242, %v392
  %v418 = vmul.f32 %v243, %v393
  %v419 = vmul.f32 %v244, %v394
  %v420 = vmul.f32 %v245, %v395
  %v421 = vmul.f32 %v246, %v396
  %v422 = vld [vmem:[%s2] sm:$0x1]
  %v424 = vlaneseq
  %v425 = vshrl.u32 %v424, 7
  %v426 = vsub.s32 0, %v425
  %v427 = vrot.slane %v422, %v426
  %v429 = vmul.f32 %v397, %v427
  %v430 = vmul.f32 %v398, %v427
  %v431 = vmul.f32 %v399, %v427
  %v432 = vmul.f32 %v400, %v427
  %v433 = vmul.f32 %v401, %v427
  %v434 = vmul.f32 %v402, %v427
  %v435 = vmul.f32 %v403, %v427
  %v436 = vmul.f32 %v404, %v427
  %v437 = vmul.f32 %v405, %v427
  %v438 = vmul.f32 %v406, %v427
  %v439 = vmul.f32 %v407, %v427
  %v440 = vmul.f32 %v408, %v427
  %v441 = vmul.f32 %v409, %v427
  %v442 = vmul.f32 %v410, %v427
  %v443 = vmul.f32 %v411, %v427
  %v444 = vmul.f32 %v412, %v427
  %v445 = vmul.f32 %v413, %v427
  %v446 = vmul.f32 %v414, %v427
  %v447 = vmul.f32 %v415, %v427
  %v448 = vmul.f32 %v416, %v427
  %v449 = vmul.f32 %v417, %v427
  %v450 = vmul.f32 %v418, %v427
  %v451 = vmul.f32 %v419, %v427
  %v452 = vmul.f32 %v420, %v427
  %v453 = vmul.f32 %v421, %v427
  %v454 = vld [vmem:[%s3] sm:$0x1]
  %v456 = vlaneseq
  %v457 = vshrl.u32 %v456, 7
  %v458 = vsub.s32 0, %v457
  %v459 = vrot.slane %v454, %v458
  %v461 = vadd.f32 %v429, %v459
  %v462 = vadd.f32 %v430, %v459
  %v463 = vadd.f32 %v431, %v459
  %v464 = vadd.f32 %v432, %v459
  %v465 = vadd.f32 %v433, %v459
  %v466 = vadd.f32 %v434, %v459
  %v467 = vadd.f32 %v435, %v459
  %v468 = vadd.f32 %v436, %v459
  %v469 = vadd.f32 %v437, %v459
  %v470 = vadd.f32 %v438, %v459
  %v471 = vadd.f32 %v439, %v459
  %v472 = vadd.f32 %v440, %v459
  %v473 = vadd.f32 %v441, %v459
  %v474 = vadd.f32 %v442, %v459
  %v475 = vadd.f32 %v443, %v459
  %v476 = vadd.f32 %v444, %v459
  %v477 = vadd.f32 %v445, %v459
  %v478 = vadd.f32 %v446, %v459
  %v479 = vadd.f32 %v447, %v459
  %v480 = vadd.f32 %v448, %v459
  %v481 = vadd.f32 %v449, %v459
  %v482 = vadd.f32 %v450, %v459
  %v483 = vadd.f32 %v451, %v459
  %v484 = vadd.f32 %v452, %v459
  %v485 = vadd.f32 %v453, %v459
  %486 = vst [vmem:[%s4] sm:$0xff] %v461
  %487 = vst [vmem:[%s4 + $0x8] sm:$0xff] %v462
  %488 = vst [vmem:[%s4 + $0x10] sm:$0xff] %v463
  %489 = vst [vmem:[%s4 + $0x18] sm:$0xff] %v464
  %490 = vst [vmem:[%s4 + $0x20] sm:$0xff] %v465
  %491 = vst [vmem:[%s4 + $0x28] sm:$0xff] %v466
  %492 = vst [vmem:[%s4 + $0x30] sm:$0xff] %v467
  %493 = vst [vmem:[%s4 + $0x38] sm:$0xff] %v468
  %494 = vst [vmem:[%s4 + $0x40] sm:$0xff] %v469
  %495 = vst [vmem:[%s4 + $0x48] sm:$0xff] %v470
  %496 = vst [vmem:[%s4 + $0x50] sm:$0xff] %v471
  %497 = vst [vmem:[%s4 + $0x58] sm:$0xff] %v472
  %498 = vst [vmem:[%s4 + $0x60] sm:$0xff] %v473
  %499 = vst [vmem:[%s4 + $0x68] sm:$0xff] %v474
  %500 = vst [vmem:[%s4 + $0x70] sm:$0xff] %v475
  %501 = vst [vmem:[%s4 + $0x78] sm:$0xff] %v476
  %502 = vst [vmem:[%s4 + $0x80] sm:$0xff] %v477
  %503 = vst [vmem:[%s4 + $0x88] sm:$0xff] %v478
  %504 = vst [vmem:[%s4 + $0x90] sm:$0xff] %v479
  %505 = vst [vmem:[%s4 + $0x98] sm:$0xff] %v480
  %506 = vst [vmem:[%s4 + $0xa0] sm:$0xff] %v481
  %507 = vst [vmem:[%s4 + $0xa8] sm:$0xff] %v482
  %508 = vst [vmem:[%s4 + $0xb0] sm:$0xff] %v483
  %509 = vst [vmem:[%s4 + $0xb8] sm:$0xff] %v484
  %510 = vst [vmem:[%s4 + $0xc0] sm:$0xff] %v485
  // Predicated region
  $region18: #{transformer_encoder_forward.17} parent=0 // pred_check
    _
  $region19: #{transformer_encoder_forward.17} parent=0 // pred_check_branch
    %512 = sbr.rel (0) target = $region21
  $region20: #{transformer_encoder_forward.17} parent=0 // pred_region
    _
  $region21: #{transformer_encoder_forward.17} parent=0 // pred_fallthru
    _
  // Predicated region
  $region22: #{transformer_encoder_forward.17} parent=0 // pred_check
    _
  $region23: #{transformer_encoder_forward.17} parent=0 // pred_check_branch
    %514 = sbr.rel (0) target = $region25
  $region24: #{transformer_encoder_forward.17} parent=0 // pred_region
    _
  $region25: #{transformer_encoder_forward.17} parent=0 // pred_fallthru
    _

// kernel: transformer_encoder_forward.18
$region0: #{transformer_encoder_forward.18}
  #allocation0 [shape = 'u32[]', space=smem, size = 0x4, offset = 0x4, fixed_abs, tag = 'smem constant byte address 0x4 - core index']
  #allocation1 [shape = 'u32[144,128]{1,0:T(1,128)}', space=vmem, size = 0x12000, scoped, tag = 'internal scratch']
  %s0 = inlined_call_operand.vmem [shape: f32[200,32], index: 0, kind: input, shape index: {}]
  %s1 = inlined_call_operand.vmem [shape: f32[32,256], index: 1, kind: input, shape index: {}]
  %s2 = inlined_call_operand.vmem [shape: f32[1,256], index: 2, kind: input, shape index: {}]
  %s3 = inlined_call_operand.vmem [shape: f32[200,256], index: 3, kind: output, shape index: {}]
  %s4 = sld [smem:[#allocation0]]
  $region22: #{transformer_encoder_forward.18} parent=0
    _
  %s6 = ssub.s32 1, %s4
  %s7 = scalar_select 0, %s6, %s4
  // Predicated region
  $region2: #{transformer_encoder_forward.18} parent=0 // pred_check
    _
  $region3: #{transformer_encoder_forward.18} parent=0 // pred_check_branch
    %9 = sbr.rel (0) target = $region5
  $region4: #{transformer_encoder_forward.18} parent=0 // pred_region
    _
  $region5: #{transformer_encoder_forward.18} parent=0 // pred_fallthru
    _
  // Predicated region
  $region6: #{transformer_encoder_forward.18} parent=0 // pred_check
    _
  $region7: #{transformer_encoder_forward.18} parent=0 // pred_check_branch
    %11 = sbr.rel (0) target = $region9
  $region8: #{transformer_encoder_forward.18} parent=0 // pred_region
    _
  $region9: #{transformer_encoder_forward.18} parent=0 // pred_fallthru
    _
  // Predicated region
  $region10: #{transformer_encoder_forward.18} parent=0 // pred_check
    _
  $region11: #{transformer_encoder_forward.18} parent=0 // pred_check_branch
    %13 = sbr.rel (0) target = $region13
  $region12: #{transformer_encoder_forward.18} parent=0 // pred_region
    _
  $region13: #{transformer_encoder_forward.18} parent=0 // pred_fallthru
    _
  %v14 = vld [vmem:[%s0] sm:$0xff]
  %v15 = vld [vmem:[%s0 + $0x8] sm:$0xff]
  %v16 = vld [vmem:[%s0 + $0x10] sm:$0xff]
  %v17 = vld [vmem:[%s0 + $0x18] sm:$0xff]
  %v18 = vld [vmem:[%s0 + $0x20] sm:$0xff]
  %v19 = vld [vmem:[%s0 + $0x28] sm:$0xff]
  %v20 = vld [vmem:[%s0 + $0x30] sm:$0xff]
  %v21 = vld [vmem:[%s0 + $0x38] sm:$0xff]
  %v22 = vld [vmem:[%s0 + $0x40] sm:$0xff]
  %v23 = vld [vmem:[%s0 + $0x48] sm:$0xff]
  %v24 = vld [vmem:[%s0 + $0x50] sm:$0xff]
  %v25 = vld [vmem:[%s0 + $0x58] sm:$0xff]
  %v26 = vld [vmem:[%s0 + $0x60] sm:$0xff]
  %v27 = vld [vmem:[%s0 + $0x68] sm:$0xff]
  %v28 = vld [vmem:[%s0 + $0x70] sm:$0xff]
  %v29 = vld [vmem:[%s0 + $0x78] sm:$0xff]
  %v30 = vld [vmem:[%s0 + $0x80] sm:$0xff]
  %v31 = vld [vmem:[%s0 + $0x88] sm:$0xff]
  %v32 = vld [vmem:[%s0 + $0x90] sm:$0xff]
  %v33 = vld [vmem:[%s0 + $0x98] sm:$0xff]
  %v34 = vld [vmem:[%s0 + $0xa0] sm:$0xff]
  %v35 = vld [vmem:[%s0 + $0xa8] sm:$0xff]
  %v36 = vld [vmem:[%s0 + $0xb0] sm:$0xff]
  %v37 = vld [vmem:[%s0 + $0xb8] sm:$0xff]
  %v38 = vld [vmem:[%s0 + $0xc0] sm:$0xff]
  %v39 = vld [vmem:[%s1] sm:$0xff]
  %v40 = vld [vmem:[%s1 + $0x8] sm:$0xff]
  %v41 = vld [vmem:[%s1 + $0x10] sm:$0xff]
  %v42 = vld [vmem:[%s1 + $0x18] sm:$0xff]
  %v43 = vld [vmem:[%s1 + $0x20] sm:$0xff]
  %v44 = vld [vmem:[%s1 + $0x28] sm:$0xff]
  %v45 = vld [vmem:[%s1 + $0x30] sm:$0xff]
  %v46 = vld [vmem:[%s1 + $0x38] sm:$0xff]
  %v47 = vld [vmem:[%s2] sm:$0x3]
  %v49 = vlaneseq
  %v50 = vshrl.u32 %v49, 7
  %v51 = vsub.s32 0, %v50
  %v52 = vrot.slane %v47, %v51
  %v53 = vlaneseq
  %v54 = vshrl.u32 %v53, 7
  %v55 = vsub.s32 1, %v54
  %v56 = vrot.slane %v47, %v55
  %vm59 = vcmask 261120
  %v61 = vsel %vm59, %v14, 0
  %v64 = vsel %vm59, %v15, 0
  %v67 = vsel %vm59, %v16, 0
  %v70 = vsel %vm59, %v17, 0
  %v73 = vsel %vm59, %v18, 0
  %v76 = vsel %vm59, %v19, 0
  %v79 = vsel %vm59, %v20, 0
  %v82 = vsel %vm59, %v21, 0
  %v85 = vsel %vm59, %v22, 0
  %v88 = vsel %vm59, %v23, 0
  %v91 = vsel %vm59, %v24, 0
  %v94 = vsel %vm59, %v25, 0
  %v97 = vsel %vm59, %v26, 0
  %v100 = vsel %vm59, %v27, 0
  %v103 = vsel %vm59, %v28, 0
  %v106 = vsel %vm59, %v29, 0
  %v109 = vsel %vm59, %v30, 0
  %v112 = vsel %vm59, %v31, 0
  %v115 = vsel %vm59, %v32, 0
  %v118 = vsel %vm59, %v33, 0
  %v121 = vsel %vm59, %v34, 0
  %v124 = vsel %vm59, %v35, 0
  %v127 = vsel %vm59, %v36, 0
  %v130 = vsel %vm59, %v37, 0
  %v133 = vsel %vm59, %v38, 0
  %135 = vmatprep.subr.mxu0 0.0
  %136 = vmatpush1.msra.mxu0 0.0
  %137 = vmatprep.subr.mxu0 0.0
  %138 = vmatpush1.msra.mxu0 0.0
  %139 = vmatprep.subr.mxu0 0.0
  %140 = vmatpush1.msra.mxu0 0.0
  %141 = vmatprep.subr.mxu0 0.0
  %142 = vmatpush1.msra.mxu0 0.0
  %143 = vmatprep.subr.mxu0 0.0
  %144 = vmatpush1.msra.mxu0 0.0
  %145 = vmatprep.subr.mxu0 0.0
  %146 = vmatpush1.msra.mxu0 0.0
  %147 = vmatprep.subr.mxu0 0.0
  %148 = vmatpush1.msra.mxu0 0.0
  %149 = vmatprep.subr.mxu0 0.0
  %150 = vmatpush1.msra.mxu0 0.0
  %151 = vmatprep.subr.mxu0 0.0
  %152 = vmatpush1.msra.mxu0 0.0
  %153 = vmatprep.subr.mxu0 0.0
  %154 = vmatpush1.msra.mxu0 0.0
  %155 = vmatprep.subr.mxu0 0.0
  %156 = vmatpush1.msra.mxu0 0.0
  %157 = vmatprep.subr.mxu0 0.0
  %158 = vmatpush1.msra.mxu0 0.0
  %159 = vmatprep.subr.mxu0 %v46
  %160 = vmatpush1.msra.mxu0 %v45
  %161 = vmatprep.subr.mxu0 %v44
  %162 = vmatpush1.msra.mxu0 %v43
  %163 = vmatprep.subr.mxu0 %v42
  %164 = vmatpush1.msra.mxu0 %v41
  %165 = vmatprep.subr.mxu0 %v40
  %166 = vmatpush1.msra.mxu0 %v39
  %167 = vmatprep.subr.mxu0 0.0
  %168 = vmatpush2.msra.mxu0 0.0
  %169 = vmatprep.subr.mxu0 0.0
  %170 = vmatpush2.msra.mxu0 0.0
  %171 = vmatprep.subr.mxu0 0.0
  %172 = vmatpush2.msra.mxu0 0.0
  %173 = vmatprep.subr.mxu0 0.0
  %174 = vmatpush2.msra.mxu0 0.0
  %175 = vmatprep.subr.mxu0 0.0
  %176 = vmatpush2.msra.mxu0 0.0
  %177 = vmatprep.subr.mxu0 0.0
  %178 = vmatpush2.msra.mxu0 0.0
  %179 = vmatprep.subr.mxu0 0.0
  %180 = vmatpush2.msra.mxu0 0.0
  %181 = vmatprep.subr.mxu0 0.0
  %182 = vmatpush2.msra.mxu0 0.0
  %183 = vmatprep.subr.mxu0 0.0
  %184 = vmatpush2.msra.mxu0 0.0
  %185 = vmatprep.subr.mxu0 0.0
  %186 = vmatpush2.msra.mxu0 0.0
  %187 = vmatprep.subr.mxu0 0.0
  %188 = vmatpush2.msra.mxu0 0.0
  %189 = vmatprep.subr.mxu0 0.0
  %190 = vmatpush2.msra.mxu0 0.0
  %191 = vmatprep.subr.mxu0 0.0
  %192 = vmatpush2.msra.mxu0 0.0
  %193 = vmatprep.subr.mxu0 0.0
  %194 = vmatpush2.msra.mxu0 0.0
  %195 = vmatprep.subr.mxu0 0.0
  %196 = vmatpush2.msra.mxu0 0.0
  %197 = vmatprep.subr.mxu0 0.0
  %198 = vmatpush2.msra.mxu0 0.0
  %199 = vmatprep.mubr.f32.mxu0 0.0
  %200 = vmatmul.mubr.f32.gmra.mxu0 %v61
  %v201 = vpop.f32.mrf.mxu0
  %v202 = vadd.f32 %v52, %v201
  %v203 = vpop.f32.mrf.mxu0
  %v204 = vadd.f32 %v56, %v203
  %205 = vmatprep.mubr.f32.mxu0 0.0
  %206 = vmatmul.mubr.f32.gmra.mxu0 %v64
  %v207 = vpop.f32.mrf.mxu0
  %v208 = vadd.f32 %v52, %v207
  %v209 = vpop.f32.mrf.mxu0
  %v210 = vadd.f32 %v56, %v209
  %211 = vmatprep.mubr.f32.mxu0 0.0
  %212 = vmatmul.mubr.f32.gmra.mxu0 %v67
  %v213 = vpop.f32.mrf.mxu0
  %v214 = vadd.f32 %v52, %v213
  %v215 = vpop.f32.mrf.mxu0
  %v216 = vadd.f32 %v56, %v215
  %217 = vmatprep.mubr.f32.mxu0 0.0
  %218 = vmatmul.mubr.f32.gmra.mxu0 %v70
  %v219 = vpop.f32.mrf.mxu0
  %v220 = vadd.f32 %v52, %v219
  %v221 = vpop.f32.mrf.mxu0
  %v222 = vadd.f32 %v56, %v221
  %223 = vmatprep.mubr.f32.mxu0 0.0
  %224 = vmatmul.mubr.f32.gmra.mxu0 %v73
  %v225 = vpop.f32.mrf.mxu0
  %v226 = vadd.f32 %v52, %v225
  %v227 = vpop.f32.mrf.mxu0
  %v228 = vadd.f32 %v56, %v227
  %229 = vmatprep.mubr.f32.mxu0 0.0
  %230 = vmatmul.mubr.f32.gmra.mxu0 %v76
  %v231 = vpop.f32.mrf.mxu0
  %v232 = vadd.f32 %v52, %v231
  %v233 = vpop.f32.mrf.mxu0
  %v234 = vadd.f32 %v56, %v233
  %235 = vmatprep.mubr.f32.mxu0 0.0
  %236 = vmatmul.mubr.f32.gmra.mxu0 %v79
  %v237 = vpop.f32.mrf.mxu0
  %v238 = vadd.f32 %v52, %v237
  %v239 = vpop.f32.mrf.mxu0
  %v240 = vadd.f32 %v56, %v239
  %241 = vmatprep.mubr.f32.mxu0 0.0
  %242 = vmatmul.mubr.f32.gmra.mxu0 %v82
  %v243 = vpop.f32.mrf.mxu0
  %v244 = vadd.f32 %v52, %v243
  %v245 = vpop.f32.mrf.mxu0
  %v246 = vadd.f32 %v56, %v245
  %247 = vmatprep.mubr.f32.mxu0 0.0
  %248 = vmatmul.mubr.f32.gmra.mxu0 %v85
  %v249 = vpop.f32.mrf.mxu0
  %v250 = vadd.f32 %v52, %v249
  %v251 = vpop.f32.mrf.mxu0
  %v252 = vadd.f32 %v56, %v251
  %253 = vmatprep.mubr.f32.mxu0 0.0
  %254 = vmatmul.mubr.f32.gmra.mxu0 %v88
  %v255 = vpop.f32.mrf.mxu0
  %v256 = vadd.f32 %v52, %v255
  %v257 = vpop.f32.mrf.mxu0
  %v258 = vadd.f32 %v56, %v257
  %259 = vmatprep.mubr.f32.mxu0 0.0
  %260 = vmatmul.mubr.f32.gmra.mxu0 %v91
  %v261 = vpop.f32.mrf.mxu0
  %v262 = vadd.f32 %v52, %v261
  %v263 = vpop.f32.mrf.mxu0
  %v264 = vadd.f32 %v56, %v263
  %265 = vmatprep.mubr.f32.mxu0 0.0
  %266 = vmatmul.mubr.f32.gmra.mxu0 %v94
  %v267 = vpop.f32.mrf.mxu0
  %v268 = vadd.f32 %v52, %v267
  %v269 = vpop.f32.mrf.mxu0
  %v270 = vadd.f32 %v56, %v269
  %271 = vmatprep.mubr.f32.mxu0 0.0
  %272 = vmatmul.mubr.f32.gmra.mxu0 %v97
  %v273 = vpop.f32.mrf.mxu0
  %v274 = vadd.f32 %v52, %v273
  %v275 = vpop.f32.mrf.mxu0
  %v276 = vadd.f32 %v56, %v275
  %277 = vmatprep.mubr.f32.mxu0 0.0
  %278 = vmatmul.mubr.f32.gmra.mxu0 %v100
  %v279 = vpop.f32.mrf.mxu0
  %v280 = vadd.f32 %v52, %v279
  %v281 = vpop.f32.mrf.mxu0
  %v282 = vadd.f32 %v56, %v281
  %283 = vmatprep.mubr.f32.mxu0 0.0
  %284 = vmatmul.mubr.f32.gmra.mxu0 %v103
  %v285 = vpop.f32.mrf.mxu0
  %v286 = vadd.f32 %v52, %v285
  %v287 = vpop.f32.mrf.mxu0
  %v288 = vadd.f32 %v56, %v287
  %289 = vmatprep.mubr.f32.mxu0 0.0
  %290 = vmatmul.mubr.f32.gmra.mxu0 %v106
  %v291 = vpop.f32.mrf.mxu0
  %v292 = vadd.f32 %v52, %v291
  %v293 = vpop.f32.mrf.mxu0
  %v294 = vadd.f32 %v56, %v293
  %295 = vmatprep.mubr.f32.mxu0 0.0
  %296 = vmatmul.mubr.f32.gmra.mxu0 %v109
  %v297 = vpop.f32.mrf.mxu0
  %v298 = vadd.f32 %v52, %v297
  %v299 = vpop.f32.mrf.mxu0
  %v300 = vadd.f32 %v56, %v299
  %301 = vmatprep.mubr.f32.mxu0 0.0
  %302 = vmatmul.mubr.f32.gmra.mxu0 %v112
  %v303 = vpop.f32.mrf.mxu0
  %v304 = vadd.f32 %v52, %v303
  %v305 = vpop.f32.mrf.mxu0
  %v306 = vadd.f32 %v56, %v305
  %307 = vmatprep.mubr.f32.mxu0 0.0
  %308 = vmatmul.mubr.f32.gmra.mxu0 %v115
  %v309 = vpop.f32.mrf.mxu0
  %v310 = vadd.f32 %v52, %v309
  %v311 = vpop.f32.mrf.mxu0
  %v312 = vadd.f32 %v56, %v311
  %313 = vmatprep.mubr.f32.mxu0 0.0
  %314 = vmatmul.mubr.f32.gmra.mxu0 %v118
  %v315 = vpop.f32.mrf.mxu0
  %v316 = vadd.f32 %v52, %v315
  %v317 = vpop.f32.mrf.mxu0
  %v318 = vadd.f32 %v56, %v317
  %319 = vmatprep.mubr.f32.mxu0 0.0
  %320 = vmatmul.mubr.f32.gmra.mxu0 %v121
  %v321 = vpop.f32.mrf.mxu0
  %v322 = vadd.f32 %v52, %v321
  %v323 = vpop.f32.mrf.mxu0
  %v324 = vadd.f32 %v56, %v323
  %325 = vmatprep.mubr.f32.mxu0 0.0
  %326 = vmatmul.mubr.f32.gmra.mxu0 %v124
  %v327 = vpop.f32.mrf.mxu0
  %v328 = vadd.f32 %v52, %v327
  %v329 = vpop.f32.mrf.mxu0
  %v330 = vadd.f32 %v56, %v329
  %331 = vmatprep.mubr.f32.mxu0 0.0
  %332 = vmatmul.mubr.f32.gmra.mxu0 %v127
  %v333 = vpop.f32.mrf.mxu0
  %v334 = vadd.f32 %v52, %v333
  %v335 = vpop.f32.mrf.mxu0
  %v336 = vadd.f32 %v56, %v335
  %337 = vmatprep.mubr.f32.mxu0 0.0
  %338 = vmatmul.mubr.f32.gmra.mxu0 %v130
  %v339 = vpop.f32.mrf.mxu0
  %v340 = vadd.f32 %v52, %v339
  %v341 = vpop.f32.mrf.mxu0
  %v342 = vadd.f32 %v56, %v341
  %343 = vmatprep.mubr.f32.mxu0 0.0
  %344 = vmatmul.mubr.f32.gmra.mxu0 %v133
  %v345 = vpop.f32.mrf.mxu0
  %v346 = vadd.f32 %v52, %v345
  %v347 = vpop.f32.mrf.mxu0
  %v348 = vadd.f32 %v56, %v347
  %349 = vdwg.mxu0
  %v350 = vmax.f32 %v202, 0.0
  %v351 = vmax.f32 %v204, 0.0
  %v352 = vmax.f32 %v208, 0.0
  %v353 = vmax.f32 %v210, 0.0
  %v354 = vmax.f32 %v214, 0.0
  %v355 = vmax.f32 %v216, 0.0
  %v356 = vmax.f32 %v220, 0.0
  %v357 = vmax.f32 %v222, 0.0
  %v358 = vmax.f32 %v226, 0.0
  %v359 = vmax.f32 %v228, 0.0
  %v360 = vmax.f32 %v232, 0.0
  %v361 = vmax.f32 %v234, 0.0
  %v362 = vmax.f32 %v238, 0.0
  %v363 = vmax.f32 %v240, 0.0
  %v364 = vmax.f32 %v244, 0.0
  %v365 = vmax.f32 %v246, 0.0
  %v366 = vmax.f32 %v250, 0.0
  %v367 = vmax.f32 %v252, 0.0
  %v368 = vmax.f32 %v256, 0.0
  %v369 = vmax.f32 %v258, 0.0
  %v370 = vmax.f32 %v262, 0.0
  %v371 = vmax.f32 %v264, 0.0
  %v372 = vmax.f32 %v268, 0.0
  %v373 = vmax.f32 %v270, 0.0
  %v374 = vmax.f32 %v274, 0.0
  %v375 = vmax.f32 %v276, 0.0
  %v376 = vmax.f32 %v280, 0.0
  %v377 = vmax.f32 %v282, 0.0
  %v378 = vmax.f32 %v286, 0.0
  %v379 = vmax.f32 %v288, 0.0
  %v380 = vmax.f32 %v292, 0.0
  %v381 = vmax.f32 %v294, 0.0
  %v382 = vmax.f32 %v298, 0.0
  %v383 = vmax.f32 %v300, 0.0
  %v384 = vmax.f32 %v304, 0.0
  %v385 = vmax.f32 %v306, 0.0
  %v386 = vmax.f32 %v310, 0.0
  %v387 = vmax.f32 %v312, 0.0
  %v388 = vmax.f32 %v316, 0.0
  %v389 = vmax.f32 %v318, 0.0
  %v390 = vmax.f32 %v322, 0.0
  %v391 = vmax.f32 %v324, 0.0
  %v392 = vmax.f32 %v328, 0.0
  %v393 = vmax.f32 %v330, 0.0
  %v394 = vmax.f32 %v334, 0.0
  %v395 = vmax.f32 %v336, 0.0
  %v396 = vmax.f32 %v340, 0.0
  %v397 = vmax.f32 %v342, 0.0
  %v398 = vmax.f32 %v346, 0.0
  %v399 = vmax.f32 %v348, 0.0
  %400 = vst [vmem:[%s3] sm:$0xff] %v350
  %401 = vst [vmem:[%s3 + $0x8] sm:$0xff] %v351
  %402 = vst [vmem:[%s3 + $0x10] sm:$0xff] %v352
  %403 = vst [vmem:[%s3 + $0x18] sm:$0xff] %v353
  %404 = vst [vmem:[%s3 + $0x20] sm:$0xff] %v354
  %405 = vst [vmem:[%s3 + $0x28] sm:$0xff] %v355
  %406 = vst [vmem:[%s3 + $0x30] sm:$0xff] %v356
  %407 = vst [vmem:[%s3 + $0x38] sm:$0xff] %v357
  %408 = vst [vmem:[%s3 + $0x40] sm:$0xff] %v358
  %409 = vst [vmem:[%s3 + $0x48] sm:$0xff] %v359
  %410 = vst [vmem:[%s3 + $0x50] sm:$0xff] %v360
  %411 = vst [vmem:[%s3 + $0x58] sm:$0xff] %v361
  %412 = vst [vmem:[%s3 + $0x60] sm:$0xff] %v362
  %413 = vst [vmem:[%s3 + $0x68] sm:$0xff] %v363
  %414 = vst [vmem:[%s3 + $0x70] sm:$0xff] %v364
  %415 = vst [vmem:[%s3 + $0x78] sm:$0xff] %v365
  %416 = vst [vmem:[%s3 + $0x80] sm:$0xff] %v366
  %417 = vst [vmem:[%s3 + $0x88] sm:$0xff] %v367
  %418 = vst [vmem:[%s3 + $0x90] sm:$0xff] %v368
  %419 = vst [vmem:[%s3 + $0x98] sm:$0xff] %v369
  %420 = vst [vmem:[%s3 + $0xa0] sm:$0xff] %v370
  %421 = vst [vmem:[%s3 + $0xa8] sm:$0xff] %v371
  %422 = vst [vmem:[%s3 + $0xb0] sm:$0xff] %v372
  %423 = vst [vmem:[%s3 + $0xb8] sm:$0xff] %v373
  %424 = vst [vmem:[%s3 + $0xc0] sm:$0xff] %v374
  %425 = vst [vmem:[%s3 + $0xc8] sm:$0xff] %v375
  %426 = vst [vmem:[%s3 + $0xd0] sm:$0xff] %v376
  %427 = vst [vmem:[%s3 + $0xd8] sm:$0xff] %v377
  %428 = vst [vmem:[%s3 + $0xe0] sm:$0xff] %v378
  %429 = vst [vmem:[%s3 + $0xe8] sm:$0xff] %v379
  %430 = vst [vmem:[%s3 + $0xf0] sm:$0xff] %v380
  %431 = vst [vmem:[%s3 + $0xf8] sm:$0xff] %v381
  %432 = vst [vmem:[%s3 + $0x100] sm:$0xff] %v382
  %433 = vst [vmem:[%s3 + $0x108] sm:$0xff] %v383
  %434 = vst [vmem:[%s3 + $0x110] sm:$0xff] %v384
  %435 = vst [vmem:[%s3 + $0x118] sm:$0xff] %v385
  %436 = vst [vmem:[%s3 + $0x120] sm:$0xff] %v386
  %437 = vst [vmem:[%s3 + $0x128] sm:$0xff] %v387
  %438 = vst [vmem:[%s3 + $0x130] sm:$0xff] %v388
  %439 = vst [vmem:[%s3 + $0x138] sm:$0xff] %v389
  %440 = vst [vmem:[%s3 + $0x140] sm:$0xff] %v390
  %441 = vst [vmem:[%s3 + $0x148] sm:$0xff] %v391
  %442 = vst [vmem:[%s3 + $0x150] sm:$0xff] %v392
  %443 = vst [vmem:[%s3 + $0x158] sm:$0xff] %v393
  %444 = vst [vmem:[%s3 + $0x160] sm:$0xff] %v394
  %445 = vst [vmem:[%s3 + $0x168] sm:$0xff] %v395
  %446 = vst [vmem:[%s3 + $0x170] sm:$0xff] %v396
  %447 = vst [vmem:[%s3 + $0x178] sm:$0xff] %v397
  %448 = vst [vmem:[%s3 + $0x180] sm:$0xff] %v398
  %449 = vst [vmem:[%s3 + $0x188] sm:$0xff] %v399
  // Predicated region
  $region14: #{transformer_encoder_forward.18} parent=0 // pred_check
    _
  $region15: #{transformer_encoder_forward.18} parent=0 // pred_check_branch
    %451 = sbr.rel (0) target = $region17
  $region16: #{transformer_encoder_forward.18} parent=0 // pred_region
    _
  $region17: #{transformer_encoder_forward.18} parent=0 // pred_fallthru
    _
  // Predicated region
  $region18: #{transformer_encoder_forward.18} parent=0 // pred_check
    _
  $region19: #{transformer_encoder_forward.18} parent=0 // pred_check_branch
    %453 = sbr.rel (0) target = $region21
  $region20: #{transformer_encoder_forward.18} parent=0 // pred_region
    _
  $region21: #{transformer_encoder_forward.18} parent=0 // pred_fallthru
    _

// kernel: transformer_encoder_forward.19
$region0: #{transformer_encoder_forward.19}
  #allocation0 [shape = 'u32[]', space=smem, size = 0x4, offset = 0x4, fixed_abs, tag = 'smem constant byte address 0x4 - core index']
  #allocation1 [shape = 'u32[144,128]{1,0:T(1,128)}', space=vmem, size = 0x12000, scoped, tag = 'internal scratch']
  %s0 = inlined_call_operand.vmem [shape: f32[200,256], index: 0, kind: input, shape index: {}]
  %s1 = inlined_call_operand.vmem [shape: f32[256,128], index: 1, kind: input, shape index: {}]
  %s2 = inlined_call_operand.vmem [shape: f32[1,128], index: 2, kind: input, shape index: {}]
  %s3 = inlined_call_operand.vmem [shape: f32[200,128], index: 3, kind: output, shape index: {}]
  %s4 = sld [smem:[#allocation0]]
  $region22: #{transformer_encoder_forward.19} parent=0
    _
  %s6 = ssub.s32 1, %s4
  %s7 = scalar_select 0, %s6, %s4
  // Predicated region
  $region2: #{transformer_encoder_forward.19} parent=0 // pred_check
    _
  $region3: #{transformer_encoder_forward.19} parent=0 // pred_check_branch
    %9 = sbr.rel (0) target = $region5
  $region4: #{transformer_encoder_forward.19} parent=0 // pred_region
    _
  $region5: #{transformer_encoder_forward.19} parent=0 // pred_fallthru
    _
  // Predicated region
  $region6: #{transformer_encoder_forward.19} parent=0 // pred_check
    _
  $region7: #{transformer_encoder_forward.19} parent=0 // pred_check_branch
    %11 = sbr.rel (0) target = $region9
  $region8: #{transformer_encoder_forward.19} parent=0 // pred_region
    _
  $region9: #{transformer_encoder_forward.19} parent=0 // pred_fallthru
    _
  // Predicated region
  $region10: #{transformer_encoder_forward.19} parent=0 // pred_check
    _
  $region11: #{transformer_encoder_forward.19} parent=0 // pred_check_branch
    %13 = sbr.rel (0) target = $region13
  $region12: #{transformer_encoder_forward.19} parent=0 // pred_region
    _
  $region13: #{transformer_encoder_forward.19} parent=0 // pred_fallthru
    _
  %v14 = vld [vmem:[%s0] sm:$0xff]
  %v15 = vld [vmem:[%s0 + $0x8] sm:$0xff]
  %v16 = vld [vmem:[%s0 + $0x10] sm:$0xff]
  %v17 = vld [vmem:[%s0 + $0x18] sm:$0xff]
  %v18 = vld [vmem:[%s0 + $0x20] sm:$0xff]
  %v19 = vld [vmem:[%s0 + $0x28] sm:$0xff]
  %v20 = vld [vmem:[%s0 + $0x30] sm:$0xff]
  %v21 = vld [vmem:[%s0 + $0x38] sm:$0xff]
  %v22 = vld [vmem:[%s0 + $0x40] sm:$0xff]
  %v23 = vld [vmem:[%s0 + $0x48] sm:$0xff]
  %v24 = vld [vmem:[%s0 + $0x50] sm:$0xff]
  %v25 = vld [vmem:[%s0 + $0x58] sm:$0xff]
  %v26 = vld [vmem:[%s0 + $0x60] sm:$0xff]
  %v27 = vld [vmem:[%s0 + $0x68] sm:$0xff]
  %v28 = vld [vmem:[%s0 + $0x70] sm:$0xff]
  %v29 = vld [vmem:[%s0 + $0x78] sm:$0xff]
  %v30 = vld [vmem:[%s0 + $0x80] sm:$0xff]
  %v31 = vld [vmem:[%s0 + $0x88] sm:$0xff]
  %v32 = vld [vmem:[%s0 + $0x90] sm:$0xff]
  %v33 = vld [vmem:[%s0 + $0x98] sm:$0xff]
  %v34 = vld [vmem:[%s0 + $0xa0] sm:$0xff]
  %v35 = vld [vmem:[%s0 + $0xa8] sm:$0xff]
  %v36 = vld [vmem:[%s0 + $0xb0] sm:$0xff]
  %v37 = vld [vmem:[%s0 + $0xb8] sm:$0xff]
  %v38 = vld [vmem:[%s0 + $0xc0] sm:$0xff]
  %v39 = vld [vmem:[%s0 + $0xc8] sm:$0xff]
  %v40 = vld [vmem:[%s0 + $0xd0] sm:$0xff]
  %v41 = vld [vmem:[%s0 + $0xd8] sm:$0xff]
  %v42 = vld [vmem:[%s0 + $0xe0] sm:$0xff]
  %v43 = vld [vmem:[%s0 + $0xe8] sm:$0xff]
  %v44 = vld [vmem:[%s0 + $0xf0] sm:$0xff]
  %v45 = vld [vmem:[%s0 + $0xf8] sm:$0xff]
  %v46 = vld [vmem:[%s0 + $0x100] sm:$0xff]
  %v47 = vld [vmem:[%s0 + $0x108] sm:$0xff]
  %v48 = vld [vmem:[%s0 + $0x110] sm:$0xff]
  %v49 = vld [vmem:[%s0 + $0x118] sm:$0xff]
  %v50 = vld [vmem:[%s0 + $0x120] sm:$0xff]
  %v51 = vld [vmem:[%s0 + $0x128] sm:$0xff]
  %v52 = vld [vmem:[%s0 + $0x130] sm:$0xff]
  %v53 = vld [vmem:[%s0 + $0x138] sm:$0xff]
  %v54 = vld [vmem:[%s0 + $0x140] sm:$0xff]
  %v55 = vld [vmem:[%s0 + $0x148] sm:$0xff]
  %v56 = vld [vmem:[%s0 + $0x150] sm:$0xff]
  %v57 = vld [vmem:[%s0 + $0x158] sm:$0xff]
  %v58 = vld [vmem:[%s0 + $0x160] sm:$0xff]
  %v59 = vld [vmem:[%s0 + $0x168] sm:$0xff]
  %v60 = vld [vmem:[%s0 + $0x170] sm:$0xff]
  %v61 = vld [vmem:[%s0 + $0x178] sm:$0xff]
  %v62 = vld [vmem:[%s0 + $0x180] sm:$0xff]
  %v63 = vld [vmem:[%s0 + $0x188] sm:$0xff]
  %v64 = vld [vmem:[%s1] sm:$0xff]
  %v65 = vld [vmem:[%s1 + $0x8] sm:$0xff]
  %v66 = vld [vmem:[%s1 + $0x10] sm:$0xff]
  %v67 = vld [vmem:[%s1 + $0x18] sm:$0xff]
  %v68 = vld [vmem:[%s1 + $0x20] sm:$0xff]
  %v69 = vld [vmem:[%s1 + $0x28] sm:$0xff]
  %v70 = vld [vmem:[%s1 + $0x30] sm:$0xff]
  %v71 = vld [vmem:[%s1 + $0x38] sm:$0xff]
  %v72 = vld [vmem:[%s1 + $0x40] sm:$0xff]
  %v73 = vld [vmem:[%s1 + $0x48] sm:$0xff]
  %v74 = vld [vmem:[%s1 + $0x50] sm:$0xff]
  %v75 = vld [vmem:[%s1 + $0x58] sm:$0xff]
  %v76 = vld [vmem:[%s1 + $0x60] sm:$0xff]
  %v77 = vld [vmem:[%s1 + $0x68] sm:$0xff]
  %v78 = vld [vmem:[%s1 + $0x70] sm:$0xff]
  %v79 = vld [vmem:[%s1 + $0x78] sm:$0xff]
  %v80 = vld [vmem:[%s1 + $0x80] sm:$0xff]
  %v81 = vld [vmem:[%s1 + $0x88] sm:$0xff]
  %v82 = vld [vmem:[%s1 + $0x90] sm:$0xff]
  %v83 = vld [vmem:[%s1 + $0x98] sm:$0xff]
  %v84 = vld [vmem:[%s1 + $0xa0] sm:$0xff]
  %v85 = vld [vmem:[%s1 + $0xa8] sm:$0xff]
  %v86 = vld [vmem:[%s1 + $0xb0] sm:$0xff]
  %v87 = vld [vmem:[%s1 + $0xb8] sm:$0xff]
  %v88 = vld [vmem:[%s1 + $0xc0] sm:$0xff]
  %v89 = vld [vmem:[%s1 + $0xc8] sm:$0xff]
  %v90 = vld [vmem:[%s1 + $0xd0] sm:$0xff]
  %v91 = vld [vmem:[%s1 + $0xd8] sm:$0xff]
  %v92 = vld [vmem:[%s1 + $0xe0] sm:$0xff]
  %v93 = vld [vmem:[%s1 + $0xe8] sm:$0xff]
  %v94 = vld [vmem:[%s1 + $0xf0] sm:$0xff]
  %v95 = vld [vmem:[%s1 + $0xf8] sm:$0xff]
  %v96 = vld [vmem:[%s2] sm:$0x1]
  %v98 = vlaneseq
  %v99 = vshrl.u32 %v98, 7
  %v100 = vsub.s32 0, %v99
  %v101 = vrot.slane %v96, %v100
  %103 = vmatprep.subr.mxu0 0.0
  %104 = vmatpush1.msra.mxu0 %v79
  %105 = vmatprep.subr.mxu0 0.0
  %106 = vmatpush1.msra.mxu0 %v78
  %107 = vmatprep.subr.mxu0 0.0
  %108 = vmatpush1.msra.mxu0 %v77
  %109 = vmatprep.subr.mxu0 0.0
  %110 = vmatpush1.msra.mxu0 %v76
  %111 = vmatprep.subr.mxu0 0.0
  %112 = vmatpush1.msra.mxu0 %v75
  %113 = vmatprep.subr.mxu0 0.0
  %114 = vmatpush1.msra.mxu0 %v74
  %115 = vmatprep.subr.mxu0 0.0
  %116 = vmatpush1.msra.mxu0 %v73
  %117 = vmatprep.subr.mxu0 0.0
  %118 = vmatpush1.msra.mxu0 %v72
  %119 = vmatprep.subr.mxu0 0.0
  %120 = vmatpush1.msra.mxu0 %v71
  %121 = vmatprep.subr.mxu0 0.0
  %122 = vmatpush1.msra.mxu0 %v70
  %123 = vmatprep.subr.mxu0 0.0
  %124 = vmatpush1.msra.mxu0 %v69
  %125 = vmatprep.subr.mxu0 0.0
  %126 = vmatpush1.msra.mxu0 %v68
  %127 = vmatprep.subr.mxu0 0.0
  %128 = vmatpush1.msra.mxu0 %v67
  %129 = vmatprep.subr.mxu0 0.0
  %130 = vmatpush1.msra.mxu0 %v66
  %131 = vmatprep.subr.mxu0 0.0
  %132 = vmatpush1.msra.mxu0 %v65
  %133 = vmatprep.subr.mxu0 0.0
  %134 = vmatpush1.msra.mxu0 %v64
  %135 = vmatprep.subr.mxu0 0.0
  %136 = vmatpush2.msra.mxu0 %v95
  %137 = vmatprep.subr.mxu0 0.0
  %138 = vmatpush2.msra.mxu0 %v94
  %139 = vmatprep.subr.mxu0 0.0
  %140 = vmatpush2.msra.mxu0 %v93
  %141 = vmatprep.subr.mxu0 0.0
  %142 = vmatpush2.msra.mxu0 %v92
  %143 = vmatprep.subr.mxu0 0.0
  %144 = vmatpush2.msra.mxu0 %v91
  %145 = vmatprep.subr.mxu0 0.0
  %146 = vmatpush2.msra.mxu0 %v90
  %147 = vmatprep.subr.mxu0 0.0
  %148 = vmatpush2.msra.mxu0 %v89
  %149 = vmatprep.subr.mxu0 0.0
  %150 = vmatpush2.msra.mxu0 %v88
  %151 = vmatprep.subr.mxu0 0.0
  %152 = vmatpush2.msra.mxu0 %v87
  %153 = vmatprep.subr.mxu0 0.0
  %154 = vmatpush2.msra.mxu0 %v86
  %155 = vmatprep.subr.mxu0 0.0
  %156 = vmatpush2.msra.mxu0 %v85
  %157 = vmatprep.subr.mxu0 0.0
  %158 = vmatpush2.msra.mxu0 %v84
  %159 = vmatprep.subr.mxu0 0.0
  %160 = vmatpush2.msra.mxu0 %v83
  %161 = vmatprep.subr.mxu0 0.0
  %162 = vmatpush2.msra.mxu0 %v82
  %163 = vmatprep.subr.mxu0 0.0
  %164 = vmatpush2.msra.mxu0 %v81
  %165 = vmatprep.subr.mxu0 0.0
  %166 = vmatpush2.msra.mxu0 %v80
  %167 = vmatprep.mubr.f32.mxu0 %v15
  %168 = vmatmul.mubr.f32.gmra.mxu0 %v14
  %v169 = vpop.f32.mrf.mxu0
  %v170 = vadd.f32 %v101, %v169
  %v171 = vpop.f32.mrf.mxu0
  %172 = vmatprep.mubr.f32.mxu0 %v17
  %173 = vmatmul.mubr.f32.gmra.mxu0 %v16
  %v174 = vpop.f32.mrf.mxu0
  %v175 = vadd.f32 %v101, %v174
  %v176 = vpop.f32.mrf.mxu0
  %177 = vmatprep.mubr.f32.mxu0 %v19
  %178 = vmatmul.mubr.f32.gmra.mxu0 %v18
  %v179 = vpop.f32.mrf.mxu0
  %v180 = vadd.f32 %v101, %v179
  %v181 = vpop.f32.mrf.mxu0
  %182 = vmatprep.mubr.f32.mxu0 %v21
  %183 = vmatmul.mubr.f32.gmra.mxu0 %v20
  %v184 = vpop.f32.mrf.mxu0
  %v185 = vadd.f32 %v101, %v184
  %v186 = vpop.f32.mrf.mxu0
  %187 = vmatprep.mubr.f32.mxu0 %v23
  %188 = vmatmul.mubr.f32.gmra.mxu0 %v22
  %v189 = vpop.f32.mrf.mxu0
  %v190 = vadd.f32 %v101, %v189
  %v191 = vpop.f32.mrf.mxu0
  %192 = vmatprep.mubr.f32.mxu0 %v25
  %193 = vmatmul.mubr.f32.gmra.mxu0 %v24
  %v194 = vpop.f32.mrf.mxu0
  %v195 = vadd.f32 %v101, %v194
  %v196 = vpop.f32.mrf.mxu0
  %197 = vmatprep.mubr.f32.mxu0 %v27
  %198 = vmatmul.mubr.f32.gmra.mxu0 %v26
  %v199 = vpop.f32.mrf.mxu0
  %v200 = vadd.f32 %v101, %v199
  %v201 = vpop.f32.mrf.mxu0
  %202 = vmatprep.mubr.f32.mxu0 %v29
  %203 = vmatmul.mubr.f32.gmra.mxu0 %v28
  %v204 = vpop.f32.mrf.mxu0
  %v205 = vadd.f32 %v101, %v204
  %v206 = vpop.f32.mrf.mxu0
  %207 = vmatprep.mubr.f32.mxu0 %v31
  %208 = vmatmul.mubr.f32.gmra.mxu0 %v30
  %v209 = vpop.f32.mrf.mxu0
  %v210 = vadd.f32 %v101, %v209
  %v211 = vpop.f32.mrf.mxu0
  %212 = vmatprep.mubr.f32.mxu0 %v33
  %213 = vmatmul.mubr.f32.gmra.mxu0 %v32
  %v214 = vpop.f32.mrf.mxu0
  %v215 = vadd.f32 %v101, %v214
  %v216 = vpop.f32.mrf.mxu0
  %217 = vmatprep.mubr.f32.mxu0 %v35
  %218 = vmatmul.mubr.f32.gmra.mxu0 %v34
  %v219 = vpop.f32.mrf.mxu0
  %v220 = vadd.f32 %v101, %v219
  %v221 = vpop.f32.mrf.mxu0
  %222 = vmatprep.mubr.f32.mxu0 %v37
  %223 = vmatmul.mubr.f32.gmra.mxu0 %v36
  %v224 = vpop.f32.mrf.mxu0
  %v225 = vadd.f32 %v101, %v224
  %v226 = vpop.f32.mrf.mxu0
  %227 = vmatprep.mubr.f32.mxu0 %v39
  %228 = vmatmul.mubr.f32.gmra.mxu0 %v38
  %v229 = vpop.f32.mrf.mxu0
  %v230 = vadd.f32 %v101, %v229
  %v231 = vpop.f32.mrf.mxu0
  %232 = vmatprep.mubr.f32.mxu0 %v41
  %233 = vmatmul.mubr.f32.gmra.mxu0 %v40
  %v234 = vpop.f32.mrf.mxu0
  %v235 = vadd.f32 %v101, %v234
  %v236 = vpop.f32.mrf.mxu0
  %237 = vmatprep.mubr.f32.mxu0 %v43
  %238 = vmatmul.mubr.f32.gmra.mxu0 %v42
  %v239 = vpop.f32.mrf.mxu0
  %v240 = vadd.f32 %v101, %v239
  %v241 = vpop.f32.mrf.mxu0
  %242 = vmatprep.mubr.f32.mxu0 %v45
  %243 = vmatmul.mubr.f32.gmra.mxu0 %v44
  %v244 = vpop.f32.mrf.mxu0
  %v245 = vadd.f32 %v101, %v244
  %v246 = vpop.f32.mrf.mxu0
  %247 = vmatprep.mubr.f32.mxu0 %v47
  %248 = vmatmul.mubr.f32.gmra.mxu0 %v46
  %v249 = vpop.f32.mrf.mxu0
  %v250 = vadd.f32 %v101, %v249
  %v251 = vpop.f32.mrf.mxu0
  %252 = vmatprep.mubr.f32.mxu0 %v49
  %253 = vmatmul.mubr.f32.gmra.mxu0 %v48
  %v254 = vpop.f32.mrf.mxu0
  %v255 = vadd.f32 %v101, %v254
  %v256 = vpop.f32.mrf.mxu0
  %257 = vmatprep.mubr.f32.mxu0 %v51
  %258 = vmatmul.mubr.f32.gmra.mxu0 %v50
  %v259 = vpop.f32.mrf.mxu0
  %v260 = vadd.f32 %v101, %v259
  %v261 = vpop.f32.mrf.mxu0
  %262 = vmatprep.mubr.f32.mxu0 %v53
  %263 = vmatmul.mubr.f32.gmra.mxu0 %v52
  %v264 = vpop.f32.mrf.mxu0
  %v265 = vadd.f32 %v101, %v264
  %v266 = vpop.f32.mrf.mxu0
  %267 = vmatprep.mubr.f32.mxu0 %v55
  %268 = vmatmul.mubr.f32.gmra.mxu0 %v54
  %v269 = vpop.f32.mrf.mxu0
  %v270 = vadd.f32 %v101, %v269
  %v271 = vpop.f32.mrf.mxu0
  %272 = vmatprep.mubr.f32.mxu0 %v57
  %273 = vmatmul.mubr.f32.gmra.mxu0 %v56
  %v274 = vpop.f32.mrf.mxu0
  %v275 = vadd.f32 %v101, %v274
  %v276 = vpop.f32.mrf.mxu0
  %277 = vmatprep.mubr.f32.mxu0 %v59
  %278 = vmatmul.mubr.f32.gmra.mxu0 %v58
  %v279 = vpop.f32.mrf.mxu0
  %v280 = vadd.f32 %v101, %v279
  %v281 = vpop.f32.mrf.mxu0
  %282 = vmatprep.mubr.f32.mxu0 %v61
  %283 = vmatmul.mubr.f32.gmra.mxu0 %v60
  %v284 = vpop.f32.mrf.mxu0
  %v285 = vadd.f32 %v101, %v284
  %v286 = vpop.f32.mrf.mxu0
  %287 = vmatprep.mubr.f32.mxu0 %v63
  %288 = vmatmul.mubr.f32.gmra.mxu0 %v62
  %v289 = vpop.f32.mrf.mxu0
  %v290 = vadd.f32 %v101, %v289
  %v291 = vpop.f32.mrf.mxu0
  %292 = vdwg.mxu0
  %293 = vst [vmem:[%s3] sm:$0xff] %v170
  %294 = vst [vmem:[%s3 + $0x8] sm:$0xff] %v175
  %295 = vst [vmem:[%s3 + $0x10] sm:$0xff] %v180
  %296 = vst [vmem:[%s3 + $0x18] sm:$0xff] %v185
  %297 = vst [vmem:[%s3 + $0x20] sm:$0xff] %v190
  %298 = vst [vmem:[%s3 + $0x28] sm:$0xff] %v195
  %299 = vst [vmem:[%s3 + $0x30] sm:$0xff] %v200
  %300 = vst [vmem:[%s3 + $0x38] sm:$0xff] %v205
  %301 = vst [vmem:[%s3 + $0x40] sm:$0xff] %v210
  %302 = vst [vmem:[%s3 + $0x48] sm:$0xff] %v215
  %303 = vst [vmem:[%s3 + $0x50] sm:$0xff] %v220
  %304 = vst [vmem:[%s3 + $0x58] sm:$0xff] %v225
  %305 = vst [vmem:[%s3 + $0x60] sm:$0xff] %v230
  %306 = vst [vmem:[%s3 + $0x68] sm:$0xff] %v235
  %307 = vst [vmem:[%s3 + $0x70] sm:$0xff] %v240
  %308 = vst [vmem:[%s3 + $0x78] sm:$0xff] %v245
  %309 = vst [vmem:[%s3 + $0x80] sm:$0xff] %v250
  %310 = vst [vmem:[%s3 + $0x88] sm:$0xff] %v255
  %311 = vst [vmem:[%s3 + $0x90] sm:$0xff] %v260
  %312 = vst [vmem:[%s3 + $0x98] sm:$0xff] %v265
  %313 = vst [vmem:[%s3 + $0xa0] sm:$0xff] %v270
  %314 = vst [vmem:[%s3 + $0xa8] sm:$0xff] %v275
  %315 = vst [vmem:[%s3 + $0xb0] sm:$0xff] %v280
  %316 = vst [vmem:[%s3 + $0xb8] sm:$0xff] %v285
  %317 = vst [vmem:[%s3 + $0xc0] sm:$0xff] %v290
  // Predicated region
  $region14: #{transformer_encoder_forward.19} parent=0 // pred_check
    _
  $region15: #{transformer_encoder_forward.19} parent=0 // pred_check_branch
    %319 = sbr.rel (0) target = $region17
  $region16: #{transformer_encoder_forward.19} parent=0 // pred_region
    _
  $region17: #{transformer_encoder_forward.19} parent=0 // pred_fallthru
    _
  // Predicated region
  $region18: #{transformer_encoder_forward.19} parent=0 // pred_check
    _
  $region19: #{transformer_encoder_forward.19} parent=0 // pred_check_branch
    %321 = sbr.rel (0) target = $region21
  $region20: #{transformer_encoder_forward.19} parent=0 // pred_region
    _
  $region21: #{transformer_encoder_forward.19} parent=0 // pred_fallthru
    _

// kernel: transformer_encoder_forward.20
$region0: #{transformer_encoder_forward.20}
  #allocation0 [shape = 'u32[]', space=smem, size = 0x4, offset = 0x4, fixed_abs, tag = 'smem constant byte address 0x4 - core index']
  #allocation1 [shape = 'u32[144,128]{1,0:T(1,128)}', space=vmem, size = 0x12000, scoped, tag = 'internal scratch']
  %s0 = inlined_call_operand.vmem [shape: f32[200,128], index: 0, kind: input, shape index: {}]
  %s1 = inlined_call_operand.vmem [shape: f32[200,128], index: 1, kind: input, shape index: {}]
  %s2 = inlined_call_operand.vmem [shape: f32[1,128], index: 2, kind: input, shape index: {}]
  %s3 = inlined_call_operand.vmem [shape: f32[1,128], index: 3, kind: input, shape index: {}]
  %s4 = inlined_call_operand.vmem [shape: f32[200,128], index: 4, kind: output, shape index: {}]
  %s5 = sld [smem:[#allocation0]]
  $region26: #{transformer_encoder_forward.20} parent=0
    _
  %s7 = ssub.s32 1, %s5
  %s8 = scalar_select 0, %s7, %s5
  // Predicated region
  $region2: #{transformer_encoder_forward.20} parent=0 // pred_check
    _
  $region3: #{transformer_encoder_forward.20} parent=0 // pred_check_branch
    %10 = sbr.rel (0) target = $region5
  $region4: #{transformer_encoder_forward.20} parent=0 // pred_region
    _
  $region5: #{transformer_encoder_forward.20} parent=0 // pred_fallthru
    _
  // Predicated region
  $region6: #{transformer_encoder_forward.20} parent=0 // pred_check
    _
  $region7: #{transformer_encoder_forward.20} parent=0 // pred_check_branch
    %12 = sbr.rel (0) target = $region9
  $region8: #{transformer_encoder_forward.20} parent=0 // pred_region
    _
  $region9: #{transformer_encoder_forward.20} parent=0 // pred_fallthru
    _
  // Predicated region
  $region10: #{transformer_encoder_forward.20} parent=0 // pred_check
    _
  $region11: #{transformer_encoder_forward.20} parent=0 // pred_check_branch
    %14 = sbr.rel (0) target = $region13
  $region12: #{transformer_encoder_forward.20} parent=0 // pred_region
    _
  $region13: #{transformer_encoder_forward.20} parent=0 // pred_fallthru
    _
  // Predicated region
  $region14: #{transformer_encoder_forward.20} parent=0 // pred_check
    _
  $region15: #{transformer_encoder_forward.20} parent=0 // pred_check_branch
    %16 = sbr.rel (0) target = $region17
  $region16: #{transformer_encoder_forward.20} parent=0 // pred_region
    _
  $region17: #{transformer_encoder_forward.20} parent=0 // pred_fallthru
    _
  %v17 = vld [vmem:[%s0] sm:$0xff]
  %v18 = vld [vmem:[%s0 + $0x8] sm:$0xff]
  %v19 = vld [vmem:[%s0 + $0x10] sm:$0xff]
  %v20 = vld [vmem:[%s0 + $0x18] sm:$0xff]
  %v21 = vld [vmem:[%s0 + $0x20] sm:$0xff]
  %v22 = vld [vmem:[%s0 + $0x28] sm:$0xff]
  %v23 = vld [vmem:[%s0 + $0x30] sm:$0xff]
  %v24 = vld [vmem:[%s0 + $0x38] sm:$0xff]
  %v25 = vld [vmem:[%s0 + $0x40] sm:$0xff]
  %v26 = vld [vmem:[%s0 + $0x48] sm:$0xff]
  %v27 = vld [vmem:[%s0 + $0x50] sm:$0xff]
  %v28 = vld [vmem:[%s0 + $0x58] sm:$0xff]
  %v29 = vld [vmem:[%s0 + $0x60] sm:$0xff]
  %v30 = vld [vmem:[%s0 + $0x68] sm:$0xff]
  %v31 = vld [vmem:[%s0 + $0x70] sm:$0xff]
  %v32 = vld [vmem:[%s0 + $0x78] sm:$0xff]
  %v33 = vld [vmem:[%s0 + $0x80] sm:$0xff]
  %v34 = vld [vmem:[%s0 + $0x88] sm:$0xff]
  %v35 = vld [vmem:[%s0 + $0x90] sm:$0xff]
  %v36 = vld [vmem:[%s0 + $0x98] sm:$0xff]
  %v37 = vld [vmem:[%s0 + $0xa0] sm:$0xff]
  %v38 = vld [vmem:[%s0 + $0xa8] sm:$0xff]
  %v39 = vld [vmem:[%s0 + $0xb0] sm:$0xff]
  %v40 = vld [vmem:[%s0 + $0xb8] sm:$0xff]
  %v41 = vld [vmem:[%s0 + $0xc0] sm:$0xff]
  %v42 = vld [vmem:[%s1] sm:$0xff]
  %v43 = vld [vmem:[%s1 + $0x8] sm:$0xff]
  %v44 = vld [vmem:[%s1 + $0x10] sm:$0xff]
  %v45 = vld [vmem:[%s1 + $0x18] sm:$0xff]
  %v46 = vld [vmem:[%s1 + $0x20] sm:$0xff]
  %v47 = vld [vmem:[%s1 + $0x28] sm:$0xff]
  %v48 = vld [vmem:[%s1 + $0x30] sm:$0xff]
  %v49 = vld [vmem:[%s1 + $0x38] sm:$0xff]
  %v50 = vld [vmem:[%s1 + $0x40] sm:$0xff]
  %v51 = vld [vmem:[%s1 + $0x48] sm:$0xff]
  %v52 = vld [vmem:[%s1 + $0x50] sm:$0xff]
  %v53 = vld [vmem:[%s1 + $0x58] sm:$0xff]
  %v54 = vld [vmem:[%s1 + $0x60] sm:$0xff]
  %v55 = vld [vmem:[%s1 + $0x68] sm:$0xff]
  %v56 = vld [vmem:[%s1 + $0x70] sm:$0xff]
  %v57 = vld [vmem:[%s1 + $0x78] sm:$0xff]
  %v58 = vld [vmem:[%s1 + $0x80] sm:$0xff]
  %v59 = vld [vmem:[%s1 + $0x88] sm:$0xff]
  %v60 = vld [vmem:[%s1 + $0x90] sm:$0xff]
  %v61 = vld [vmem:[%s1 + $0x98] sm:$0xff]
  %v62 = vld [vmem:[%s1 + $0xa0] sm:$0xff]
  %v63 = vld [vmem:[%s1 + $0xa8] sm:$0xff]
  %v64 = vld [vmem:[%s1 + $0xb0] sm:$0xff]
  %v65 = vld [vmem:[%s1 + $0xb8] sm:$0xff]
  %v66 = vld [vmem:[%s1 + $0xc0] sm:$0xff]
  %v67 = vadd.f32 %v17, %v42
  %v68 = vadd.f32 %v18, %v43
  %v69 = vadd.f32 %v19, %v44
  %v70 = vadd.f32 %v20, %v45
  %v71 = vadd.f32 %v21, %v46
  %v72 = vadd.f32 %v22, %v47
  %v73 = vadd.f32 %v23, %v48
  %v74 = vadd.f32 %v24, %v49
  %v75 = vadd.f32 %v25, %v50
  %v76 = vadd.f32 %v26, %v51
  %v77 = vadd.f32 %v27, %v52
  %v78 = vadd.f32 %v28, %v53
  %v79 = vadd.f32 %v29, %v54
  %v80 = vadd.f32 %v30, %v55
  %v81 = vadd.f32 %v31, %v56
  %v82 = vadd.f32 %v32, %v57
  %v83 = vadd.f32 %v33, %v58
  %v84 = vadd.f32 %v34, %v59
  %v85 = vadd.f32 %v35, %v60
  %v86 = vadd.f32 %v36, %v61
  %v87 = vadd.f32 %v37, %v62
  %v88 = vadd.f32 %v38, %v63
  %v89 = vadd.f32 %v39, %v64
  %v90 = vadd.f32 %v40, %v65
  %v91 = vadd.f32 %v41, %v66
  %v92 = vlaneseq
  %v93 = vand.u32 %v92, 127
  %vm94 = vcmp.lt.s32.totalorder %v93, 32
  %v95 = vsel %vm94, 1, 0
  %vm96 = vcmp.eq.s32.totalorder %v95, 1
  %v97 = vsel %vm96, %v67, 0.0
  %v98 = vsel %vm96, %v68, 0.0
  %v99 = vsel %vm96, %v69, 0.0
  %v100 = vsel %vm96, %v70, 0.0
  %v101 = vsel %vm96, %v71, 0.0
  %v102 = vsel %vm96, %v72, 0.0
  %v103 = vsel %vm96, %v73, 0.0
  %v104 = vsel %vm96, %v74, 0.0
  %v105 = vsel %vm96, %v75, 0.0
  %v106 = vsel %vm96, %v76, 0.0
  %v107 = vsel %vm96, %v77, 0.0
  %v108 = vsel %vm96, %v78, 0.0
  %v109 = vsel %vm96, %v79, 0.0
  %v110 = vsel %vm96, %v80, 0.0
  %v111 = vsel %vm96, %v81, 0.0
  %v112 = vsel %vm96, %v82, 0.0
  %v113 = vsel %vm96, %v83, 0.0
  %v114 = vsel %vm96, %v84, 0.0
  %v115 = vsel %vm96, %v85, 0.0
  %v116 = vsel %vm96, %v86, 0.0
  %v117 = vsel %vm96, %v87, 0.0
  %v118 = vsel %vm96, %v88, 0.0
  %v119 = vsel %vm96, %v89, 0.0
  %v120 = vsel %vm96, %v90, 0.0
  %v121 = vsel %vm96, %v91, 0.0
  %122 = vadd.xlane.f32.xlu0 %v97
  %v123 = vpop.xlane.xlu0 %122
  %124 = vadd.xlane.f32.xlu0 %v98
  %v125 = vpop.xlane.xlu0 %124
  %126 = vadd.xlane.f32.xlu0 %v99
  %v127 = vpop.xlane.xlu0 %126
  %128 = vadd.xlane.f32.xlu0 %v100
  %v129 = vpop.xlane.xlu0 %128
  %130 = vadd.xlane.f32.xlu0 %v101
  %v131 = vpop.xlane.xlu0 %130
  %132 = vadd.xlane.f32.xlu0 %v102
  %v133 = vpop.xlane.xlu0 %132
  %134 = vadd.xlane.f32.xlu0 %v103
  %v135 = vpop.xlane.xlu0 %134
  %136 = vadd.xlane.f32.xlu0 %v104
  %v137 = vpop.xlane.xlu0 %136
  %138 = vadd.xlane.f32.xlu0 %v105
  %v139 = vpop.xlane.xlu0 %138
  %140 = vadd.xlane.f32.xlu0 %v106
  %v141 = vpop.xlane.xlu0 %140
  %142 = vadd.xlane.f32.xlu0 %v107
  %v143 = vpop.xlane.xlu0 %142
  %144 = vadd.xlane.f32.xlu0 %v108
  %v145 = vpop.xlane.xlu0 %144
  %146 = vadd.xlane.f32.xlu0 %v109
  %v147 = vpop.xlane.xlu0 %146
  %148 = vadd.xlane.f32.xlu0 %v110
  %v149 = vpop.xlane.xlu0 %148
  %150 = vadd.xlane.f32.xlu0 %v111
  %v151 = vpop.xlane.xlu0 %150
  %152 = vadd.xlane.f32.xlu0 %v112
  %v153 = vpop.xlane.xlu0 %152
  %154 = vadd.xlane.f32.xlu0 %v113
  %v155 = vpop.xlane.xlu0 %154
  %156 = vadd.xlane.f32.xlu0 %v114
  %v157 = vpop.xlane.xlu0 %156
  %158 = vadd.xlane.f32.xlu0 %v115
  %v159 = vpop.xlane.xlu0 %158
  %160 = vadd.xlane.f32.xlu0 %v116
  %v161 = vpop.xlane.xlu0 %160
  %162 = vadd.xlane.f32.xlu0 %v117
  %v163 = vpop.xlane.xlu0 %162
  %164 = vadd.xlane.f32.xlu0 %v118
  %v165 = vpop.xlane.xlu0 %164
  %166 = vadd.xlane.f32.xlu0 %v119
  %v167 = vpop.xlane.xlu0 %166
  %168 = vadd.xlane.f32.xlu0 %v120
  %v169 = vpop.xlane.xlu0 %168
  %170 = vadd.xlane.f32.xlu0 %v121
  %v171 = vpop.xlane.xlu0 %170
  %v172 = vmul.f32 %v123, 0.03125
  %v173 = vmul.f32 %v125, 0.03125
  %v174 = vmul.f32 %v127, 0.03125
  %v175 = vmul.f32 %v129, 0.03125
  %v176 = vmul.f32 %v131, 0.03125
  %v177 = vmul.f32 %v133, 0.03125
  %v178 = vmul.f32 %v135, 0.03125
  %v179 = vmul.f32 %v137, 0.03125
  %v180 = vmul.f32 %v139, 0.03125
  %v181 = vmul.f32 %v141, 0.03125
  %v182 = vmul.f32 %v143, 0.03125
  %v183 = vmul.f32 %v145, 0.03125
  %v184 = vmul.f32 %v147, 0.03125
  %v185 = vmul.f32 %v149, 0.03125
  %v186 = vmul.f32 %v151, 0.03125
  %v187 = vmul.f32 %v153, 0.03125
  %v188 = vmul.f32 %v155, 0.03125
  %v189 = vmul.f32 %v157, 0.03125
  %v190 = vmul.f32 %v159, 0.03125
  %v191 = vmul.f32 %v161, 0.03125
  %v192 = vmul.f32 %v163, 0.03125
  %v193 = vmul.f32 %v165, 0.03125
  %v194 = vmul.f32 %v167, 0.03125
  %v195 = vmul.f32 %v169, 0.03125
  %v196 = vmul.f32 %v171, 0.03125
  %v197 = vsub.f32 %v97, %v172
  %v198 = vsub.f32 %v98, %v173
  %v199 = vsub.f32 %v99, %v174
  %v200 = vsub.f32 %v100, %v175
  %v201 = vsub.f32 %v101, %v176
  %v202 = vsub.f32 %v102, %v177
  %v203 = vsub.f32 %v103, %v178
  %v204 = vsub.f32 %v104, %v179
  %v205 = vsub.f32 %v105, %v180
  %v206 = vsub.f32 %v106, %v181
  %v207 = vsub.f32 %v107, %v182
  %v208 = vsub.f32 %v108, %v183
  %v209 = vsub.f32 %v109, %v184
  %v210 = vsub.f32 %v110, %v185
  %v211 = vsub.f32 %v111, %v186
  %v212 = vsub.f32 %v112, %v187
  %v213 = vsub.f32 %v113, %v188
  %v214 = vsub.f32 %v114, %v189
  %v215 = vsub.f32 %v115, %v190
  %v216 = vsub.f32 %v116, %v191
  %v217 = vsub.f32 %v117, %v192
  %v218 = vsub.f32 %v118, %v193
  %v219 = vsub.f32 %v119, %v194
  %v220 = vsub.f32 %v120, %v195
  %v221 = vsub.f32 %v121, %v196
  %v222 = vsel %vm96, %v197, 0.0
  %v223 = vsel %vm96, %v198, 0.0
  %v224 = vsel %vm96, %v199, 0.0
  %v225 = vsel %vm96, %v200, 0.0
  %v226 = vsel %vm96, %v201, 0.0
  %v227 = vsel %vm96, %v202, 0.0
  %v228 = vsel %vm96, %v203, 0.0
  %v229 = vsel %vm96, %v204, 0.0
  %v230 = vsel %vm96, %v205, 0.0
  %v231 = vsel %vm96, %v206, 0.0
  %v232 = vsel %vm96, %v207, 0.0
  %v233 = vsel %vm96, %v208, 0.0
  %v234 = vsel %vm96, %v209, 0.0
  %v235 = vsel %vm96, %v210, 0.0
  %v236 = vsel %vm96, %v211, 0.0
  %v237 = vsel %vm96, %v212, 0.0
  %v238 = vsel %vm96, %v213, 0.0
  %v239 = vsel %vm96, %v214, 0.0
  %v240 = vsel %vm96, %v215, 0.0
  %v241 = vsel %vm96, %v216, 0.0
  %v242 = vsel %vm96, %v217, 0.0
  %v243 = vsel %vm96, %v218, 0.0
  %v244 = vsel %vm96, %v219, 0.0
  %v245 = vsel %vm96, %v220, 0.0
  %v246 = vsel %vm96, %v221, 0.0
  %v247 = vmul.f32 %v222, %v222
  %v248 = vmul.f32 %v223, %v223
  %v249 = vmul.f32 %v224, %v224
  %v250 = vmul.f32 %v225, %v225
  %v251 = vmul.f32 %v226, %v226
  %v252 = vmul.f32 %v227, %v227
  %v253 = vmul.f32 %v228, %v228
  %v254 = vmul.f32 %v229, %v229
  %v255 = vmul.f32 %v230, %v230
  %v256 = vmul.f32 %v231, %v231
  %v257 = vmul.f32 %v232, %v232
  %v258 = vmul.f32 %v233, %v233
  %v259 = vmul.f32 %v234, %v234
  %v260 = vmul.f32 %v235, %v235
  %v261 = vmul.f32 %v236, %v236
  %v262 = vmul.f32 %v237, %v237
  %v263 = vmul.f32 %v238, %v238
  %v264 = vmul.f32 %v239, %v239
  %v265 = vmul.f32 %v240, %v240
  %v266 = vmul.f32 %v241, %v241
  %v267 = vmul.f32 %v242, %v242
  %v268 = vmul.f32 %v243, %v243
  %v269 = vmul.f32 %v244, %v244
  %v270 = vmul.f32 %v245, %v245
  %v271 = vmul.f32 %v246, %v246
  %272 = vadd.xlane.f32.xlu0 %v247
  %v273 = vpop.xlane.xlu0 %272
  %274 = vadd.xlane.f32.xlu0 %v248
  %v275 = vpop.xlane.xlu0 %274
  %276 = vadd.xlane.f32.xlu0 %v249
  %v277 = vpop.xlane.xlu0 %276
  %278 = vadd.xlane.f32.xlu0 %v250
  %v279 = vpop.xlane.xlu0 %278
  %280 = vadd.xlane.f32.xlu0 %v251
  %v281 = vpop.xlane.xlu0 %280
  %282 = vadd.xlane.f32.xlu0 %v252
  %v283 = vpop.xlane.xlu0 %282
  %284 = vadd.xlane.f32.xlu0 %v253
  %v285 = vpop.xlane.xlu0 %284
  %286 = vadd.xlane.f32.xlu0 %v254
  %v287 = vpop.xlane.xlu0 %286
  %288 = vadd.xlane.f32.xlu0 %v255
  %v289 = vpop.xlane.xlu0 %288
  %290 = vadd.xlane.f32.xlu0 %v256
  %v291 = vpop.xlane.xlu0 %290
  %292 = vadd.xlane.f32.xlu0 %v257
  %v293 = vpop.xlane.xlu0 %292
  %294 = vadd.xlane.f32.xlu0 %v258
  %v295 = vpop.xlane.xlu0 %294
  %296 = vadd.xlane.f32.xlu0 %v259
  %v297 = vpop.xlane.xlu0 %296
  %298 = vadd.xlane.f32.xlu0 %v260
  %v299 = vpop.xlane.xlu0 %298
  %300 = vadd.xlane.f32.xlu0 %v261
  %v301 = vpop.xlane.xlu0 %300
  %302 = vadd.xlane.f32.xlu0 %v262
  %v303 = vpop.xlane.xlu0 %302
  %304 = vadd.xlane.f32.xlu0 %v263
  %v305 = vpop.xlane.xlu0 %304
  %306 = vadd.xlane.f32.xlu0 %v264
  %v307 = vpop.xlane.xlu0 %306
  %308 = vadd.xlane.f32.xlu0 %v265
  %v309 = vpop.xlane.xlu0 %308
  %310 = vadd.xlane.f32.xlu0 %v266
  %v311 = vpop.xlane.xlu0 %310
  %312 = vadd.xlane.f32.xlu0 %v267
  %v313 = vpop.xlane.xlu0 %312
  %314 = vadd.xlane.f32.xlu0 %v268
  %v315 = vpop.xlane.xlu0 %314
  %316 = vadd.xlane.f32.xlu0 %v269
  %v317 = vpop.xlane.xlu0 %316
  %318 = vadd.xlane.f32.xlu0 %v270
  %v319 = vpop.xlane.xlu0 %318
  %320 = vadd.xlane.f32.xlu0 %v271
  %v321 = vpop.xlane.xlu0 %320
  %v322 = vmul.f32 %v273, 0.032258064
  %v323 = vmul.f32 %v275, 0.032258064
  %v324 = vmul.f32 %v277, 0.032258064
  %v325 = vmul.f32 %v279, 0.032258064
  %v326 = vmul.f32 %v281, 0.032258064
  %v327 = vmul.f32 %v283, 0.032258064
  %v328 = vmul.f32 %v285, 0.032258064
  %v329 = vmul.f32 %v287, 0.032258064
  %v330 = vmul.f32 %v289, 0.032258064
  %v331 = vmul.f32 %v291, 0.032258064
  %v332 = vmul.f32 %v293, 0.032258064
  %v333 = vmul.f32 %v295, 0.032258064
  %v334 = vmul.f32 %v297, 0.032258064
  %v335 = vmul.f32 %v299, 0.032258064
  %v336 = vmul.f32 %v301, 0.032258064
  %v337 = vmul.f32 %v303, 0.032258064
  %v338 = vmul.f32 %v305, 0.032258064
  %v339 = vmul.f32 %v307, 0.032258064
  %v340 = vmul.f32 %v309, 0.032258064
  %v341 = vmul.f32 %v311, 0.032258064
  %v342 = vmul.f32 %v313, 0.032258064
  %v343 = vmul.f32 %v315, 0.032258064
  %v344 = vmul.f32 %v317, 0.032258064
  %v345 = vmul.f32 %v319, 0.032258064
  %v346 = vmul.f32 %v321, 0.032258064
  %v347 = vrsqrt.pop %v322
  %v348 = vmul.f32 %v322, %v347
  %vm349 = vcmp.eq.f32.partialorder %v322, inf
  %v350 = vsel %vm349, %v322, %v348
  %vm351 = vcmp.eq.f32.partialorder %v322, 0.0
  %v352 = vand.u32 %v322, 2147483648
  %v353 = vsel %vm351, %v352, %v350
  %v354 = vrsqrt.pop %v323
  %v355 = vmul.f32 %v323, %v354
  %vm356 = vcmp.eq.f32.partialorder %v323, inf
  %v357 = vsel %vm356, %v323, %v355
  %vm358 = vcmp.eq.f32.partialorder %v323, 0.0
  %v359 = vand.u32 %v323, 2147483648
  %v360 = vsel %vm358, %v359, %v357
  %v361 = vrsqrt.pop %v324
  %v362 = vmul.f32 %v324, %v361
  %vm363 = vcmp.eq.f32.partialorder %v324, inf
  %v364 = vsel %vm363, %v324, %v362
  %vm365 = vcmp.eq.f32.partialorder %v324, 0.0
  %v366 = vand.u32 %v324, 2147483648
  %v367 = vsel %vm365, %v366, %v364
  %v368 = vrsqrt.pop %v325
  %v369 = vmul.f32 %v325, %v368
  %vm370 = vcmp.eq.f32.partialorder %v325, inf
  %v371 = vsel %vm370, %v325, %v369
  %vm372 = vcmp.eq.f32.partialorder %v325, 0.0
  %v373 = vand.u32 %v325, 2147483648
  %v374 = vsel %vm372, %v373, %v371
  %v375 = vrsqrt.pop %v326
  %v376 = vmul.f32 %v326, %v375
  %vm377 = vcmp.eq.f32.partialorder %v326, inf
  %v378 = vsel %vm377, %v326, %v376
  %vm379 = vcmp.eq.f32.partialorder %v326, 0.0
  %v380 = vand.u32 %v326, 2147483648
  %v381 = vsel %vm379, %v380, %v378
  %v382 = vrsqrt.pop %v327
  %v383 = vmul.f32 %v327, %v382
  %vm384 = vcmp.eq.f32.partialorder %v327, inf
  %v385 = vsel %vm384, %v327, %v383
  %vm386 = vcmp.eq.f32.partialorder %v327, 0.0
  %v387 = vand.u32 %v327, 2147483648
  %v388 = vsel %vm386, %v387, %v385
  %v389 = vrsqrt.pop %v328
  %v390 = vmul.f32 %v328, %v389
  %vm391 = vcmp.eq.f32.partialorder %v328, inf
  %v392 = vsel %vm391, %v328, %v390
  %vm393 = vcmp.eq.f32.partialorder %v328, 0.0
  %v394 = vand.u32 %v328, 2147483648
  %v395 = vsel %vm393, %v394, %v392
  %v396 = vrsqrt.pop %v329
  %v397 = vmul.f32 %v329, %v396
  %vm398 = vcmp.eq.f32.partialorder %v329, inf
  %v399 = vsel %vm398, %v329, %v397
  %vm400 = vcmp.eq.f32.partialorder %v329, 0.0
  %v401 = vand.u32 %v329, 2147483648
  %v402 = vsel %vm400, %v401, %v399
  %v403 = vrsqrt.pop %v330
  %v404 = vmul.f32 %v330, %v403
  %vm405 = vcmp.eq.f32.partialorder %v330, inf
  %v406 = vsel %vm405, %v330, %v404
  %vm407 = vcmp.eq.f32.partialorder %v330, 0.0
  %v408 = vand.u32 %v330, 2147483648
  %v409 = vsel %vm407, %v408, %v406
  %v410 = vrsqrt.pop %v331
  %v411 = vmul.f32 %v331, %v410
  %vm412 = vcmp.eq.f32.partialorder %v331, inf
  %v413 = vsel %vm412, %v331, %v411
  %vm414 = vcmp.eq.f32.partialorder %v331, 0.0
  %v415 = vand.u32 %v331, 2147483648
  %v416 = vsel %vm414, %v415, %v413
  %v417 = vrsqrt.pop %v332
  %v418 = vmul.f32 %v332, %v417
  %vm419 = vcmp.eq.f32.partialorder %v332, inf
  %v420 = vsel %vm419, %v332, %v418
  %vm421 = vcmp.eq.f32.partialorder %v332, 0.0
  %v422 = vand.u32 %v332, 2147483648
  %v423 = vsel %vm421, %v422, %v420
  %v424 = vrsqrt.pop %v333
  %v425 = vmul.f32 %v333, %v424
  %vm426 = vcmp.eq.f32.partialorder %v333, inf
  %v427 = vsel %vm426, %v333, %v425
  %vm428 = vcmp.eq.f32.partialorder %v333, 0.0
  %v429 = vand.u32 %v333, 2147483648
  %v430 = vsel %vm428, %v429, %v427
  %v431 = vrsqrt.pop %v334
  %v432 = vmul.f32 %v334, %v431
  %vm433 = vcmp.eq.f32.partialorder %v334, inf
  %v434 = vsel %vm433, %v334, %v432
  %vm435 = vcmp.eq.f32.partialorder %v334, 0.0
  %v436 = vand.u32 %v334, 2147483648
  %v437 = vsel %vm435, %v436, %v434
  %v438 = vrsqrt.pop %v335
  %v439 = vmul.f32 %v335, %v438
  %vm440 = vcmp.eq.f32.partialorder %v335, inf
  %v441 = vsel %vm440, %v335, %v439
  %vm442 = vcmp.eq.f32.partialorder %v335, 0.0
  %v443 = vand.u32 %v335, 2147483648
  %v444 = vsel %vm442, %v443, %v441
  %v445 = vrsqrt.pop %v336
  %v446 = vmul.f32 %v336, %v445
  %vm447 = vcmp.eq.f32.partialorder %v336, inf
  %v448 = vsel %vm447, %v336, %v446
  %vm449 = vcmp.eq.f32.partialorder %v336, 0.0
  %v450 = vand.u32 %v336, 2147483648
  %v451 = vsel %vm449, %v450, %v448
  %v452 = vrsqrt.pop %v337
  %v453 = vmul.f32 %v337, %v452
  %vm454 = vcmp.eq.f32.partialorder %v337, inf
  %v455 = vsel %vm454, %v337, %v453
  %vm456 = vcmp.eq.f32.partialorder %v337, 0.0
  %v457 = vand.u32 %v337, 2147483648
  %v458 = vsel %vm456, %v457, %v455
  %v459 = vrsqrt.pop %v338
  %v460 = vmul.f32 %v338, %v459
  %vm461 = vcmp.eq.f32.partialorder %v338, inf
  %v462 = vsel %vm461, %v338, %v460
  %vm463 = vcmp.eq.f32.partialorder %v338, 0.0
  %v464 = vand.u32 %v338, 2147483648
  %v465 = vsel %vm463, %v464, %v462
  %v466 = vrsqrt.pop %v339
  %v467 = vmul.f32 %v339, %v466
  %vm468 = vcmp.eq.f32.partialorder %v339, inf
  %v469 = vsel %vm468, %v339, %v467
  %vm470 = vcmp.eq.f32.partialorder %v339, 0.0
  %v471 = vand.u32 %v339, 2147483648
  %v472 = vsel %vm470, %v471, %v469
  %v473 = vrsqrt.pop %v340
  %v474 = vmul.f32 %v340, %v473
  %vm475 = vcmp.eq.f32.partialorder %v340, inf
  %v476 = vsel %vm475, %v340, %v474
  %vm477 = vcmp.eq.f32.partialorder %v340, 0.0
  %v478 = vand.u32 %v340, 2147483648
  %v479 = vsel %vm477, %v478, %v476
  %v480 = vrsqrt.pop %v341
  %v481 = vmul.f32 %v341, %v480
  %vm482 = vcmp.eq.f32.partialorder %v341, inf
  %v483 = vsel %vm482, %v341, %v481
  %vm484 = vcmp.eq.f32.partialorder %v341, 0.0
  %v485 = vand.u32 %v341, 2147483648
  %v486 = vsel %vm484, %v485, %v483
  %v487 = vrsqrt.pop %v342
  %v488 = vmul.f32 %v342, %v487
  %vm489 = vcmp.eq.f32.partialorder %v342, inf
  %v490 = vsel %vm489, %v342, %v488
  %vm491 = vcmp.eq.f32.partialorder %v342, 0.0
  %v492 = vand.u32 %v342, 2147483648
  %v493 = vsel %vm491, %v492, %v490
  %v494 = vrsqrt.pop %v343
  %v495 = vmul.f32 %v343, %v494
  %vm496 = vcmp.eq.f32.partialorder %v343, inf
  %v497 = vsel %vm496, %v343, %v495
  %vm498 = vcmp.eq.f32.partialorder %v343, 0.0
  %v499 = vand.u32 %v343, 2147483648
  %v500 = vsel %vm498, %v499, %v497
  %v501 = vrsqrt.pop %v344
  %v502 = vmul.f32 %v344, %v501
  %vm503 = vcmp.eq.f32.partialorder %v344, inf
  %v504 = vsel %vm503, %v344, %v502
  %vm505 = vcmp.eq.f32.partialorder %v344, 0.0
  %v506 = vand.u32 %v344, 2147483648
  %v507 = vsel %vm505, %v506, %v504
  %v508 = vrsqrt.pop %v345
  %v509 = vmul.f32 %v345, %v508
  %vm510 = vcmp.eq.f32.partialorder %v345, inf
  %v511 = vsel %vm510, %v345, %v509
  %vm512 = vcmp.eq.f32.partialorder %v345, 0.0
  %v513 = vand.u32 %v345, 2147483648
  %v514 = vsel %vm512, %v513, %v511
  %v515 = vrsqrt.pop %v346
  %v516 = vmul.f32 %v346, %v515
  %vm517 = vcmp.eq.f32.partialorder %v346, inf
  %v518 = vsel %vm517, %v346, %v516
  %vm519 = vcmp.eq.f32.partialorder %v346, 0.0
  %v520 = vand.u32 %v346, 2147483648
  %v521 = vsel %vm519, %v520, %v518
  %v522 = vadd.f32 %v353, 1e-06
  %v523 = vadd.f32 %v360, 1e-06
  %v524 = vadd.f32 %v367, 1e-06
  %v525 = vadd.f32 %v374, 1e-06
  %v526 = vadd.f32 %v381, 1e-06
  %v527 = vadd.f32 %v388, 1e-06
  %v528 = vadd.f32 %v395, 1e-06
  %v529 = vadd.f32 %v402, 1e-06
  %v530 = vadd.f32 %v409, 1e-06
  %v531 = vadd.f32 %v416, 1e-06
  %v532 = vadd.f32 %v423, 1e-06
  %v533 = vadd.f32 %v430, 1e-06
  %v534 = vadd.f32 %v437, 1e-06
  %v535 = vadd.f32 %v444, 1e-06
  %v536 = vadd.f32 %v451, 1e-06
  %v537 = vadd.f32 %v458, 1e-06
  %v538 = vadd.f32 %v465, 1e-06
  %v539 = vadd.f32 %v472, 1e-06
  %v540 = vadd.f32 %v479, 1e-06
  %v541 = vadd.f32 %v486, 1e-06
  %v542 = vadd.f32 %v493, 1e-06
  %v543 = vadd.f32 %v500, 1e-06
  %v544 = vadd.f32 %v507, 1e-06
  %v545 = vadd.f32 %v514, 1e-06
  %v546 = vadd.f32 %v521, 1e-06
  %v547 = vrcp.pop %v522
  %v548 = vrcp.pop %v523
  %v549 = vrcp.pop %v524
  %v550 = vrcp.pop %v525
  %v551 = vrcp.pop %v526
  %v552 = vrcp.pop %v527
  %v553 = vrcp.pop %v528
  %v554 = vrcp.pop %v529
  %v555 = vrcp.pop %v530
  %v556 = vrcp.pop %v531
  %v557 = vrcp.pop %v532
  %v558 = vrcp.pop %v533
  %v559 = vrcp.pop %v534
  %v560 = vrcp.pop %v535
  %v561 = vrcp.pop %v536
  %v562 = vrcp.pop %v537
  %v563 = vrcp.pop %v538
  %v564 = vrcp.pop %v539
  %v565 = vrcp.pop %v540
  %v566 = vrcp.pop %v541
  %v567 = vrcp.pop %v542
  %v568 = vrcp.pop %v543
  %v569 = vrcp.pop %v544
  %v570 = vrcp.pop %v545
  %v571 = vrcp.pop %v546
  %v572 = vmul.f32 %v222, %v547
  %v573 = vmul.f32 %v223, %v548
  %v574 = vmul.f32 %v224, %v549
  %v575 = vmul.f32 %v225, %v550
  %v576 = vmul.f32 %v226, %v551
  %v577 = vmul.f32 %v227, %v552
  %v578 = vmul.f32 %v228, %v553
  %v579 = vmul.f32 %v229, %v554
  %v580 = vmul.f32 %v230, %v555
  %v581 = vmul.f32 %v231, %v556
  %v582 = vmul.f32 %v232, %v557
  %v583 = vmul.f32 %v233, %v558
  %v584 = vmul.f32 %v234, %v559
  %v585 = vmul.f32 %v235, %v560
  %v586 = vmul.f32 %v236, %v561
  %v587 = vmul.f32 %v237, %v562
  %v588 = vmul.f32 %v238, %v563
  %v589 = vmul.f32 %v239, %v564
  %v590 = vmul.f32 %v240, %v565
  %v591 = vmul.f32 %v241, %v566
  %v592 = vmul.f32 %v242, %v567
  %v593 = vmul.f32 %v243, %v568
  %v594 = vmul.f32 %v244, %v569
  %v595 = vmul.f32 %v245, %v570
  %v596 = vmul.f32 %v246, %v571
  %v597 = vld [vmem:[%s2] sm:$0x1]
  %v599 = vlaneseq
  %v600 = vshrl.u32 %v599, 7
  %v601 = vsub.s32 0, %v600
  %v602 = vrot.slane %v597, %v601
  %v604 = vmul.f32 %v572, %v602
  %v605 = vmul.f32 %v573, %v602
  %v606 = vmul.f32 %v574, %v602
  %v607 = vmul.f32 %v575, %v602
  %v608 = vmul.f32 %v576, %v602
  %v609 = vmul.f32 %v577, %v602
  %v610 = vmul.f32 %v578, %v602
  %v611 = vmul.f32 %v579, %v602
  %v612 = vmul.f32 %v580, %v602
  %v613 = vmul.f32 %v581, %v602
  %v614 = vmul.f32 %v582, %v602
  %v615 = vmul.f32 %v583, %v602
  %v616 = vmul.f32 %v584, %v602
  %v617 = vmul.f32 %v585, %v602
  %v618 = vmul.f32 %v586, %v602
  %v619 = vmul.f32 %v587, %v602
  %v620 = vmul.f32 %v588, %v602
  %v621 = vmul.f32 %v589, %v602
  %v622 = vmul.f32 %v590, %v602
  %v623 = vmul.f32 %v591, %v602
  %v624 = vmul.f32 %v592, %v602
  %v625 = vmul.f32 %v593, %v602
  %v626 = vmul.f32 %v594, %v602
  %v627 = vmul.f32 %v595, %v602
  %v628 = vmul.f32 %v596, %v602
  %v629 = vld [vmem:[%s3] sm:$0x1]
  %v631 = vlaneseq
  %v632 = vshrl.u32 %v631, 7
  %v633 = vsub.s32 0, %v632
  %v634 = vrot.slane %v629, %v633
  %v636 = vadd.f32 %v604, %v634
  %v637 = vadd.f32 %v605, %v634
  %v638 = vadd.f32 %v606, %v634
  %v639 = vadd.f32 %v607, %v634
  %v640 = vadd.f32 %v608, %v634
  %v641 = vadd.f32 %v609, %v634
  %v642 = vadd.f32 %v610, %v634
  %v643 = vadd.f32 %v611, %v634
  %v644 = vadd.f32 %v612, %v634
  %v645 = vadd.f32 %v613, %v634
  %v646 = vadd.f32 %v614, %v634
  %v647 = vadd.f32 %v615, %v634
  %v648 = vadd.f32 %v616, %v634
  %v649 = vadd.f32 %v617, %v634
  %v650 = vadd.f32 %v618, %v634
  %v651 = vadd.f32 %v619, %v634
  %v652 = vadd.f32 %v620, %v634
  %v653 = vadd.f32 %v621, %v634
  %v654 = vadd.f32 %v622, %v634
  %v655 = vadd.f32 %v623, %v634
  %v656 = vadd.f32 %v624, %v634
  %v657 = vadd.f32 %v625, %v634
  %v658 = vadd.f32 %v626, %v634
  %v659 = vadd.f32 %v627, %v634
  %v660 = vadd.f32 %v628, %v634
  %661 = vst [vmem:[%s4] sm:$0xff] %v636
  %662 = vst [vmem:[%s4 + $0x8] sm:$0xff] %v637
  %663 = vst [vmem:[%s4 + $0x10] sm:$0xff] %v638
  %664 = vst [vmem:[%s4 + $0x18] sm:$0xff] %v639
  %665 = vst [vmem:[%s4 + $0x20] sm:$0xff] %v640
  %666 = vst [vmem:[%s4 + $0x28] sm:$0xff] %v641
  %667 = vst [vmem:[%s4 + $0x30] sm:$0xff] %v642
  %668 = vst [vmem:[%s4 + $0x38] sm:$0xff] %v643
  %669 = vst [vmem:[%s4 + $0x40] sm:$0xff] %v644
  %670 = vst [vmem:[%s4 + $0x48] sm:$0xff] %v645
  %671 = vst [vmem:[%s4 + $0x50] sm:$0xff] %v646
  %672 = vst [vmem:[%s4 + $0x58] sm:$0xff] %v647
  %673 = vst [vmem:[%s4 + $0x60] sm:$0xff] %v648
  %674 = vst [vmem:[%s4 + $0x68] sm:$0xff] %v649
  %675 = vst [vmem:[%s4 + $0x70] sm:$0xff] %v650
  %676 = vst [vmem:[%s4 + $0x78] sm:$0xff] %v651
  %677 = vst [vmem:[%s4 + $0x80] sm:$0xff] %v652
  %678 = vst [vmem:[%s4 + $0x88] sm:$0xff] %v653
  %679 = vst [vmem:[%s4 + $0x90] sm:$0xff] %v654
  %680 = vst [vmem:[%s4 + $0x98] sm:$0xff] %v655
  %681 = vst [vmem:[%s4 + $0xa0] sm:$0xff] %v656
  %682 = vst [vmem:[%s4 + $0xa8] sm:$0xff] %v657
  %683 = vst [vmem:[%s4 + $0xb0] sm:$0xff] %v658
  %684 = vst [vmem:[%s4 + $0xb8] sm:$0xff] %v659
  %685 = vst [vmem:[%s4 + $0xc0] sm:$0xff] %v660
  // Predicated region
  $region18: #{transformer_encoder_forward.20} parent=0 // pred_check
    _
  $region19: #{transformer_encoder_forward.20} parent=0 // pred_check_branch
    %687 = sbr.rel (0) target = $region21
  $region20: #{transformer_encoder_forward.20} parent=0 // pred_region
    _
  $region21: #{transformer_encoder_forward.20} parent=0 // pred_fallthru
    _
  // Predicated region
  $region22: #{transformer_encoder_forward.20} parent=0 // pred_check
    _
  $region23: #{transformer_encoder_forward.20} parent=0 // pred_check_branch
    %689 = sbr.rel (0) target = $region25
  $region24: #{transformer_encoder_forward.20} parent=0 // pred_region
    _
  $region25: #{transformer_encoder_forward.20} parent=0 // pred_fallthru
    _

// kernel: transformer_encoder_forward.27
$region0: #{transformer_encoder_forward.27}
  #allocation0 [shape = 'u32[]', space=smem, size = 0x4, offset = 0x4, fixed_abs, tag = 'smem constant byte address 0x4 - core index']
  #allocation1 [shape = 'u32[144,128]{1,0:T(1,128)}', space=vmem, size = 0x12000, scoped, tag = 'internal scratch']
  %s0 = inlined_call_operand.vmem [shape: f32[200,32], index: 0, kind: input, shape index: {}]
  %s1 = inlined_call_operand.vmem [shape: f32[32,256], index: 1, kind: input, shape index: {}]
  %s2 = inlined_call_operand.vmem [shape: f32[1,256], index: 2, kind: input, shape index: {}]
  %s3 = inlined_call_operand.vmem [shape: f32[200,256], index: 3, kind: output, shape index: {}]
  %s4 = sld [smem:[#allocation0]]
  $region22: #{transformer_encoder_forward.27} parent=0
    _
  %s6 = ssub.s32 1, %s4
  %s7 = scalar_select 0, %s6, %s4
  // Predicated region
  $region2: #{transformer_encoder_forward.27} parent=0 // pred_check
    _
  $region3: #{transformer_encoder_forward.27} parent=0 // pred_check_branch
    %9 = sbr.rel (0) target = $region5
  $region4: #{transformer_encoder_forward.27} parent=0 // pred_region
    _
  $region5: #{transformer_encoder_forward.27} parent=0 // pred_fallthru
    _
  // Predicated region
  $region6: #{transformer_encoder_forward.27} parent=0 // pred_check
    _
  $region7: #{transformer_encoder_forward.27} parent=0 // pred_check_branch
    %11 = sbr.rel (0) target = $region9
  $region8: #{transformer_encoder_forward.27} parent=0 // pred_region
    _
  $region9: #{transformer_encoder_forward.27} parent=0 // pred_fallthru
    _
  // Predicated region
  $region10: #{transformer_encoder_forward.27} parent=0 // pred_check
    _
  $region11: #{transformer_encoder_forward.27} parent=0 // pred_check_branch
    %13 = sbr.rel (0) target = $region13
  $region12: #{transformer_encoder_forward.27} parent=0 // pred_region
    _
  $region13: #{transformer_encoder_forward.27} parent=0 // pred_fallthru
    _
  %v14 = vld [vmem:[%s0] sm:$0xff]
  %v15 = vld [vmem:[%s0 + $0x8] sm:$0xff]
  %v16 = vld [vmem:[%s0 + $0x10] sm:$0xff]
  %v17 = vld [vmem:[%s0 + $0x18] sm:$0xff]
  %v18 = vld [vmem:[%s0 + $0x20] sm:$0xff]
  %v19 = vld [vmem:[%s0 + $0x28] sm:$0xff]
  %v20 = vld [vmem:[%s0 + $0x30] sm:$0xff]
  %v21 = vld [vmem:[%s0 + $0x38] sm:$0xff]
  %v22 = vld [vmem:[%s0 + $0x40] sm:$0xff]
  %v23 = vld [vmem:[%s0 + $0x48] sm:$0xff]
  %v24 = vld [vmem:[%s0 + $0x50] sm:$0xff]
  %v25 = vld [vmem:[%s0 + $0x58] sm:$0xff]
  %v26 = vld [vmem:[%s0 + $0x60] sm:$0xff]
  %v27 = vld [vmem:[%s0 + $0x68] sm:$0xff]
  %v28 = vld [vmem:[%s0 + $0x70] sm:$0xff]
  %v29 = vld [vmem:[%s0 + $0x78] sm:$0xff]
  %v30 = vld [vmem:[%s0 + $0x80] sm:$0xff]
  %v31 = vld [vmem:[%s0 + $0x88] sm:$0xff]
  %v32 = vld [vmem:[%s0 + $0x90] sm:$0xff]
  %v33 = vld [vmem:[%s0 + $0x98] sm:$0xff]
  %v34 = vld [vmem:[%s0 + $0xa0] sm:$0xff]
  %v35 = vld [vmem:[%s0 + $0xa8] sm:$0xff]
  %v36 = vld [vmem:[%s0 + $0xb0] sm:$0xff]
  %v37 = vld [vmem:[%s0 + $0xb8] sm:$0xff]
  %v38 = vld [vmem:[%s0 + $0xc0] sm:$0xff]
  %v39 = vld [vmem:[%s1] sm:$0xff]
  %v40 = vld [vmem:[%s1 + $0x8] sm:$0xff]
  %v41 = vld [vmem:[%s1 + $0x10] sm:$0xff]
  %v42 = vld [vmem:[%s1 + $0x18] sm:$0xff]
  %v43 = vld [vmem:[%s1 + $0x20] sm:$0xff]
  %v44 = vld [vmem:[%s1 + $0x28] sm:$0xff]
  %v45 = vld [vmem:[%s1 + $0x30] sm:$0xff]
  %v46 = vld [vmem:[%s1 + $0x38] sm:$0xff]
  %v47 = vld [vmem:[%s2] sm:$0x3]
  %v49 = vlaneseq
  %v50 = vshrl.u32 %v49, 7
  %v51 = vsub.s32 0, %v50
  %v52 = vrot.slane %v47, %v51
  %v53 = vlaneseq
  %v54 = vshrl.u32 %v53, 7
  %v55 = vsub.s32 1, %v54
  %v56 = vrot.slane %v47, %v55
  %vm59 = vcmask 261120
  %v61 = vsel %vm59, %v14, 0
  %v64 = vsel %vm59, %v15, 0
  %v67 = vsel %vm59, %v16, 0
  %v70 = vsel %vm59, %v17, 0
  %v73 = vsel %vm59, %v18, 0
  %v76 = vsel %vm59, %v19, 0
  %v79 = vsel %vm59, %v20, 0
  %v82 = vsel %vm59, %v21, 0
  %v85 = vsel %vm59, %v22, 0
  %v88 = vsel %vm59, %v23, 0
  %v91 = vsel %vm59, %v24, 0
  %v94 = vsel %vm59, %v25, 0
  %v97 = vsel %vm59, %v26, 0
  %v100 = vsel %vm59, %v27, 0
  %v103 = vsel %vm59, %v28, 0
  %v106 = vsel %vm59, %v29, 0
  %v109 = vsel %vm59, %v30, 0
  %v112 = vsel %vm59, %v31, 0
  %v115 = vsel %vm59, %v32, 0
  %v118 = vsel %vm59, %v33, 0
  %v121 = vsel %vm59, %v34, 0
  %v124 = vsel %vm59, %v35, 0
  %v127 = vsel %vm59, %v36, 0
  %v130 = vsel %vm59, %v37, 0
  %v133 = vsel %vm59, %v38, 0
  %135 = vmatprep.subr.mxu0 0.0
  %136 = vmatpush1.msra.mxu0 0.0
  %137 = vmatprep.subr.mxu0 0.0
  %138 = vmatpush1.msra.mxu0 0.0
  %139 = vmatprep.subr.mxu0 0.0
  %140 = vmatpush1.msra.mxu0 0.0
  %141 = vmatprep.subr.mxu0 0.0
  %142 = vmatpush1.msra.mxu0 0.0
  %143 = vmatprep.subr.mxu0 0.0
  %144 = vmatpush1.msra.mxu0 0.0
  %145 = vmatprep.subr.mxu0 0.0
  %146 = vmatpush1.msra.mxu0 0.0
  %147 = vmatprep.subr.mxu0 0.0
  %148 = vmatpush1.msra.mxu0 0.0
  %149 = vmatprep.subr.mxu0 0.0
  %150 = vmatpush1.msra.mxu0 0.0
  %151 = vmatprep.subr.mxu0 0.0
  %152 = vmatpush1.msra.mxu0 0.0
  %153 = vmatprep.subr.mxu0 0.0
  %154 = vmatpush1.msra.mxu0 0.0
  %155 = vmatprep.subr.mxu0 0.0
  %156 = vmatpush1.msra.mxu0 0.0
  %157 = vmatprep.subr.mxu0 0.0
  %158 = vmatpush1.msra.mxu0 0.0
  %159 = vmatprep.subr.mxu0 %v46
  %160 = vmatpush1.msra.mxu0 %v45
  %161 = vmatprep.subr.mxu0 %v44
  %162 = vmatpush1.msra.mxu0 %v43
  %163 = vmatprep.subr.mxu0 %v42
  %164 = vmatpush1.msra.mxu0 %v41
  %165 = vmatprep.subr.mxu0 %v40
  %166 = vmatpush1.msra.mxu0 %v39
  %167 = vmatprep.subr.mxu0 0.0
  %168 = vmatpush2.msra.mxu0 0.0
  %169 = vmatprep.subr.mxu0 0.0
  %170 = vmatpush2.msra.mxu0 0.0
  %171 = vmatprep.subr.mxu0 0.0
  %172 = vmatpush2.msra.mxu0 0.0
  %173 = vmatprep.subr.mxu0 0.0
  %174 = vmatpush2.msra.mxu0 0.0
  %175 = vmatprep.subr.mxu0 0.0
  %176 = vmatpush2.msra.mxu0 0.0
  %177 = vmatprep.subr.mxu0 0.0
  %178 = vmatpush2.msra.mxu0 0.0
  %179 = vmatprep.subr.mxu0 0.0
  %180 = vmatpush2.msra.mxu0 0.0
  %181 = vmatprep.subr.mxu0 0.0
  %182 = vmatpush2.msra.mxu0 0.0
  %183 = vmatprep.subr.mxu0 0.0
  %184 = vmatpush2.msra.mxu0 0.0
  %185 = vmatprep.subr.mxu0 0.0
  %186 = vmatpush2.msra.mxu0 0.0
  %187 = vmatprep.subr.mxu0 0.0
  %188 = vmatpush2.msra.mxu0 0.0
  %189 = vmatprep.subr.mxu0 0.0
  %190 = vmatpush2.msra.mxu0 0.0
  %191 = vmatprep.subr.mxu0 0.0
  %192 = vmatpush2.msra.mxu0 0.0
  %193 = vmatprep.subr.mxu0 0.0
  %194 = vmatpush2.msra.mxu0 0.0
  %195 = vmatprep.subr.mxu0 0.0
  %196 = vmatpush2.msra.mxu0 0.0
  %197 = vmatprep.subr.mxu0 0.0
  %198 = vmatpush2.msra.mxu0 0.0
  %199 = vmatprep.mubr.f32.mxu0 0.0
  %200 = vmatmul.mubr.f32.gmra.mxu0 %v61
  %v201 = vpop.f32.mrf.mxu0
  %v202 = vadd.f32 %v52, %v201
  %v203 = vpop.f32.mrf.mxu0
  %v204 = vadd.f32 %v56, %v203
  %205 = vmatprep.mubr.f32.mxu0 0.0
  %206 = vmatmul.mubr.f32.gmra.mxu0 %v64
  %v207 = vpop.f32.mrf.mxu0
  %v208 = vadd.f32 %v52, %v207
  %v209 = vpop.f32.mrf.mxu0
  %v210 = vadd.f32 %v56, %v209
  %211 = vmatprep.mubr.f32.mxu0 0.0
  %212 = vmatmul.mubr.f32.gmra.mxu0 %v67
  %v213 = vpop.f32.mrf.mxu0
  %v214 = vadd.f32 %v52, %v213
  %v215 = vpop.f32.mrf.mxu0
  %v216 = vadd.f32 %v56, %v215
  %217 = vmatprep.mubr.f32.mxu0 0.0
  %218 = vmatmul.mubr.f32.gmra.mxu0 %v70
  %v219 = vpop.f32.mrf.mxu0
  %v220 = vadd.f32 %v52, %v219
  %v221 = vpop.f32.mrf.mxu0
  %v222 = vadd.f32 %v56, %v221
  %223 = vmatprep.mubr.f32.mxu0 0.0
  %224 = vmatmul.mubr.f32.gmra.mxu0 %v73
  %v225 = vpop.f32.mrf.mxu0
  %v226 = vadd.f32 %v52, %v225
  %v227 = vpop.f32.mrf.mxu0
  %v228 = vadd.f32 %v56, %v227
  %229 = vmatprep.mubr.f32.mxu0 0.0
  %230 = vmatmul.mubr.f32.gmra.mxu0 %v76
  %v231 = vpop.f32.mrf.mxu0
  %v232 = vadd.f32 %v52, %v231
  %v233 = vpop.f32.mrf.mxu0
  %v234 = vadd.f32 %v56, %v233
  %235 = vmatprep.mubr.f32.mxu0 0.0
  %236 = vmatmul.mubr.f32.gmra.mxu0 %v79
  %v237 = vpop.f32.mrf.mxu0
  %v238 = vadd.f32 %v52, %v237
  %v239 = vpop.f32.mrf.mxu0
  %v240 = vadd.f32 %v56, %v239
  %241 = vmatprep.mubr.f32.mxu0 0.0
  %242 = vmatmul.mubr.f32.gmra.mxu0 %v82
  %v243 = vpop.f32.mrf.mxu0
  %v244 = vadd.f32 %v52, %v243
  %v245 = vpop.f32.mrf.mxu0
  %v246 = vadd.f32 %v56, %v245
  %247 = vmatprep.mubr.f32.mxu0 0.0
  %248 = vmatmul.mubr.f32.gmra.mxu0 %v85
  %v249 = vpop.f32.mrf.mxu0
  %v250 = vadd.f32 %v52, %v249
  %v251 = vpop.f32.mrf.mxu0
  %v252 = vadd.f32 %v56, %v251
  %253 = vmatprep.mubr.f32.mxu0 0.0
  %254 = vmatmul.mubr.f32.gmra.mxu0 %v88
  %v255 = vpop.f32.mrf.mxu0
  %v256 = vadd.f32 %v52, %v255
  %v257 = vpop.f32.mrf.mxu0
  %v258 = vadd.f32 %v56, %v257
  %259 = vmatprep.mubr.f32.mxu0 0.0
  %260 = vmatmul.mubr.f32.gmra.mxu0 %v91
  %v261 = vpop.f32.mrf.mxu0
  %v262 = vadd.f32 %v52, %v261
  %v263 = vpop.f32.mrf.mxu0
  %v264 = vadd.f32 %v56, %v263
  %265 = vmatprep.mubr.f32.mxu0 0.0
  %266 = vmatmul.mubr.f32.gmra.mxu0 %v94
  %v267 = vpop.f32.mrf.mxu0
  %v268 = vadd.f32 %v52, %v267
  %v269 = vpop.f32.mrf.mxu0
  %v270 = vadd.f32 %v56, %v269
  %271 = vmatprep.mubr.f32.mxu0 0.0
  %272 = vmatmul.mubr.f32.gmra.mxu0 %v97
  %v273 = vpop.f32.mrf.mxu0
  %v274 = vadd.f32 %v52, %v273
  %v275 = vpop.f32.mrf.mxu0
  %v276 = vadd.f32 %v56, %v275
  %277 = vmatprep.mubr.f32.mxu0 0.0
  %278 = vmatmul.mubr.f32.gmra.mxu0 %v100
  %v279 = vpop.f32.mrf.mxu0
  %v280 = vadd.f32 %v52, %v279
  %v281 = vpop.f32.mrf.mxu0
  %v282 = vadd.f32 %v56, %v281
  %283 = vmatprep.mubr.f32.mxu0 0.0
  %284 = vmatmul.mubr.f32.gmra.mxu0 %v103
  %v285 = vpop.f32.mrf.mxu0
  %v286 = vadd.f32 %v52, %v285
  %v287 = vpop.f32.mrf.mxu0
  %v288 = vadd.f32 %v56, %v287
  %289 = vmatprep.mubr.f32.mxu0 0.0
  %290 = vmatmul.mubr.f32.gmra.mxu0 %v106
  %v291 = vpop.f32.mrf.mxu0
  %v292 = vadd.f32 %v52, %v291
  %v293 = vpop.f32.mrf.mxu0
  %v294 = vadd.f32 %v56, %v293
  %295 = vmatprep.mubr.f32.mxu0 0.0
  %296 = vmatmul.mubr.f32.gmra.mxu0 %v109
  %v297 = vpop.f32.mrf.mxu0
  %v298 = vadd.f32 %v52, %v297
  %v299 = vpop.f32.mrf.mxu0
  %v300 = vadd.f32 %v56, %v299
  %301 = vmatprep.mubr.f32.mxu0 0.0
  %302 = vmatmul.mubr.f32.gmra.mxu0 %v112
  %v303 = vpop.f32.mrf.mxu0
  %v304 = vadd.f32 %v52, %v303
  %v305 = vpop.f32.mrf.mxu0
  %v306 = vadd.f32 %v56, %v305
  %307 = vmatprep.mubr.f32.mxu0 0.0
  %308 = vmatmul.mubr.f32.gmra.mxu0 %v115
  %v309 = vpop.f32.mrf.mxu0
  %v310 = vadd.f32 %v52, %v309
  %v311 = vpop.f32.mrf.mxu0
  %v312 = vadd.f32 %v56, %v311
  %313 = vmatprep.mubr.f32.mxu0 0.0
  %314 = vmatmul.mubr.f32.gmra.mxu0 %v118
  %v315 = vpop.f32.mrf.mxu0
  %v316 = vadd.f32 %v52, %v315
  %v317 = vpop.f32.mrf.mxu0
  %v318 = vadd.f32 %v56, %v317
  %319 = vmatprep.mubr.f32.mxu0 0.0
  %320 = vmatmul.mubr.f32.gmra.mxu0 %v121
  %v321 = vpop.f32.mrf.mxu0
  %v322 = vadd.f32 %v52, %v321
  %v323 = vpop.f32.mrf.mxu0
  %v324 = vadd.f32 %v56, %v323
  %325 = vmatprep.mubr.f32.mxu0 0.0
  %326 = vmatmul.mubr.f32.gmra.mxu0 %v124
  %v327 = vpop.f32.mrf.mxu0
  %v328 = vadd.f32 %v52, %v327
  %v329 = vpop.f32.mrf.mxu0
  %v330 = vadd.f32 %v56, %v329
  %331 = vmatprep.mubr.f32.mxu0 0.0
  %332 = vmatmul.mubr.f32.gmra.mxu0 %v127
  %v333 = vpop.f32.mrf.mxu0
  %v334 = vadd.f32 %v52, %v333
  %v335 = vpop.f32.mrf.mxu0
  %v336 = vadd.f32 %v56, %v335
  %337 = vmatprep.mubr.f32.mxu0 0.0
  %338 = vmatmul.mubr.f32.gmra.mxu0 %v130
  %v339 = vpop.f32.mrf.mxu0
  %v340 = vadd.f32 %v52, %v339
  %v341 = vpop.f32.mrf.mxu0
  %v342 = vadd.f32 %v56, %v341
  %343 = vmatprep.mubr.f32.mxu0 0.0
  %344 = vmatmul.mubr.f32.gmra.mxu0 %v133
  %v345 = vpop.f32.mrf.mxu0
  %v346 = vadd.f32 %v52, %v345
  %v347 = vpop.f32.mrf.mxu0
  %v348 = vadd.f32 %v56, %v347
  %349 = vdwg.mxu0
  %350 = vst [vmem:[%s3] sm:$0xff] %v202
  %351 = vst [vmem:[%s3 + $0x8] sm:$0xff] %v204
  %352 = vst [vmem:[%s3 + $0x10] sm:$0xff] %v208
  %353 = vst [vmem:[%s3 + $0x18] sm:$0xff] %v210
  %354 = vst [vmem:[%s3 + $0x20] sm:$0xff] %v214
  %355 = vst [vmem:[%s3 + $0x28] sm:$0xff] %v216
  %356 = vst [vmem:[%s3 + $0x30] sm:$0xff] %v220
  %357 = vst [vmem:[%s3 + $0x38] sm:$0xff] %v222
  %358 = vst [vmem:[%s3 + $0x40] sm:$0xff] %v226
  %359 = vst [vmem:[%s3 + $0x48] sm:$0xff] %v228
  %360 = vst [vmem:[%s3 + $0x50] sm:$0xff] %v232
  %361 = vst [vmem:[%s3 + $0x58] sm:$0xff] %v234
  %362 = vst [vmem:[%s3 + $0x60] sm:$0xff] %v238
  %363 = vst [vmem:[%s3 + $0x68] sm:$0xff] %v240
  %364 = vst [vmem:[%s3 + $0x70] sm:$0xff] %v244
  %365 = vst [vmem:[%s3 + $0x78] sm:$0xff] %v246
  %366 = vst [vmem:[%s3 + $0x80] sm:$0xff] %v250
  %367 = vst [vmem:[%s3 + $0x88] sm:$0xff] %v252
  %368 = vst [vmem:[%s3 + $0x90] sm:$0xff] %v256
  %369 = vst [vmem:[%s3 + $0x98] sm:$0xff] %v258
  %370 = vst [vmem:[%s3 + $0xa0] sm:$0xff] %v262
  %371 = vst [vmem:[%s3 + $0xa8] sm:$0xff] %v264
  %372 = vst [vmem:[%s3 + $0xb0] sm:$0xff] %v268
  %373 = vst [vmem:[%s3 + $0xb8] sm:$0xff] %v270
  %374 = vst [vmem:[%s3 + $0xc0] sm:$0xff] %v274
  %375 = vst [vmem:[%s3 + $0xc8] sm:$0xff] %v276
  %376 = vst [vmem:[%s3 + $0xd0] sm:$0xff] %v280
  %377 = vst [vmem:[%s3 + $0xd8] sm:$0xff] %v282
  %378 = vst [vmem:[%s3 + $0xe0] sm:$0xff] %v286
  %379 = vst [vmem:[%s3 + $0xe8] sm:$0xff] %v288
  %380 = vst [vmem:[%s3 + $0xf0] sm:$0xff] %v292
  %381 = vst [vmem:[%s3 + $0xf8] sm:$0xff] %v294
  %382 = vst [vmem:[%s3 + $0x100] sm:$0xff] %v298
  %383 = vst [vmem:[%s3 + $0x108] sm:$0xff] %v300
  %384 = vst [vmem:[%s3 + $0x110] sm:$0xff] %v304
  %385 = vst [vmem:[%s3 + $0x118] sm:$0xff] %v306
  %386 = vst [vmem:[%s3 + $0x120] sm:$0xff] %v310
  %387 = vst [vmem:[%s3 + $0x128] sm:$0xff] %v312
  %388 = vst [vmem:[%s3 + $0x130] sm:$0xff] %v316
  %389 = vst [vmem:[%s3 + $0x138] sm:$0xff] %v318
  %390 = vst [vmem:[%s3 + $0x140] sm:$0xff] %v322
  %391 = vst [vmem:[%s3 + $0x148] sm:$0xff] %v324
  %392 = vst [vmem:[%s3 + $0x150] sm:$0xff] %v328
  %393 = vst [vmem:[%s3 + $0x158] sm:$0xff] %v330
  %394 = vst [vmem:[%s3 + $0x160] sm:$0xff] %v334
  %395 = vst [vmem:[%s3 + $0x168] sm:$0xff] %v336
  %396 = vst [vmem:[%s3 + $0x170] sm:$0xff] %v340
  %397 = vst [vmem:[%s3 + $0x178] sm:$0xff] %v342
  %398 = vst [vmem:[%s3 + $0x180] sm:$0xff] %v346
  %399 = vst [vmem:[%s3 + $0x188] sm:$0xff] %v348
  // Predicated region
  $region14: #{transformer_encoder_forward.27} parent=0 // pred_check
    _
  $region15: #{transformer_encoder_forward.27} parent=0 // pred_check_branch
    %401 = sbr.rel (0) target = $region17
  $region16: #{transformer_encoder_forward.27} parent=0 // pred_region
    _
  $region17: #{transformer_encoder_forward.27} parent=0 // pred_fallthru
    _
  // Predicated region
  $region18: #{transformer_encoder_forward.27} parent=0 // pred_check
    _
  $region19: #{transformer_encoder_forward.27} parent=0 // pred_check_branch
    %403 = sbr.rel (0) target = $region21
  $region20: #{transformer_encoder_forward.27} parent=0 // pred_region
    _
  $region21: #{transformer_encoder_forward.27} parent=0 // pred_fallthru
    _

</llo_original>
